<compile_context>
chip_gen: v5e
topology: v5e:2x2
jax: 0.10.0
libtpu: 0.0.40
codegen_flags: <defaults>
</compile_context>

<pallas_src>
import functools

import numpy as np
import jax
import jax.numpy as jnp
from jax.experimental import pallas as pl
from jax.experimental.pallas import tpu as pltpu

EPS = 1e-5
LANE = 128


def _round_up(n, m):
    return ((n + m - 1) // m) * m


def _pick_row_tile(rows, target=2048):
    """Largest row tile (multiple of 8) dividing `rows`, capped at `target`."""
    if rows <= target:
        return rows
    tile = rows
    for t in range(8, target + 1, 8):
        if rows % t == 0:
            tile = t
    return tile


# ---------------------------------------------------------------------------
# Kernels
# ---------------------------------------------------------------------------
def _make_conv1_kernel(taps, Ho, Wo, Cp):
    """3x3 conv (stride folded into the phase-decomposed input) + partial BN
    statistics.  `taps` is a static list of 9 (phase, row_off, col_off)."""
    HW = Ho * Wo

    def kernel(x_ref, w_ref, y_ref, st_ref):
        acc = jnp.zeros((HW, Cp), jnp.float32)
        for t, (p, r, c) in enumerate(taps):
            patch = x_ref[p, r:r + Ho, c:c + Wo, :].reshape(HW, -1)
            acc = acc + jnp.dot(patch, w_ref[t],
                                preferred_element_type=jnp.float32)
        y_ref[0] = acc
        st_ref[0] = jnp.concatenate(
            [jnp.sum(acc, axis=0, keepdims=True),
             jnp.sum(acc * acc, axis=0, keepdims=True)], axis=0)

    return kernel


def _make_conv2_kernel(Ho, Wo, Cp, use_proj):
    """bn1-apply + ReLU + 3x3 conv2 (+ optional 1x1 projection shortcut conv),
    each path emitting single-pass partial BN statistics."""
    HW = Ho * Wo
    taps = [(kh, kw) for kh in range(3) for kw in range(3)]

    def kernel(*refs):
        if use_proj:
            (y1_ref, sc1_ref, sh1_ref, w2_ref, xs_ref, ws_ref,
             y2_ref, st2_ref, ysc_ref, sts_ref, hpad_ref) = refs
        else:
            (y1_ref, sc1_ref, sh1_ref, w2_ref,
             y2_ref, st2_ref, hpad_ref) = refs

        # bn1 (precomputed scale/shift) + relu on the f32 conv1 output, then
        # place it in the interior of a zero spatial border (padding=1).
        h1 = jnp.maximum(y1_ref[0] * sc1_ref[...] + sh1_ref[...], 0.0)
        hpad_ref[...] = jnp.zeros_like(hpad_ref)
        hpad_ref[1:Ho + 1, 1:Wo + 1, :] = h1.reshape(Ho, Wo, Cp)

        acc = jnp.zeros((HW, Cp), jnp.float32)
        for t, (kh, kw) in enumerate(taps):
            patch = hpad_ref[kh:kh + Ho, kw:kw + Wo, :].reshape(HW, Cp)
            acc = acc + jnp.dot(patch.astype(jnp.bfloat16), w2_ref[t],
                                preferred_element_type=jnp.float32)
        y2_ref[0] = acc
        st2_ref[0] = jnp.concatenate(
            [jnp.sum(acc, axis=0, keepdims=True),
             jnp.sum(acc * acc, axis=0, keepdims=True)], axis=0)

        if use_proj:
            sc = jnp.dot(xs_ref[0], ws_ref[...],
                         preferred_element_type=jnp.float32)
            ysc_ref[0] = sc
            sts_ref[0] = jnp.concatenate(
                [jnp.sum(sc, axis=0, keepdims=True),
                 jnp.sum(sc * sc, axis=0, keepdims=True)], axis=0)

    return kernel


def _finalize_id_kernel(y2_ref, xid_ref, sc2_ref, sh2_ref, o_ref):
    o_ref[...] = jnp.maximum(
        y2_ref[...] * sc2_ref[...] + sh2_ref[...] + xid_ref[...], 0.0)


def _finalize_proj_kernel(y2_ref, ysc_ref, sc2_ref, sh2_ref, scs_ref, shs_ref,
                          o_ref):
    o_ref[...] = jnp.maximum(
        y2_ref[...] * sc2_ref[...] + sh2_ref[...]
        + ysc_ref[...] * scs_ref[...] + shs_ref[...], 0.0)


# ---------------------------------------------------------------------------
# Host-side glue (tiny O(C) work between pallas calls)
# ---------------------------------------------------------------------------
def _bn_scale_shift(partial_stats, n_rows, gamma_p, beta_p):
    """partial_stats: (B, 2, Cp) per-image (sum, sum_sq).  Returns training-mode
    BN scale/shift as (1, Cp) f32 (single-pass mean/var, biased, eps=1e-5)."""
    tot = jnp.sum(partial_stats, axis=0)
    mean = tot[0] / n_rows
    var = jnp.maximum(tot[1] / n_rows - mean * mean, 0.0)
    scale = gamma_p * jax.lax.rsqrt(var + EPS)
    shift = beta_p - mean * scale
    return scale.reshape(1, -1), shift.reshape(1, -1)


# ---------------------------------------------------------------------------
# Pallas-backed BasicBlock forward
# ---------------------------------------------------------------------------
def basic_block_forward(x_nchw, params, stride=1):
    assert stride in (1, 2)
    x = jnp.transpose(x_nchw, (0, 2, 3, 1)).astype(jnp.float32)   # NHWC
    B, H, W, Cin = x.shape
    Cout = params["w1"].shape[0]
    Cp = _round_up(Cout, LANE)
    use_proj = (stride != 1) or (Cin != Cout)

    Ho = (H - 1) // stride + 1
    Wo = (W - 1) // stride + 1
    HW = Ho * Wo
    R = B * HW

    xbf = x.astype(jnp.bfloat16)
    par = pltpu.CompilerParams(dimension_semantics=("parallel",))

    # ---- conv1 input: spatially padded NHWC, phase-decomposed for stride ----
    xp = jnp.pad(xbf, ((0, 0), (1, 1), (1, 1), (0, 0)))
    if stride == 1:
        phases = [xp]
        taps1 = [(0, kh, kw) for kh in range(3) for kw in range(3)]
    else:  # stride == 2: split into 4 parity phases so in-kernel slices are unit-stride
        phases = []
        for ph in range(2):
            for pw in range(2):
                sub = xp[:, ph::2, pw::2, :][:, :Ho + 1, :Wo + 1, :]
                sub = jnp.pad(sub, ((0, 0), (0, Ho + 1 - sub.shape[1]),
                                    (0, Wo + 1 - sub.shape[2]), (0, 0)))
                phases.append(sub)
        taps1 = [((kh % 2) * 2 + (kw % 2), kh // 2, kw // 2)
                 for kh in range(3) for kw in range(3)]
    P = len(phases)
    Hph, Wph = phases[0].shape[1], phases[0].shape[2]
    xph = jnp.stack(phases, axis=1).reshape(B * P, Hph, Wph, Cin)

    # ---- weights / BN params (output channel dim zero-padded to 128 lanes) ----
    def flat_w3(w, cin_p):
        cout, cin = w.shape[0], w.shape[1]
        wf = jnp.transpose(w, (2, 3, 1, 0)).reshape(9, cin, cout)
        wf = jnp.pad(wf, ((0, 0), (0, cin_p - cin), (0, Cp - cout)))
        return wf.astype(jnp.bfloat16)

    def pad_c(v):
        return jnp.pad(v.astype(jnp.float32), (0, Cp - Cout))

    w1f = flat_w3(params["w1"], Cin)           # (9, Cin, Cp)  bf16
    w2f = flat_w3(params["w2"], Cp)            # (9, Cp,  Cp)  bf16
    g1p, b1p = pad_c(params["g1"]), pad_c(params["b1"])
    g2p, b2p = pad_c(params["g2"]), pad_c(params["b2"])

    # ---- stage 1: conv1 + partial BN1 stats (grid over batch, "parallel") ----
    y1, st1 = pl.pallas_call(
        _make_conv1_kernel(taps1, Ho, Wo, Cp),
        grid=(B,),
        in_specs=[
            pl.BlockSpec((P, Hph, Wph, Cin), lambda b: (b, 0, 0, 0)),
            pl.BlockSpec((9, Cin, Cp), lambda b: (0, 0, 0)),     # resident
        ],
        out_specs=[
            pl.BlockSpec((1, HW, Cp), lambda b: (b, 0, 0)),
            pl.BlockSpec((1, 2, Cp), lambda b: (b, 0, 0)),
        ],
        out_shape=[
            jax.ShapeDtypeStruct((B, HW, Cp), jnp.float32),
            jax.ShapeDtypeStruct((B, 2, Cp), jnp.float32),
        ],
        compiler_params=par,
    )(xph, w1f)

    sc1, sh1 = _bn_scale_shift(st1, R, g1p, b1p)

    # ---- stage 2: bn1+relu -> conv2 (+ projection shortcut) + stats ----
    conv2 = _make_conv2_kernel(Ho, Wo, Cp, use_proj)
    scratch = [pltpu.VMEM((Ho + 2, Wo + 2, Cp), jnp.float32)]
    in_specs = [
        pl.BlockSpec((1, HW, Cp), lambda b: (b, 0, 0)),          # conv1 out
        pl.BlockSpec((1, Cp), lambda b: (0, 0)),                 # bn1 scale
        pl.BlockSpec((1, Cp), lambda b: (0, 0)),                 # bn1 shift
        pl.BlockSpec((9, Cp, Cp), lambda b: (0, 0, 0)),          # w2 (resident)
    ]
    out_specs = [
        pl.BlockSpec((1, HW, Cp), lambda b: (b, 0, 0)),          # conv2 out
        pl.BlockSpec((1, 2, Cp), lambda b: (b, 0, 0)),           # bn2 stats
    ]
    out_shape = [
        jax.ShapeDtypeStruct((B, HW, Cp), jnp.float32),
        jax.ShapeDtypeStruct((B, 2, Cp), jnp.float32),
    ]
    if use_proj:
        xs = xbf[:, ::stride, ::stride, :][:, :Ho, :Wo, :].reshape(B, HW, Cin)
        wsf = jnp.transpose(params["ws"], (2, 3, 1, 0)).reshape(Cin, Cout)
        wsf = jnp.pad(wsf, ((0, 0), (0, Cp - Cout))).astype(jnp.bfloat16)
        gsp, bsp = pad_c(params["gs"]), pad_c(params["bs"])
        in_specs += [
            pl.BlockSpec((1, HW, Cin), lambda b: (b, 0, 0)),     # strided x
            pl.BlockSpec((Cin, Cp), lambda b: (0, 0)),           # 1x1 weight
        ]
        out_specs += [
            pl.BlockSpec((1, HW, Cp), lambda b: (b, 0, 0)),      # shortcut out
            pl.BlockSpec((1, 2, Cp), lambda b: (b, 0, 0)),       # shortcut stats
        ]
        out_shape += [
            jax.ShapeDtypeStruct((B, HW, Cp), jnp.float32),
            jax.ShapeDtypeStruct((B, 2, Cp), jnp.float32),
        ]
        y2, st2, ysc, sts = pl.pallas_call(
            conv2, grid=(B,), in_specs=in_specs, out_specs=out_specs,
            out_shape=out_shape, scratch_shapes=scratch, compiler_params=par,
        )(y1, sc1, sh1, w2f, xs, wsf)
    else:
        y2, st2 = pl.pallas_call(
            conv2, grid=(B,), in_specs=in_specs, out_specs=out_specs,
            out_shape=out_shape, scratch_shapes=scratch, compiler_params=par,
        )(y1, sc1, sh1, w2f)

    sc2, sh2 = _bn_scale_shift(st2, R, g2p, b2p)

    # ---- stage 3: bn2-apply + shortcut + add + relu (row-tiled, lane-dense) --
    TR = _pick_row_tile(R)
    row_spec = pl.BlockSpec((TR, Cp), lambda i: (i, 0))
    vec_spec = pl.BlockSpec((1, Cp), lambda i: (0, 0))
    y2f = y2.reshape(R, Cp)
    if use_proj:
        scs, shs = _bn_scale_shift(sts, R, gsp, bsp)
        out2 = pl.pallas_call(
            _finalize_proj_kernel, grid=(R // TR,),
            in_specs=[row_spec, row_spec, vec_spec, vec_spec, vec_spec,
                      vec_spec],
            out_specs=row_spec,
            out_shape=jax.ShapeDtypeStruct((R, Cp), jnp.float32),
            compiler_params=par,
        )(y2f, ysc.reshape(R, Cp), sc2, sh2, scs, shs)
    else:
        xid = jnp.pad(x, ((0, 0), (0, 0), (0, 0), (0, Cp - Cin)))
        out2 = pl.pallas_call(
            _finalize_id_kernel, grid=(R // TR,),
            in_specs=[row_spec, row_spec, vec_spec, vec_spec],
            out_specs=row_spec,
            out_shape=jax.ShapeDtypeStruct((R, Cp), jnp.float32),
            compiler_params=par,
        )(y2f, xid.reshape(R, Cp), sc2, sh2)

    out = out2[:, :Cout].reshape(B, Ho, Wo, Cout)
    return jnp.transpose(out, (0, 3, 1, 2))        # back to NCHW


# ---------------------------------------------------------------------------
# Pure-JAX reference (mirrors the kernels' bf16 matmul operands, f32 accumulate)
# ---------------------------------------------------------------------------
def basic_block_ref(x_nchw, params, stride=1):
    x32 = jnp.transpose(x_nchw, (0, 2, 3, 1)).astype(jnp.float32)
    Cin = x32.shape[-1]
    Cout = params["w1"].shape[0]

    def r16(a):  # same rounding the kernels apply to matmul operands
        return a.astype(jnp.bfloat16).astype(jnp.float32)

    def conv(inp, w, s, pad):
        return jax.lax.conv_general_dilated(
            r16(inp), r16(jnp.transpose(w, (2, 3, 1, 0))), (s, s), pad,
            dimension_numbers=("NHWC", "HWIO", "NHWC"),
            preferred_element_type=jnp.float32)

    def bn(t, g, b):
        mean = jnp.mean(t, axis=(0, 1, 2), keepdims=True)
        var = jnp.mean((t - mean) ** 2, axis=(0, 1, 2), keepdims=True)
        return (t - mean) * jax.lax.rsqrt(var + EPS) * g + b

    out = conv(x32, params["w1"], stride, [(1, 1), (1, 1)])
    out = jnp.maximum(bn(out, params["g1"], params["b1"]), 0.0)
    out = conv(out, params["w2"], 1, [(1, 1), (1, 1)])
    out = bn(out, params["g2"], params["b2"])
    if stride != 1 or Cin != Cout:
        sc = conv(x32, params["ws"], stride, [(0, 0), (0, 0)])
        sc = bn(sc, params["gs"], params["bs"])
    else:
        sc = x32
    return jnp.transpose(jnp.maximum(out + sc, 0.0), (0, 3, 1, 2))


# ---------------------------------------------------------------------------
# Deterministic parameter construction (synthetic, no checkpoint load)
# ---------------------------------------------------------------------------
def make_params(key, cin, cout, use_proj):
    ks = jax.random.split(key, 9)
    p = {
        "w1": 0.1 * jax.random.normal(ks[0], (cout, cin, 3, 3), jnp.float32),
        "g1": 1.0 + 0.1 * jax.random.normal(ks[1], (cout,), jnp.float32),
        "b1": 0.1 * jax.random.normal(ks[2], (cout,), jnp.float32),
        "w2": 0.1 * jax.random.normal(ks[3], (cout, cout, 3, 3), jnp.float32),
        "g2": 1.0 + 0.1 * jax.random.normal(ks[4], (cout,), jnp.float32),
        "b2": 0.1 * jax.random.normal(ks[5], (cout,), jnp.float32),
    }
    if use_proj:
        p["ws"] = 0.1 * jax.random.normal(ks[6], (cout, cin, 1, 1), jnp.float32)
        p["gs"] = 1.0 + 0.1 * jax.random.normal(ks[7], (cout,), jnp.float32)
        p["bs"] = 0.1 * jax.random.normal(ks[8], (cout,), jnp.float32)
    return p


if __name__ == "__main__":
    root = jax.random.PRNGKey(0)
    k_a, k_b, k_pa, k_pb = jax.random.split(root, 4)

    # Tolerance is set for bf16 MXU operands (f32 accumulation) vs the f32-typed
    # reference of identically-rounded operands.
    RTOL = ATOL = 1e-2

    # Config A: channel change + stride=2 -> projection (1x1 conv + BN) shortcut.
    B, Cin_a, Cout_a, H, W, stride_a = 2, 4, 8, 16, 16, 2
    x_a = jax.random.normal(k_a, (B, Cin_a, H, W), jnp.float32)
    params_a = make_params(k_pa, Cin_a, Cout_a, use_proj=True)
    fwd_a = jax.jit(functools.partial(basic_block_forward, stride=stride_a))
    out_a = jax.block_until_ready(fwd_a(x_a, params_a))
    ref_a = jax.block_until_ready(basic_block_ref(x_a, params_a, stride_a))
    np.testing.assert_allclose(np.asarray(out_a), np.asarray(ref_a),
                               rtol=RTOL, atol=ATOL)

    # Config B: same channels, stride=1 -> identity shortcut.
    Cin_b = Cout_b = 8
    x_b = jax.random.normal(k_b, (B, Cin_b, H, W), jnp.float32)
    params_b = make_params(k_pb, Cin_b, Cout_b, use_proj=False)
    fwd_b = jax.jit(functools.partial(basic_block_forward, stride=1))
    out_b = jax.block_until_ready(fwd_b(x_b, params_b))
    ref_b = jax.block_until_ready(basic_block_ref(x_b, params_b, 1))
    np.testing.assert_allclose(np.asarray(out_b), np.asarray(ref_b),
                               rtol=RTOL, atol=ATOL)

    print("KERNEL_OK")
</pallas_src>

<mosaic_0001>
module attributes {stable_mosaic.version = 11 : i64} {
  func.func @_finalize_proj_kernel(%arg0: i32, %arg1: memref<128x128xf32, #tpu.memory_space<vmem>>, %arg2: memref<128x128xf32, #tpu.memory_space<vmem>>, %arg3: memref<1x128xf32, #tpu.memory_space<vmem>>, %arg4: memref<1x128xf32, #tpu.memory_space<vmem>>, %arg5: memref<1x128xf32, #tpu.memory_space<vmem>>, %arg6: memref<1x128xf32, #tpu.memory_space<vmem>>, %arg7: memref<128x128xf32, #tpu.memory_space<vmem>>) attributes {dimension_semantics = [#tpu.dimension_semantics<parallel>], iteration_bounds = array<i64: 1>, scalar_prefetch = 0 : i64, scratch_operands = 0 : i64, tpu.core_type = #tpu.core_type<tc>, window_params = [{transform_indices = @transform_0, window_bounds = array<i64: 128, 128>}, {transform_indices = @transform_1, window_bounds = array<i64: 128, 128>}, {pipeline_mode = #tpu.pipeline_mode<synchronous>, transform_indices = @transform_2, window_bounds = array<i64: 1, 128>}, {pipeline_mode = #tpu.pipeline_mode<synchronous>, transform_indices = @transform_3, window_bounds = array<i64: 1, 128>}, {pipeline_mode = #tpu.pipeline_mode<synchronous>, transform_indices = @transform_4, window_bounds = array<i64: 1, 128>}, {pipeline_mode = #tpu.pipeline_mode<synchronous>, transform_indices = @transform_5, window_bounds = array<i64: 1, 128>}, {transform_indices = @transform_6, window_bounds = array<i64: 128, 128>}]} {
    %c0 = arith.constant 0 : index
    %c0_0 = arith.constant 0 : index
    %0 = vector.load %arg1[%c0, %c0_0] : memref<128x128xf32, #tpu.memory_space<vmem>>, vector<128x128xf32>
    %c0_1 = arith.constant 0 : index
    %c0_2 = arith.constant 0 : index
    %1 = vector.load %arg3[%c0_1, %c0_2] : memref<1x128xf32, #tpu.memory_space<vmem>>, vector<1x128xf32>
    %2 = vector.broadcast %1 : vector<1x128xf32> to vector<128x128xf32>
    %3 = arith.mulf %0, %2 : vector<128x128xf32>
    %c0_3 = arith.constant 0 : index
    %c0_4 = arith.constant 0 : index
    %4 = vector.load %arg4[%c0_3, %c0_4] : memref<1x128xf32, #tpu.memory_space<vmem>>, vector<1x128xf32>
    %5 = vector.broadcast %4 : vector<1x128xf32> to vector<128x128xf32>
    %6 = arith.addf %3, %5 : vector<128x128xf32>
    %c0_5 = arith.constant 0 : index
    %c0_6 = arith.constant 0 : index
    %7 = vector.load %arg2[%c0_5, %c0_6] : memref<128x128xf32, #tpu.memory_space<vmem>>, vector<128x128xf32>
    %c0_7 = arith.constant 0 : index
    %c0_8 = arith.constant 0 : index
    %8 = vector.load %arg5[%c0_7, %c0_8] : memref<1x128xf32, #tpu.memory_space<vmem>>, vector<1x128xf32>
    %9 = vector.broadcast %8 : vector<1x128xf32> to vector<128x128xf32>
    %10 = arith.mulf %7, %9 : vector<128x128xf32>
    %11 = arith.addf %6, %10 : vector<128x128xf32>
    %c0_9 = arith.constant 0 : index
    %c0_10 = arith.constant 0 : index
    %12 = vector.load %arg6[%c0_9, %c0_10] : memref<1x128xf32, #tpu.memory_space<vmem>>, vector<1x128xf32>
    %13 = vector.broadcast %12 : vector<1x128xf32> to vector<128x128xf32>
    %14 = arith.addf %11, %13 : vector<128x128xf32>
    %cst = arith.constant 0.000000e+00 : f32
    %15 = vector.broadcast %cst : f32 to vector<128x128xf32>
    %16 = arith.maximumf %14, %15 : vector<128x128xf32>
    %c0_11 = arith.constant 0 : index
    %c0_12 = arith.constant 0 : index
    %17 = vector.load %arg7[%c0_11, %c0_12] : memref<128x128xf32, #tpu.memory_space<vmem>>, vector<128x128xf32>
    tpu.vector_store %arg7[%c0_11, %c0_12], %16 {strides = array<i32>} : memref<128x128xf32, #tpu.memory_space<vmem>>, vector<128x128xf32>,
    return
  }
  func.func @transform_0(%arg0: i32) -> (i32, i32) {
    %c0_i32 = arith.constant 0 : i32
    %c0_i32_0 = arith.constant 0 : i32
    return %arg0, %c0_i32 : i32, i32
  }
  func.func @transform_1(%arg0: i32) -> (i32, i32) {
    %c0_i32 = arith.constant 0 : i32
    %c0_i32_0 = arith.constant 0 : i32
    return %arg0, %c0_i32 : i32, i32
  }
  func.func @transform_2(%arg0: i32) -> (i32, i32) {
    %c0_i32 = arith.constant 0 : i32
    %c0_i32_0 = arith.constant 0 : i32
    %c0_i32_1 = arith.constant 0 : i32
    return %c0_i32, %c0_i32_0 : i32, i32
  }
  func.func @transform_3(%arg0: i32) -> (i32, i32) {
    %c0_i32 = arith.constant 0 : i32
    %c0_i32_0 = arith.constant 0 : i32
    %c0_i32_1 = arith.constant 0 : i32
    return %c0_i32, %c0_i32_0 : i32, i32
  }
  func.func @transform_4(%arg0: i32) -> (i32, i32) {
    %c0_i32 = arith.constant 0 : i32
    %c0_i32_0 = arith.constant 0 : i32
    %c0_i32_1 = arith.constant 0 : i32
    return %c0_i32, %c0_i32_0 : i32, i32
  }
  func.func @transform_5(%arg0: i32) -> (i32, i32) {
    %c0_i32 = arith.constant 0 : i32
    %c0_i32_0 = arith.constant 0 : i32
    %c0_i32_1 = arith.constant 0 : i32
    return %c0_i32, %c0_i32_0 : i32, i32
  }
  func.func @transform_6(%arg0: i32) -> (i32, i32) {
    %c0_i32 = arith.constant 0 : i32
    %c0_i32_0 = arith.constant 0 : i32
    return %arg0, %c0_i32 : i32, i32
  }
}

module attributes {stable_mosaic.version = 11 : i64} {
  func.func @kernel(%arg0: i32, %arg1: memref<4x9x9x4xbf16, #tpu.memory_space<vmem>>, %arg2: memref<9x4x128xbf16, #tpu.memory_space<vmem>>, %arg3: memref<1x64x128xf32, #tpu.memory_space<vmem>>, %arg4: memref<1x2x128xf32, #tpu.memory_space<vmem>>) attributes {dimension_semantics = [#tpu.dimension_semantics<parallel>], iteration_bounds = array<i64: 2>, scalar_prefetch = 0 : i64, scratch_operands = 0 : i64, tpu.core_type = #tpu.core_type<tc>, window_params = [{transform_indices = @transform_0, window_bounds = array<i64: 4, 9, 9, 4>}, {pipeline_mode = #tpu.pipeline_mode<synchronous>, transform_indices = @transform_1, window_bounds = array<i64: 9, 4, 128>}, {transform_indices = @transform_2, window_bounds = array<i64: 1, 64, 128>}, {transform_indices = @transform_3, window_bounds = array<i64: 1, 2, 128>}]} {
    %cst = arith.constant 0.000000e+00 : f32
    %0 = vector.broadcast %cst : f32 to vector<64x128xf32>
    %c0 = arith.constant 0 : index
    %c0_0 = arith.constant 0 : index
    %c0_1 = arith.constant 0 : index
    %c0_2 = arith.constant 0 : index
    %1 = vector.load %arg1[%c0, %c0_0, %c0_1, %c0_2] : memref<4x9x9x4xbf16, #tpu.memory_space<vmem>>, vector<1x8x8x4xbf16>
    %2 = vector.shape_cast %1 : vector<1x8x8x4xbf16> to vector<8x8x4xbf16>
    %3 = vector.shape_cast %2 : vector<8x8x4xbf16> to vector<64x4xbf16>
    %c0_3 = arith.constant 0 : index
    %c0_4 = arith.constant 0 : index
    %c0_5 = arith.constant 0 : index
    %4 = vector.load %arg2[%c0_3, %c0_4, %c0_5] : memref<9x4x128xbf16, #tpu.memory_space<vmem>>, vector<1x4x128xbf16>
    %5 = vector.shape_cast %4 : vector<1x4x128xbf16> to vector<4x128xbf16>
    %cst_6 = arith.constant dense<0.000000e+00> : vector<64x128xf32>
    %6 = tpu.matmul %3, %5, %cst_6 {dimension_numbers = #tpu.dot_dimension_numbers<[1], [0], [0], [1], [0, 0, 1, 1], [], []>} : vector<64x4xbf16>, vector<4x128xbf16>, vector<64x128xf32> -> vector<64x128xf32>
    %7 = arith.addf %0, %6 : vector<64x128xf32>
    %c1 = arith.constant 1 : index
    %c0_7 = arith.constant 0 : index
    %c0_8 = arith.constant 0 : index
    %c0_9 = arith.constant 0 : index
    %8 = vector.load %arg1[%c1, %c0_7, %c0_8, %c0_9] : memref<4x9x9x4xbf16, #tpu.memory_space<vmem>>, vector<1x8x8x4xbf16>
    %9 = vector.shape_cast %8 : vector<1x8x8x4xbf16> to vector<8x8x4xbf16>
    %10 = vector.shape_cast %9 : vector<8x8x4xbf16> to vector<64x4xbf16>
    %c1_10 = arith.constant 1 : index
    %c0_11 = arith.constant 0 : index
    %c0_12 = arith.constant 0 : index
    %11 = vector.load %arg2[%c1_10, %c0_11, %c0_12] : memref<9x4x128xbf16, #tpu.memory_space<vmem>>, vector<1x4x128xbf16>
    %12 = vector.shape_cast %11 : vector<1x4x128xbf16> to vector<4x128xbf16>
    %cst_13 = arith.constant dense<0.000000e+00> : vector<64x128xf32>
    %13 = tpu.matmul %10, %12, %cst_13 {dimension_numbers = #tpu.dot_dimension_numbers<[1], [0], [0], [1], [0, 0, 1, 1], [], []>} : vector<64x4xbf16>, vector<4x128xbf16>, vector<64x128xf32> -> vector<64x128xf32>
    %14 = arith.addf %7, %13 : vector<64x128xf32>
    %c0_14 = arith.constant 0 : index
    %c0_15 = arith.constant 0 : index
    %c1_16 = arith.constant 1 : index
    %c0_17 = arith.constant 0 : index
    %15 = vector.load %arg1[%c0_14, %c0_15, %c1_16, %c0_17] : memref<4x9x9x4xbf16, #tpu.memory_space<vmem>>, vector<1x8x8x4xbf16>
    %16 = vector.shape_cast %15 : vector<1x8x8x4xbf16> to vector<8x8x4xbf16>
    %17 = vector.shape_cast %16 : vector<8x8x4xbf16> to vector<64x4xbf16>
    %c2 = arith.constant 2 : index
    %c0_18 = arith.constant 0 : index
    %c0_19 = arith.constant 0 : index
    %18 = vector.load %arg2[%c2, %c0_18, %c0_19] : memref<9x4x128xbf16, #tpu.memory_space<vmem>>, vector<1x4x128xbf16>
    %19 = vector.shape_cast %18 : vector<1x4x128xbf16> to vector<4x128xbf16>
    %cst_20 = arith.constant dense<0.000000e+00> : vector<64x128xf32>
    %20 = tpu.matmul %17, %19, %cst_20 {dimension_numbers = #tpu.dot_dimension_numbers<[1], [0], [0], [1], [0, 0, 1, 1], [], []>} : vector<64x4xbf16>, vector<4x128xbf16>, vector<64x128xf32> -> vector<64x128xf32>
    %21 = arith.addf %14, %20 : vector<64x128xf32>
    %c2_21 = arith.constant 2 : index
    %c0_22 = arith.constant 0 : index
    %c0_23 = arith.constant 0 : index
    %c0_24 = arith.constant 0 : index
    %22 = vector.load %arg1[%c2_21, %c0_22, %c0_23, %c0_24] : memref<4x9x9x4xbf16, #tpu.memory_space<vmem>>, vector<1x8x8x4xbf16>
    %23 = vector.shape_cast %22 : vector<1x8x8x4xbf16> to vector<8x8x4xbf16>
    %24 = vector.shape_cast %23 : vector<8x8x4xbf16> to vector<64x4xbf16>
    %c3 = arith.constant 3 : index
    %c0_25 = arith.constant 0 : index
    %c0_26 = arith.constant 0 : index
    %25 = vector.load %arg2[%c3, %c0_25, %c0_26] : memref<9x4x128xbf16, #tpu.memory_space<vmem>>, vector<1x4x128xbf16>
    %26 = vector.shape_cast %25 : vector<1x4x128xbf16> to vector<4x128xbf16>
    %cst_27 = arith.constant dense<0.000000e+00> : vector<64x128xf32>
    %27 = tpu.matmul %24, %26, %cst_27 {dimension_numbers = #tpu.dot_dimension_numbers<[1], [0], [0], [1], [0, 0, 1, 1], [], []>} : vector<64x4xbf16>, vector<4x128xbf16>, vector<64x128xf32> -> vector<64x128xf32>
    %28 = arith.addf %21, %27 : vector<64x128xf32>
    %c3_28 = arith.constant 3 : index
    %c0_29 = arith.constant 0 : index
    %c0_30 = arith.constant 0 : index
    %c0_31 = arith.constant 0 : index
    %29 = vector.load %arg1[%c3_28, %c0_29, %c0_30, %c0_31] : memref<4x9x9x4xbf16, #tpu.memory_space<vmem>>, vector<1x8x8x4xbf16>
    %30 = vector.shape_cast %29 : vector<1x8x8x4xbf16> to vector<8x8x4xbf16>
    %31 = vector.shape_cast %30 : vector<8x8x4xbf16> to vector<64x4xbf16>
    %c4 = arith.constant 4 : index
    %c0_32 = arith.constant 0 : index
    %c0_33 = arith.constant 0 : index
    %32 = vector.load %arg2[%c4, %c0_32, %c0_33] : memref<9x4x128xbf16, #tpu.memory_space<vmem>>, vector<1x4x128xbf16>
    %33 = vector.shape_cast %32 : vector<1x4x128xbf16> to vector<4x128xbf16>
    %cst_34 = arith.constant dense<0.000000e+00> : vector<64x128xf32>
    %34 = tpu.matmul %31, %33, %cst_34 {dimension_numbers = #tpu.dot_dimension_numbers<[1], [0], [0], [1], [0, 0, 1, 1], [], []>} : vector<64x4xbf16>, vector<4x128xbf16>, vector<64x128xf32> -> vector<64x128xf32>
    %35 = arith.addf %28, %34 : vector<64x128xf32>
    %c2_35 = arith.constant 2 : index
    %c0_36 = arith.constant 0 : index
    %c1_37 = arith.constant 1 : index
    %c0_38 = arith.constant 0 : index
    %36 = vector.load %arg1[%c2_35, %c0_36, %c1_37, %c0_38] : memref<4x9x9x4xbf16, #tpu.memory_space<vmem>>, vector<1x8x8x4xbf16>
    %37 = vector.shape_cast %36 : vector<1x8x8x4xbf16> to vector<8x8x4xbf16>
    %38 = vector.shape_cast %37 : vector<8x8x4xbf16> to vector<64x4xbf16>
    %c5 = arith.constant 5 : index
    %c0_39 = arith.constant 0 : index
    %c0_40 = arith.constant 0 : index
    %39 = vector.load %arg2[%c5, %c0_39, %c0_40] : memref<9x4x128xbf16, #tpu.memory_space<vmem>>, vector<1x4x128xbf16>
    %40 = vector.shape_cast %39 : vector<1x4x128xbf16> to vector<4x128xbf16>
    %cst_41 = arith.constant dense<0.000000e+00> : vector<64x128xf32>
    %41 = tpu.matmul %38, %40, %cst_41 {dimension_numbers = #tpu.dot_dimension_numbers<[1], [0], [0], [1], [0, 0, 1, 1], [], []>} : vector<64x4xbf16>, vector<4x128xbf16>, vector<64x128xf32> -> vector<64x128xf32>
    %42 = arith.addf %35, %41 : vector<64x128xf32>
    %c0_42 = arith.constant 0 : index
    %c1_43 = arith.constant 1 : index
    %c0_44 = arith.constant 0 : index
    %c0_45 = arith.constant 0 : index
    %43 = vector.load %arg1[%c0_42, %c1_43, %c0_44, %c0_45] : memref<4x9x9x4xbf16, #tpu.memory_space<vmem>>, vector<1x8x8x4xbf16>
    %44 = vector.shape_cast %43 : vector<1x8x8x4xbf16> to vector<8x8x4xbf16>
    %45 = vector.shape_cast %44 : vector<8x8x4xbf16> to vector<64x4xbf16>
    %c6 = arith.constant 6 : index
    %c0_46 = arith.constant 0 : index
    %c0_47 = arith.constant 0 : index
    %46 = vector.load %arg2[%c6, %c0_46, %c0_47] : memref<9x4x128xbf16, #tpu.memory_space<vmem>>, vector<1x4x128xbf16>
    %47 = vector.shape_cast %46 : vector<1x4x128xbf16> to vector<4x128xbf16>
    %cst_48 = arith.constant dense<0.000000e+00> : vector<64x128xf32>
    %48 = tpu.matmul %45, %47, %cst_48 {dimension_numbers = #tpu.dot_dimension_numbers<[1], [0], [0], [1], [0, 0, 1, 1], [], []>} : vector<64x4xbf16>, vector<4x128xbf16>, vector<64x128xf32> -> vector<64x128xf32>
    %49 = arith.addf %42, %48 : vector<64x128xf32>
    %c1_49 = arith.constant 1 : index
    %c1_50 = arith.constant 1 : index
    %c0_51 = arith.constant 0 : index
    %c0_52 = arith.constant 0 : index
    %50 = vector.load %arg1[%c1_49, %c1_50, %c0_51, %c0_52] : memref<4x9x9x4xbf16, #tpu.memory_space<vmem>>, vector<1x8x8x4xbf16>
    %51 = vector.shape_cast %50 : vector<1x8x8x4xbf16> to vector<8x8x4xbf16>
    %52 = vector.shape_cast %51 : vector<8x8x4xbf16> to vector<64x4xbf16>
    %c7 = arith.constant 7 : index
    %c0_53 = arith.constant 0 : index
    %c0_54 = arith.constant 0 : index
    %53 = vector.load %arg2[%c7, %c0_53, %c0_54] : memref<9x4x128xbf16, #tpu.memory_space<vmem>>, vector<1x4x128xbf16>
    %54 = vector.shape_cast %53 : vector<1x4x128xbf16> to vector<4x128xbf16>
    %cst_55 = arith.constant dense<0.000000e+00> : vector<64x128xf32>
    %55 = tpu.matmul %52, %54, %cst_55 {dimension_numbers = #tpu.dot_dimension_numbers<[1], [0], [0], [1], [0, 0, 1, 1], [], []>} : vector<64x4xbf16>, vector<4x128xbf16>, vector<64x128xf32> -> vector<64x128xf32>
    %56 = arith.addf %49, %55 : vector<64x128xf32>
    %c0_56 = arith.constant 0 : index
    %c1_57 = arith.constant 1 : index
    %c1_58 = arith.constant 1 : index
    %c0_59 = arith.constant 0 : index
    %57 = vector.load %arg1[%c0_56, %c1_57, %c1_58, %c0_59] : memref<4x9x9x4xbf16, #tpu.memory_space<vmem>>, vector<1x8x8x4xbf16>
    %58 = vector.shape_cast %57 : vector<1x8x8x4xbf16> to vector<8x8x4xbf16>
    %59 = vector.shape_cast %58 : vector<8x8x4xbf16> to vector<64x4xbf16>
    %c8 = arith.constant 8 : index
    %c0_60 = arith.constant 0 : index
    %c0_61 = arith.constant 0 : index
    %60 = vector.load %arg2[%c8, %c0_60, %c0_61] : memref<9x4x128xbf16, #tpu.memory_space<vmem>>, vector<1x4x128xbf16>
    %61 = vector.shape_cast %60 : vector<1x4x128xbf16> to vector<4x128xbf16>
    %cst_62 = arith.constant dense<0.000000e+00> : vector<64x128xf32>
    %62 = tpu.matmul %59, %61, %cst_62 {dimension_numbers = #tpu.dot_dimension_numbers<[1], [0], [0], [1], [0, 0, 1, 1], [], []>} : vector<64x4xbf16>, vector<4x128xbf16>, vector<64x128xf32> -> vector<64x128xf32>
    %63 = arith.addf %56, %62 : vector<64x128xf32>
    %c0_63 = arith.constant 0 : index
    %c0_64 = arith.constant 0 : index
    %c0_65 = arith.constant 0 : index
    %64 = vector.load %arg3[%c0_63, %c0_64, %c0_65] : memref<1x64x128xf32, #tpu.memory_space<vmem>>, vector<1x64x128xf32>
    %65 = vector.shape_cast %64 : vector<1x64x128xf32> to vector<64x128xf32>
    %66 = vector.shape_cast %63 : vector<64x128xf32> to vector<1x64x128xf32>
    tpu.vector_store %arg3[%c0_63, %c0_64, %c0_65], %66 {strides = array<i32>} : memref<1x64x128xf32, #tpu.memory_space<vmem>>, vector<1x64x128xf32>,
    %cst_66 = arith.constant dense<0.000000e+00> : vector<128xf32>
    %67 = vector.multi_reduction <add>, %63, %cst_66 [0] : vector<64x128xf32> to vector<128xf32>
    %68 = vector.shape_cast %67 : vector<128xf32> to vector<1x128xf32>
    %69 = arith.mulf %63, %63 : vector<64x128xf32>
    %cst_67 = arith.constant dense<0.000000e+00> : vector<128xf32>
    %70 = vector.multi_reduction <add>, %69, %cst_67 [0] : vector<64x128xf32> to vector<128xf32>
    %71 = vector.shape_cast %70 : vector<128xf32> to vector<1x128xf32>
    %72 = tpu.concatenate %68, %71 in 0 : vector<1x128xf32>, vector<1x128xf32> -> vector<2x128xf32>
    %c0_68 = arith.constant 0 : index
    %c0_69 = arith.constant 0 : index
    %c0_70 = arith.constant 0 : index
    %73 = vector.load %arg4[%c0_68, %c0_69, %c0_70] : memref<1x2x128xf32, #tpu.memory_space<vmem>>, vector<1x2x128xf32>
    %74 = vector.shape_cast %73 : vector<1x2x128xf32> to vector<2x128xf32>
    %75 = vector.shape_cast %72 : vector<2x128xf32> to vector<1x2x128xf32>
    tpu.vector_store %arg4[%c0_68, %c0_69, %c0_70], %75 {strides = array<i32>} : memref<1x2x128xf32, #tpu.memory_space<vmem>>, vector<1x2x128xf32>,
    return
  }
  func.func @transform_0(%arg0: i32) -> (i32, i32, i32, i32) {
    %c0_i32 = arith.constant 0 : i32
    %c0_i32_0 = arith.constant 0 : i32
    %c0_i32_1 = arith.constant 0 : i32
    %c0_i32_2 = arith.constant 0 : i32
    return %arg0, %c0_i32, %c0_i32_0, %c0_i32_1 : i32, i32, i32, i32
  }
  func.func @transform_1(%arg0: i32) -> (i32, i32, i32) {
    %c0_i32 = arith.constant 0 : i32
    %c0_i32_0 = arith.constant 0 : i32
    %c0_i32_1 = arith.constant 0 : i32
    %c0_i32_2 = arith.constant 0 : i32
    return %c0_i32, %c0_i32_0, %c0_i32_1 : i32, i32, i32
  }
  func.func @transform_2(%arg0: i32) -> (i32, i32, i32) {
    %c0_i32 = arith.constant 0 : i32
    %c0_i32_0 = arith.constant 0 : i32
    %c0_i32_1 = arith.constant 0 : i32
    return %arg0, %c0_i32, %c0_i32_0 : i32, i32, i32
  }
  func.func @transform_3(%arg0: i32) -> (i32, i32, i32) {
    %c0_i32 = arith.constant 0 : i32
    %c0_i32_0 = arith.constant 0 : i32
    %c0_i32_1 = arith.constant 0 : i32
    return %arg0, %c0_i32, %c0_i32_0 : i32, i32, i32
  }
}

module attributes {stable_mosaic.version = 11 : i64} {
  func.func @kernel(%arg0: i32, %arg1: memref<1x64x128xf32, #tpu.memory_space<vmem>>, %arg2: memref<1x128xf32, #tpu.memory_space<vmem>>, %arg3: memref<1x128xf32, #tpu.memory_space<vmem>>, %arg4: memref<9x128x128xbf16, #tpu.memory_space<vmem>>, %arg5: memref<1x64x4xbf16, #tpu.memory_space<vmem>>, %arg6: memref<4x128xbf16, #tpu.memory_space<vmem>>, %arg7: memref<1x64x128xf32, #tpu.memory_space<vmem>>, %arg8: memref<1x2x128xf32, #tpu.memory_space<vmem>>, %arg9: memref<1x64x128xf32, #tpu.memory_space<vmem>>, %arg10: memref<1x2x128xf32, #tpu.memory_space<vmem>>, %arg11: memref<10x10x128xf32, #tpu.memory_space<vmem>>) attributes {dimension_semantics = [#tpu.dimension_semantics<parallel>], iteration_bounds = array<i64: 2>, scalar_prefetch = 0 : i64, scratch_operands = 1 : i64, tpu.core_type = #tpu.core_type<tc>, window_params = [{transform_indices = @transform_0, window_bounds = array<i64: 1, 64, 128>}, {pipeline_mode = #tpu.pipeline_mode<synchronous>, transform_indices = @transform_1, window_bounds = array<i64: 1, 128>}, {pipeline_mode = #tpu.pipeline_mode<synchronous>, transform_indices = @transform_2, window_bounds = array<i64: 1, 128>}, {pipeline_mode = #tpu.pipeline_mode<synchronous>, transform_indices = @transform_3, window_bounds = array<i64: 9, 128, 128>}, {transform_indices = @transform_4, window_bounds = array<i64: 1, 64, 4>}, {pipeline_mode = #tpu.pipeline_mode<synchronous>, transform_indices = @transform_5, window_bounds = array<i64: 4, 128>}, {transform_indices = @transform_6, window_bounds = array<i64: 1, 64, 128>}, {transform_indices = @transform_7, window_bounds = array<i64: 1, 2, 128>}, {transform_indices = @transform_8, window_bounds = array<i64: 1, 64, 128>}, {transform_indices = @transform_9, window_bounds = array<i64: 1, 2, 128>}]} {
    %c0 = arith.constant 0 : index
    %c0_0 = arith.constant 0 : index
    %c0_1 = arith.constant 0 : index
    %0 = vector.load %arg1[%c0, %c0_0, %c0_1] : memref<1x64x128xf32, #tpu.memory_space<vmem>>, vector<1x64x128xf32>
    %1 = vector.shape_cast %0 : vector<1x64x128xf32> to vector<64x128xf32>
    %c0_2 = arith.constant 0 : index
    %c0_3 = arith.constant 0 : index
    %2 = vector.load %arg2[%c0_2, %c0_3] : memref<1x128xf32, #tpu.memory_space<vmem>>, vector<1x128xf32>
    %3 = vector.broadcast %2 : vector<1x128xf32> to vector<64x128xf32>
    %4 = arith.mulf %1, %3 : vector<64x128xf32>
    %c0_4 = arith.constant 0 : index
    %c0_5 = arith.constant 0 : index
    %5 = vector.load %arg3[%c0_4, %c0_5] : memref<1x128xf32, #tpu.memory_space<vmem>>, vector<1x128xf32>
    %6 = vector.broadcast %5 : vector<1x128xf32> to vector<64x128xf32>
    %7 = arith.addf %4, %6 : vector<64x128xf32>
    %cst = arith.constant 0.000000e+00 : f32
    %8 = vector.broadcast %cst : f32 to vector<64x128xf32>
    %9 = arith.maximumf %7, %8 : vector<64x128xf32>
    %cst_6 = arith.constant 0.000000e+00 : f32
    %10 = vector.broadcast %cst_6 : f32 to vector<10x10x128xf32>
    %c0_7 = arith.constant 0 : index
    %c0_8 = arith.constant 0 : index
    %c0_9 = arith.constant 0 : index
    %11 = vector.load %arg11[%c0_7, %c0_8, %c0_9] : memref<10x10x128xf32, #tpu.memory_space<vmem>>, vector<10x10x128xf32>
    tpu.vector_store %arg11[%c0_7, %c0_8, %c0_9], %10 {strides = array<i32>} : memref<10x10x128xf32, #tpu.memory_space<vmem>>, vector<10x10x128xf32>,
    %12 = vector.shape_cast %9 : vector<64x128xf32> to vector<8x8x128xf32>
    %c1 = arith.constant 1 : index
    %c1_10 = arith.constant 1 : index
    %c0_11 = arith.constant 0 : index
    %13 = vector.load %arg11[%c1, %c1_10, %c0_11] : memref<10x10x128xf32, #tpu.memory_space<vmem>>, vector<8x8x128xf32>
    tpu.vector_store %arg11[%c1, %c1_10, %c0_11], %12 {strides = array<i32>} : memref<10x10x128xf32, #tpu.memory_space<vmem>>, vector<8x8x128xf32>,
    %cst_12 = arith.constant 0.000000e+00 : f32
    %14 = vector.broadcast %cst_12 : f32 to vector<64x128xf32>
    %c0_13 = arith.constant 0 : index
    %c0_14 = arith.constant 0 : index
    %c0_15 = arith.constant 0 : index
    %15 = vector.load %arg11[%c0_13, %c0_14, %c0_15] : memref<10x10x128xf32, #tpu.memory_space<vmem>>, vector<8x8x128xf32>
    %16 = vector.shape_cast %15 : vector<8x8x128xf32> to vector<64x128xf32>
    %17 = arith.truncf %16 : vector<64x128xf32> to vector<64x128xbf16>
    %c0_16 = arith.constant 0 : index
    %c0_17 = arith.constant 0 : index
    %c0_18 = arith.constant 0 : index
    %18 = vector.load %arg4[%c0_16, %c0_17, %c0_18] : memref<9x128x128xbf16, #tpu.memory_space<vmem>>, vector<1x128x128xbf16>
    %19 = vector.shape_cast %18 : vector<1x128x128xbf16> to vector<128x128xbf16>
    %cst_19 = arith.constant dense<0.000000e+00> : vector<64x128xf32>
    %20 = tpu.matmul %17, %19, %cst_19 {dimension_numbers = #tpu.dot_dimension_numbers<[1], [0], [0], [1], [0, 0, 1, 1], [], []>} : vector<64x128xbf16>, vector<128x128xbf16>, vector<64x128xf32> -> vector<64x128xf32>
    %21 = arith.addf %14, %20 : vector<64x128xf32>
    %c0_20 = arith.constant 0 : index
    %c1_21 = arith.constant 1 : index
    %c0_22 = arith.constant 0 : index
    %22 = vector.load %arg11[%c0_20, %c1_21, %c0_22] : memref<10x10x128xf32, #tpu.memory_space<vmem>>, vector<8x8x128xf32>
    %23 = vector.shape_cast %22 : vector<8x8x128xf32> to vector<64x128xf32>
    %24 = arith.truncf %23 : vector<64x128xf32> to vector<64x128xbf16>
    %c1_23 = arith.constant 1 : index
    %c0_24 = arith.constant 0 : index
    %c0_25 = arith.constant 0 : index
    %25 = vector.load %arg4[%c1_23, %c0_24, %c0_25] : memref<9x128x128xbf16, #tpu.memory_space<vmem>>, vector<1x128x128xbf16>
    %26 = vector.shape_cast %25 : vector<1x128x128xbf16> to vector<128x128xbf16>
    %cst_26 = arith.constant dense<0.000000e+00> : vector<64x128xf32>
    %27 = tpu.matmul %24, %26, %cst_26 {dimension_numbers = #tpu.dot_dimension_numbers<[1], [0], [0], [1], [0, 0, 1, 1], [], []>} : vector<64x128xbf16>, vector<128x128xbf16>, vector<64x128xf32> -> vector<64x128xf32>
    %28 = arith.addf %21, %27 : vector<64x128xf32>
    %c0_27 = arith.constant 0 : index
    %c2 = arith.constant 2 : index
    %c0_28 = arith.constant 0 : index
    %29 = vector.load %arg11[%c0_27, %c2, %c0_28] : memref<10x10x128xf32, #tpu.memory_space<vmem>>, vector<8x8x128xf32>
    %30 = vector.shape_cast %29 : vector<8x8x128xf32> to vector<64x128xf32>
    %31 = arith.truncf %30 : vector<64x128xf32> to vector<64x128xbf16>
    %c2_29 = arith.constant 2 : index
    %c0_30 = arith.constant 0 : index
    %c0_31 = arith.constant 0 : index
    %32 = vector.load %arg4[%c2_29, %c0_30, %c0_31] : memref<9x128x128xbf16, #tpu.memory_space<vmem>>, vector<1x128x128xbf16>
    %33 = vector.shape_cast %32 : vector<1x128x128xbf16> to vector<128x128xbf16>
    %cst_32 = arith.constant dense<0.000000e+00> : vector<64x128xf32>
    %34 = tpu.matmul %31, %33, %cst_32 {dimension_numbers = #tpu.dot_dimension_numbers<[1], [0], [0], [1], [0, 0, 1, 1], [], []>} : vector<64x128xbf16>, vector<128x128xbf16>, vector<64x128xf32> -> vector<64x128xf32>
    %35 = arith.addf %28, %34 : vector<64x128xf32>
    %c1_33 = arith.constant 1 : index
    %c0_34 = arith.constant 0 : index
    %c0_35 = arith.constant 0 : index
    %36 = vector.load %arg11[%c1_33, %c0_34, %c0_35] : memref<10x10x128xf32, #tpu.memory_space<vmem>>, vector<8x8x128xf32>
    %37 = vector.shape_cast %36 : vector<8x8x128xf32> to vector<64x128xf32>
    %38 = arith.truncf %37 : vector<64x128xf32> to vector<64x128xbf16>
    %c3 = arith.constant 3 : index
    %c0_36 = arith.constant 0 : index
    %c0_37 = arith.constant 0 : index
    %39 = vector.load %arg4[%c3, %c0_36, %c0_37] : memref<9x128x128xbf16, #tpu.memory_space<vmem>>, vector<1x128x128xbf16>
    %40 = vector.shape_cast %39 : vector<1x128x128xbf16> to vector<128x128xbf16>
    %cst_38 = arith.constant dense<0.000000e+00> : vector<64x128xf32>
    %41 = tpu.matmul %38, %40, %cst_38 {dimension_numbers = #tpu.dot_dimension_numbers<[1], [0], [0], [1], [0, 0, 1, 1], [], []>} : vector<64x128xbf16>, vector<128x128xbf16>, vector<64x128xf32> -> vector<64x128xf32>
    %42 = arith.addf %35, %41 : vector<64x128xf32>
    %c1_39 = arith.constant 1 : index
    %c1_40 = arith.constant 1 : index
    %c0_41 = arith.constant 0 : index
    %43 = vector.load %arg11[%c1_39, %c1_40, %c0_41] : memref<10x10x128xf32, #tpu.memory_space<vmem>>, vector<8x8x128xf32>
    %44 = vector.shape_cast %43 : vector<8x8x128xf32> to vector<64x128xf32>
    %45 = arith.truncf %44 : vector<64x128xf32> to vector<64x128xbf16>
    %c4 = arith.constant 4 : index
    %c0_42 = arith.constant 0 : index
    %c0_43 = arith.constant 0 : index
    %46 = vector.load %arg4[%c4, %c0_42, %c0_43] : memref<9x128x128xbf16, #tpu.memory_space<vmem>>, vector<1x128x128xbf16>
    %47 = vector.shape_cast %46 : vector<1x128x128xbf16> to vector<128x128xbf16>
    %cst_44 = arith.constant dense<0.000000e+00> : vector<64x128xf32>
    %48 = tpu.matmul %45, %47, %cst_44 {dimension_numbers = #tpu.dot_dimension_numbers<[1], [0], [0], [1], [0, 0, 1, 1], [], []>} : vector<64x128xbf16>, vector<128x128xbf16>, vector<64x128xf32> -> vector<64x128xf32>
    %49 = arith.addf %42, %48 : vector<64x128xf32>
    %c1_45 = arith.constant 1 : index
    %c2_46 = arith.constant 2 : index
    %c0_47 = arith.constant 0 : index
    %50 = vector.load %arg11[%c1_45, %c2_46, %c0_47] : memref<10x10x128xf32, #tpu.memory_space<vmem>>, vector<8x8x128xf32>
    %51 = vector.shape_cast %50 : vector<8x8x128xf32> to vector<64x128xf32>
    %52 = arith.truncf %51 : vector<64x128xf32> to vector<64x128xbf16>
    %c5 = arith.constant 5 : index
    %c0_48 = arith.constant 0 : index
    %c0_49 = arith.constant 0 : index
    %53 = vector.load %arg4[%c5, %c0_48, %c0_49] : memref<9x128x128xbf16, #tpu.memory_space<vmem>>, vector<1x128x128xbf16>
    %54 = vector.shape_cast %53 : vector<1x128x128xbf16> to vector<128x128xbf16>
    %cst_50 = arith.constant dense<0.000000e+00> : vector<64x128xf32>
    %55 = tpu.matmul %52, %54, %cst_50 {dimension_numbers = #tpu.dot_dimension_numbers<[1], [0], [0], [1], [0, 0, 1, 1], [], []>} : vector<64x128xbf16>, vector<128x128xbf16>, vector<64x128xf32> -> vector<64x128xf32>
    %56 = arith.addf %49, %55 : vector<64x128xf32>
    %c2_51 = arith.constant 2 : index
    %c0_52 = arith.constant 0 : index
    %c0_53 = arith.constant 0 : index
    %57 = vector.load %arg11[%c2_51, %c0_52, %c0_53] : memref<10x10x128xf32, #tpu.memory_space<vmem>>, vector<8x8x128xf32>
    %58 = vector.shape_cast %57 : vector<8x8x128xf32> to vector<64x128xf32>
    %59 = arith.truncf %58 : vector<64x128xf32> to vector<64x128xbf16>
    %c6 = arith.constant 6 : index
    %c0_54 = arith.constant 0 : index
    %c0_55 = arith.constant 0 : index
    %60 = vector.load %arg4[%c6, %c0_54, %c0_55] : memref<9x128x128xbf16, #tpu.memory_space<vmem>>, vector<1x128x128xbf16>
    %61 = vector.shape_cast %60 : vector<1x128x128xbf16> to vector<128x128xbf16>
    %cst_56 = arith.constant dense<0.000000e+00> : vector<64x128xf32>
    %62 = tpu.matmul %59, %61, %cst_56 {dimension_numbers = #tpu.dot_dimension_numbers<[1], [0], [0], [1], [0, 0, 1, 1], [], []>} : vector<64x128xbf16>, vector<128x128xbf16>, vector<64x128xf32> -> vector<64x128xf32>
    %63 = arith.addf %56, %62 : vector<64x128xf32>
    %c2_57 = arith.constant 2 : index
    %c1_58 = arith.constant 1 : index
    %c0_59 = arith.constant 0 : index
    %64 = vector.load %arg11[%c2_57, %c1_58, %c0_59] : memref<10x10x128xf32, #tpu.memory_space<vmem>>, vector<8x8x128xf32>
    %65 = vector.shape_cast %64 : vector<8x8x128xf32> to vector<64x128xf32>
    %66 = arith.truncf %65 : vector<64x128xf32> to vector<64x128xbf16>
    %c7 = arith.constant 7 : index
    %c0_60 = arith.constant 0 : index
    %c0_61 = arith.constant 0 : index
    %67 = vector.load %arg4[%c7, %c0_60, %c0_61] : memref<9x128x128xbf16, #tpu.memory_space<vmem>>, vector<1x128x128xbf16>
    %68 = vector.shape_cast %67 : vector<1x128x128xbf16> to vector<128x128xbf16>
    %cst_62 = arith.constant dense<0.000000e+00> : vector<64x128xf32>
    %69 = tpu.matmul %66, %68, %cst_62 {dimension_numbers = #tpu.dot_dimension_numbers<[1], [0], [0], [1], [0, 0, 1, 1], [], []>} : vector<64x128xbf16>, vector<128x128xbf16>, vector<64x128xf32> -> vector<64x128xf32>
    %70 = arith.addf %63, %69 : vector<64x128xf32>
    %c2_63 = arith.constant 2 : index
    %c2_64 = arith.constant 2 : index
    %c0_65 = arith.constant 0 : index
    %71 = vector.load %arg11[%c2_63, %c2_64, %c0_65] : memref<10x10x128xf32, #tpu.memory_space<vmem>>, vector<8x8x128xf32>
    %72 = vector.shape_cast %71 : vector<8x8x128xf32> to vector<64x128xf32>
    %73 = arith.truncf %72 : vector<64x128xf32> to vector<64x128xbf16>
    %c8 = arith.constant 8 : index
    %c0_66 = arith.constant 0 : index
    %c0_67 = arith.constant 0 : index
    %74 = vector.load %arg4[%c8, %c0_66, %c0_67] : memref<9x128x128xbf16, #tpu.memory_space<vmem>>, vector<1x128x128xbf16>
    %75 = vector.shape_cast %74 : vector<1x128x128xbf16> to vector<128x128xbf16>
    %cst_68 = arith.constant dense<0.000000e+00> : vector<64x128xf32>
    %76 = tpu.matmul %73, %75, %cst_68 {dimension_numbers = #tpu.dot_dimension_numbers<[1], [0], [0], [1], [0, 0, 1, 1], [], []>} : vector<64x128xbf16>, vector<128x128xbf16>, vector<64x128xf32> -> vector<64x128xf32>
    %77 = arith.addf %70, %76 : vector<64x128xf32>
    %c0_69 = arith.constant 0 : index
    %c0_70 = arith.constant 0 : index
    %c0_71 = arith.constant 0 : index
    %78 = vector.load %arg7[%c0_69, %c0_70, %c0_71] : memref<1x64x128xf32, #tpu.memory_space<vmem>>, vector<1x64x128xf32>
    %79 = vector.shape_cast %78 : vector<1x64x128xf32> to vector<64x128xf32>
    %80 = vector.shape_cast %77 : vector<64x128xf32> to vector<1x64x128xf32>
    tpu.vector_store %arg7[%c0_69, %c0_70, %c0_71], %80 {strides = array<i32>} : memref<1x64x128xf32, #tpu.memory_space<vmem>>, vector<1x64x128xf32>,
    %cst_72 = arith.constant dense<0.000000e+00> : vector<128xf32>
    %81 = vector.multi_reduction <add>, %77, %cst_72 [0] : vector<64x128xf32> to vector<128xf32>
    %82 = vector.shape_cast %81 : vector<128xf32> to vector<1x128xf32>
    %83 = arith.mulf %77, %77 : vector<64x128xf32>
    %cst_73 = arith.constant dense<0.000000e+00> : vector<128xf32>
    %84 = vector.multi_reduction <add>, %83, %cst_73 [0] : vector<64x128xf32> to vector<128xf32>
    %85 = vector.shape_cast %84 : vector<128xf32> to vector<1x128xf32>
    %86 = tpu.concatenate %82, %85 in 0 : vector<1x128xf32>, vector<1x128xf32> -> vector<2x128xf32>
    %c0_74 = arith.constant 0 : index
    %c0_75 = arith.constant 0 : index
    %c0_76 = arith.constant 0 : index
    %87 = vector.load %arg8[%c0_74, %c0_75, %c0_76] : memref<1x2x128xf32, #tpu.memory_space<vmem>>, vector<1x2x128xf32>
    %88 = vector.shape_cast %87 : vector<1x2x128xf32> to vector<2x128xf32>
    %89 = vector.shape_cast %86 : vector<2x128xf32> to vector<1x2x128xf32>
    tpu.vector_store %arg8[%c0_74, %c0_75, %c0_76], %89 {strides = array<i32>} : memref<1x2x128xf32, #tpu.memory_space<vmem>>, vector<1x2x128xf32>,
    %c0_77 = arith.constant 0 : index
    %c0_78 = arith.constant 0 : index
    %c0_79 = arith.constant 0 : index
    %90 = vector.load %arg5[%c0_77, %c0_78, %c0_79] : memref<1x64x4xbf16, #tpu.memory_space<vmem>>, vector<1x64x4xbf16>
    %91 = vector.shape_cast %90 : vector<1x64x4xbf16> to vector<64x4xbf16>
    %c0_80 = arith.constant 0 : index
    %c0_81 = arith.constant 0 : index
    %92 = vector.load %arg6[%c0_80, %c0_81] : memref<4x128xbf16, #tpu.memory_space<vmem>>, vector<4x128xbf16>
    %cst_82 = arith.constant dense<0.000000e+00> : vector<64x128xf32>
    %93 = tpu.matmul %91, %92, %cst_82 {dimension_numbers = #tpu.dot_dimension_numbers<[1], [0], [0], [1], [0, 0, 1, 1], [], []>} : vector<64x4xbf16>, vector<4x128xbf16>, vector<64x128xf32> -> vector<64x128xf32>
    %c0_83 = arith.constant 0 : index
    %c0_84 = arith.constant 0 : index
    %c0_85 = arith.constant 0 : index
    %94 = vector.load %arg9[%c0_83, %c0_84, %c0_85] : memref<1x64x128xf32, #tpu.memory_space<vmem>>, vector<1x64x128xf32>
    %95 = vector.shape_cast %94 : vector<1x64x128xf32> to vector<64x128xf32>
    %96 = vector.shape_cast %93 : vector<64x128xf32> to vector<1x64x128xf32>
    tpu.vector_store %arg9[%c0_83, %c0_84, %c0_85], %96 {strides = array<i32>} : memref<1x64x128xf32, #tpu.memory_space<vmem>>, vector<1x64x128xf32>,
    %cst_86 = arith.constant dense<0.000000e+00> : vector<128xf32>
    %97 = vector.multi_reduction <add>, %93, %cst_86 [0] : vector<64x128xf32> to vector<128xf32>
    %98 = vector.shape_cast %97 : vector<128xf32> to vector<1x128xf32>
    %99 = arith.mulf %93, %93 : vector<64x128xf32>
    %cst_87 = arith.constant dense<0.000000e+00> : vector<128xf32>
    %100 = vector.multi_reduction <add>, %99, %cst_87 [0] : vector<64x128xf32> to vector<128xf32>
    %101 = vector.shape_cast %100 : vector<128xf32> to vector<1x128xf32>
    %102 = tpu.concatenate %98, %101 in 0 : vector<1x128xf32>, vector<1x128xf32> -> vector<2x128xf32>
    %c0_88 = arith.constant 0 : index
    %c0_89 = arith.constant 0 : index
    %c0_90 = arith.constant 0 : index
    %103 = vector.load %arg10[%c0_88, %c0_89, %c0_90] : memref<1x2x128xf32, #tpu.memory_space<vmem>>, vector<1x2x128xf32>
    %104 = vector.shape_cast %103 : vector<1x2x128xf32> to vector<2x128xf32>
    %105 = vector.shape_cast %102 : vector<2x128xf32> to vector<1x2x128xf32>
    tpu.vector_store %arg10[%c0_88, %c0_89, %c0_90], %105 {strides = array<i32>} : memref<1x2x128xf32, #tpu.memory_space<vmem>>, vector<1x2x128xf32>,
    return
  }
  func.func @transform_0(%arg0: i32) -> (i32, i32, i32) {
    %c0_i32 = arith.constant 0 : i32
    %c0_i32_0 = arith.constant 0 : i32
    %c0_i32_1 = arith.constant 0 : i32
    return %arg0, %c0_i32, %c0_i32_0 : i32, i32, i32
  }
  func.func @transform_1(%arg0: i32) -> (i32, i32) {
    %c0_i32 = arith.constant 0 : i32
    %c0_i32_0 = arith.constant 0 : i32
    %c0_i32_1 = arith.constant 0 : i32
    return %c0_i32, %c0_i32_0 : i32, i32
  }
  func.func @transform_2(%arg0: i32) -> (i32, i32) {
    %c0_i32 = arith.constant 0 : i32
    %c0_i32_0 = arith.constant 0 : i32
    %c0_i32_1 = arith.constant 0 : i32
    return %c0_i32, %c0_i32_0 : i32, i32
  }
  func.func @transform_3(%arg0: i32) -> (i32, i32, i32) {
    %c0_i32 = arith.constant 0 : i32
    %c0_i32_0 = arith.constant 0 : i32
    %c0_i32_1 = arith.constant 0 : i32
    %c0_i32_2 = arith.constant 0 : i32
    return %c0_i32, %c0_i32_0, %c0_i32_1 : i32, i32, i32
  }
  func.func @transform_4(%arg0: i32) -> (i32, i32, i32) {
    %c0_i32 = arith.constant 0 : i32
    %c0_i32_0 = arith.constant 0 : i32
    %c0_i32_1 = arith.constant 0 : i32
    return %arg0, %c0_i32, %c0_i32_0 : i32, i32, i32
  }
  func.func @transform_5(%arg0: i32) -> (i32, i32) {
    %c0_i32 = arith.constant 0 : i32
    %c0_i32_0 = arith.constant 0 : i32
    %c0_i32_1 = arith.constant 0 : i32
    return %c0_i32, %c0_i32_0 : i32, i32
  }
  func.func @transform_6(%arg0: i32) -> (i32, i32, i32) {
    %c0_i32 = arith.constant 0 : i32
    %c0_i32_0 = arith.constant 0 : i32
    %c0_i32_1 = arith.constant 0 : i32
    return %arg0, %c0_i32, %c0_i32_0 : i32, i32, i32
  }
  func.func @transform_7(%arg0: i32) -> (i32, i32, i32) {
    %c0_i32 = arith.constant 0 : i32
    %c0_i32_0 = arith.constant 0 : i32
    %c0_i32_1 = arith.constant 0 : i32
    return %arg0, %c0_i32, %c0_i32_0 : i32, i32, i32
  }
  func.func @transform_8(%arg0: i32) -> (i32, i32, i32) {
    %c0_i32 = arith.constant 0 : i32
    %c0_i32_0 = arith.constant 0 : i32
    %c0_i32_1 = arith.constant 0 : i32
    return %arg0, %c0_i32, %c0_i32_0 : i32, i32, i32
  }
  func.func @transform_9(%arg0: i32) -> (i32, i32, i32) {
    %c0_i32 = arith.constant 0 : i32
    %c0_i32_0 = arith.constant 0 : i32
    %c0_i32_1 = arith.constant 0 : i32
    return %arg0, %c0_i32, %c0_i32_0 : i32, i32, i32
  }
}

</mosaic_0001>

<llo_original>
// kernel: basic_block_forward.5
$region0: #{basic_block_forward.5}
  #allocation0 [shape = 'u32[]', space=smem, size = 0x4, offset = 0x4, fixed_abs, tag = 'smem constant byte address 0x4 - core index']
  #allocation1 [shape = 'u32[72,128]{1,0:T(1,128)}', space=vmem, size = 0x9000, scoped, tag = 'internal scratch']
  %s0 = inlined_call_operand.vmem [shape: f32[128,128], index: 0, kind: input, shape index: {}]
  %s1 = inlined_call_operand.vmem [shape: f32[128,128], index: 1, kind: input, shape index: {}]
  %s2 = inlined_call_operand.vmem [shape: f32[1,128], index: 2, kind: input, shape index: {}]
  %s3 = inlined_call_operand.vmem [shape: f32[1,128], index: 3, kind: input, shape index: {}]
  %s4 = inlined_call_operand.vmem [shape: f32[1,128], index: 4, kind: input, shape index: {}]
  %s5 = inlined_call_operand.vmem [shape: f32[1,128], index: 5, kind: input, shape index: {}]
  %s6 = inlined_call_operand.vmem [shape: f32[128,128], index: 6, kind: output, shape index: {}]
  %s7 = sld [smem:[#allocation0]]
  $region34: #{basic_block_forward.5} parent=0
    _
  %s9 = ssub.s32 1, %s7
  %s10 = scalar_select 0, %s9, %s7
  // Predicated region
  $region2: #{basic_block_forward.5} parent=0 // pred_check
    _
  $region3: #{basic_block_forward.5} parent=0 // pred_check_branch
    %12 = sbr.rel (0) target = $region5
  $region4: #{basic_block_forward.5} parent=0 // pred_region
    _
  $region5: #{basic_block_forward.5} parent=0 // pred_fallthru
    _
  // Predicated region
  $region6: #{basic_block_forward.5} parent=0 // pred_check
    _
  $region7: #{basic_block_forward.5} parent=0 // pred_check_branch
    %14 = sbr.rel (0) target = $region9
  $region8: #{basic_block_forward.5} parent=0 // pred_region
    _
  $region9: #{basic_block_forward.5} parent=0 // pred_fallthru
    _
  // Predicated region
  $region10: #{basic_block_forward.5} parent=0 // pred_check
    _
  $region11: #{basic_block_forward.5} parent=0 // pred_check_branch
    %16 = sbr.rel (0) target = $region13
  $region12: #{basic_block_forward.5} parent=0 // pred_region
    _
  $region13: #{basic_block_forward.5} parent=0 // pred_fallthru
    _
  // Predicated region
  $region14: #{basic_block_forward.5} parent=0 // pred_check
    _
  $region15: #{basic_block_forward.5} parent=0 // pred_check_branch
    %18 = sbr.rel (0) target = $region17
  $region16: #{basic_block_forward.5} parent=0 // pred_region
    _
  $region17: #{basic_block_forward.5} parent=0 // pred_fallthru
    _
  // Predicated region
  $region18: #{basic_block_forward.5} parent=0 // pred_check
    _
  $region19: #{basic_block_forward.5} parent=0 // pred_check_branch
    %20 = sbr.rel (0) target = $region21
  $region20: #{basic_block_forward.5} parent=0 // pred_region
    _
  $region21: #{basic_block_forward.5} parent=0 // pred_fallthru
    _
  // Predicated region
  $region22: #{basic_block_forward.5} parent=0 // pred_check
    _
  $region23: #{basic_block_forward.5} parent=0 // pred_check_branch
    %22 = sbr.rel (0) target = $region25
  $region24: #{basic_block_forward.5} parent=0 // pred_region
    _
  $region25: #{basic_block_forward.5} parent=0 // pred_fallthru
    _
  %v23 = vld [vmem:[%s0] sm:$0xff]
  %v24 = vld [vmem:[%s0 + $0x8] sm:$0xff]
  %v25 = vld [vmem:[%s0 + $0x10] sm:$0xff]
  %v26 = vld [vmem:[%s0 + $0x18] sm:$0xff]
  %v27 = vld [vmem:[%s0 + $0x20] sm:$0xff]
  %v28 = vld [vmem:[%s0 + $0x28] sm:$0xff]
  %v29 = vld [vmem:[%s0 + $0x30] sm:$0xff]
  %v30 = vld [vmem:[%s0 + $0x38] sm:$0xff]
  %v31 = vld [vmem:[%s0 + $0x40] sm:$0xff]
  %v32 = vld [vmem:[%s0 + $0x48] sm:$0xff]
  %v33 = vld [vmem:[%s0 + $0x50] sm:$0xff]
  %v34 = vld [vmem:[%s0 + $0x58] sm:$0xff]
  %v35 = vld [vmem:[%s0 + $0x60] sm:$0xff]
  %v36 = vld [vmem:[%s0 + $0x68] sm:$0xff]
  %v37 = vld [vmem:[%s0 + $0x70] sm:$0xff]
  %v38 = vld [vmem:[%s0 + $0x78] sm:$0xff]
  %v39 = vld [vmem:[%s2] sm:$0x1]
  %v41 = vperm.slane %v39, 0
  %v43 = vmul.f32 %v23, %v41
  %v44 = vmul.f32 %v24, %v41
  %v45 = vmul.f32 %v25, %v41
  %v46 = vmul.f32 %v26, %v41
  %v47 = vmul.f32 %v27, %v41
  %v48 = vmul.f32 %v28, %v41
  %v49 = vmul.f32 %v29, %v41
  %v50 = vmul.f32 %v30, %v41
  %v51 = vmul.f32 %v31, %v41
  %v52 = vmul.f32 %v32, %v41
  %v53 = vmul.f32 %v33, %v41
  %v54 = vmul.f32 %v34, %v41
  %v55 = vmul.f32 %v35, %v41
  %v56 = vmul.f32 %v36, %v41
  %v57 = vmul.f32 %v37, %v41
  %v58 = vmul.f32 %v38, %v41
  %v59 = vld [vmem:[%s3] sm:$0x1]
  %v61 = vperm.slane %v59, 0
  %v63 = vadd.f32 %v43, %v61
  %v64 = vadd.f32 %v44, %v61
  %v65 = vadd.f32 %v45, %v61
  %v66 = vadd.f32 %v46, %v61
  %v67 = vadd.f32 %v47, %v61
  %v68 = vadd.f32 %v48, %v61
  %v69 = vadd.f32 %v49, %v61
  %v70 = vadd.f32 %v50, %v61
  %v71 = vadd.f32 %v51, %v61
  %v72 = vadd.f32 %v52, %v61
  %v73 = vadd.f32 %v53, %v61
  %v74 = vadd.f32 %v54, %v61
  %v75 = vadd.f32 %v55, %v61
  %v76 = vadd.f32 %v56, %v61
  %v77 = vadd.f32 %v57, %v61
  %v78 = vadd.f32 %v58, %v61
  %v79 = vld [vmem:[%s1] sm:$0xff]
  %v80 = vld [vmem:[%s1 + $0x8] sm:$0xff]
  %v81 = vld [vmem:[%s1 + $0x10] sm:$0xff]
  %v82 = vld [vmem:[%s1 + $0x18] sm:$0xff]
  %v83 = vld [vmem:[%s1 + $0x20] sm:$0xff]
  %v84 = vld [vmem:[%s1 + $0x28] sm:$0xff]
  %v85 = vld [vmem:[%s1 + $0x30] sm:$0xff]
  %v86 = vld [vmem:[%s1 + $0x38] sm:$0xff]
  %v87 = vld [vmem:[%s1 + $0x40] sm:$0xff]
  %v88 = vld [vmem:[%s1 + $0x48] sm:$0xff]
  %v89 = vld [vmem:[%s1 + $0x50] sm:$0xff]
  %v90 = vld [vmem:[%s1 + $0x58] sm:$0xff]
  %v91 = vld [vmem:[%s1 + $0x60] sm:$0xff]
  %v92 = vld [vmem:[%s1 + $0x68] sm:$0xff]
  %v93 = vld [vmem:[%s1 + $0x70] sm:$0xff]
  %v94 = vld [vmem:[%s1 + $0x78] sm:$0xff]
  %v95 = vld [vmem:[%s4] sm:$0x1]
  %v97 = vperm.slane %v95, 0
  %v99 = vmul.f32 %v79, %v97
  %v100 = vmul.f32 %v80, %v97
  %v101 = vmul.f32 %v81, %v97
  %v102 = vmul.f32 %v82, %v97
  %v103 = vmul.f32 %v83, %v97
  %v104 = vmul.f32 %v84, %v97
  %v105 = vmul.f32 %v85, %v97
  %v106 = vmul.f32 %v86, %v97
  %v107 = vmul.f32 %v87, %v97
  %v108 = vmul.f32 %v88, %v97
  %v109 = vmul.f32 %v89, %v97
  %v110 = vmul.f32 %v90, %v97
  %v111 = vmul.f32 %v91, %v97
  %v112 = vmul.f32 %v92, %v97
  %v113 = vmul.f32 %v93, %v97
  %v114 = vmul.f32 %v94, %v97
  %v115 = vadd.f32 %v63, %v99
  %v116 = vadd.f32 %v64, %v100
  %v117 = vadd.f32 %v65, %v101
  %v118 = vadd.f32 %v66, %v102
  %v119 = vadd.f32 %v67, %v103
  %v120 = vadd.f32 %v68, %v104
  %v121 = vadd.f32 %v69, %v105
  %v122 = vadd.f32 %v70, %v106
  %v123 = vadd.f32 %v71, %v107
  %v124 = vadd.f32 %v72, %v108
  %v125 = vadd.f32 %v73, %v109
  %v126 = vadd.f32 %v74, %v110
  %v127 = vadd.f32 %v75, %v111
  %v128 = vadd.f32 %v76, %v112
  %v129 = vadd.f32 %v77, %v113
  %v130 = vadd.f32 %v78, %v114
  %v131 = vld [vmem:[%s5] sm:$0x1]
  %v133 = vperm.slane %v131, 0
  %v135 = vadd.f32 %v115, %v133
  %v136 = vadd.f32 %v116, %v133
  %v137 = vadd.f32 %v117, %v133
  %v138 = vadd.f32 %v118, %v133
  %v139 = vadd.f32 %v119, %v133
  %v140 = vadd.f32 %v120, %v133
  %v141 = vadd.f32 %v121, %v133
  %v142 = vadd.f32 %v122, %v133
  %v143 = vadd.f32 %v123, %v133
  %v144 = vadd.f32 %v124, %v133
  %v145 = vadd.f32 %v125, %v133
  %v146 = vadd.f32 %v126, %v133
  %v147 = vadd.f32 %v127, %v133
  %v148 = vadd.f32 %v128, %v133
  %v149 = vadd.f32 %v129, %v133
  %v150 = vadd.f32 %v130, %v133
  %v151 = vmax.f32 %v135, 0.0
  %v152 = vmax.f32 %v136, 0.0
  %v153 = vmax.f32 %v137, 0.0
  %v154 = vmax.f32 %v138, 0.0
  %v155 = vmax.f32 %v139, 0.0
  %v156 = vmax.f32 %v140, 0.0
  %v157 = vmax.f32 %v141, 0.0
  %v158 = vmax.f32 %v142, 0.0
  %v159 = vmax.f32 %v143, 0.0
  %v160 = vmax.f32 %v144, 0.0
  %v161 = vmax.f32 %v145, 0.0
  %v162 = vmax.f32 %v146, 0.0
  %v163 = vmax.f32 %v147, 0.0
  %v164 = vmax.f32 %v148, 0.0
  %v165 = vmax.f32 %v149, 0.0
  %v166 = vmax.f32 %v150, 0.0
  %167 = vst [vmem:[%s6] sm:$0xff] %v151
  %168 = vst [vmem:[%s6 + $0x8] sm:$0xff] %v152
  %169 = vst [vmem:[%s6 + $0x10] sm:$0xff] %v153
  %170 = vst [vmem:[%s6 + $0x18] sm:$0xff] %v154
  %171 = vst [vmem:[%s6 + $0x20] sm:$0xff] %v155
  %172 = vst [vmem:[%s6 + $0x28] sm:$0xff] %v156
  %173 = vst [vmem:[%s6 + $0x30] sm:$0xff] %v157
  %174 = vst [vmem:[%s6 + $0x38] sm:$0xff] %v158
  %175 = vst [vmem:[%s6 + $0x40] sm:$0xff] %v159
  %176 = vst [vmem:[%s6 + $0x48] sm:$0xff] %v160
  %177 = vst [vmem:[%s6 + $0x50] sm:$0xff] %v161
  %178 = vst [vmem:[%s6 + $0x58] sm:$0xff] %v162
  %179 = vst [vmem:[%s6 + $0x60] sm:$0xff] %v163
  %180 = vst [vmem:[%s6 + $0x68] sm:$0xff] %v164
  %181 = vst [vmem:[%s6 + $0x70] sm:$0xff] %v165
  %182 = vst [vmem:[%s6 + $0x78] sm:$0xff] %v166
  // Predicated region
  $region26: #{basic_block_forward.5} parent=0 // pred_check
    _
  $region27: #{basic_block_forward.5} parent=0 // pred_check_branch
    %184 = sbr.rel (0) target = $region29
  $region28: #{basic_block_forward.5} parent=0 // pred_region
    _
  $region29: #{basic_block_forward.5} parent=0 // pred_fallthru
    _
  // Predicated region
  $region30: #{basic_block_forward.5} parent=0 // pred_check
    _
  $region31: #{basic_block_forward.5} parent=0 // pred_check_branch
    %186 = sbr.rel (0) target = $region33
  $region32: #{basic_block_forward.5} parent=0 // pred_region
    _
  $region33: #{basic_block_forward.5} parent=0 // pred_fallthru
    _

// kernel: basic_block_forward.3
$region0: #{basic_block_forward.3}
  #allocation0 [shape = 'u32[]', space=smem, size = 0x4, offset = 0x4, fixed_abs, tag = 'smem constant byte address 0x4 - core index']
  #allocation1 [shape = 'u32[72,128]{1,0:T(1,128)}', space=vmem, size = 0x9000, scoped, tag = 'internal scratch']
  %s0 = inlined_call_operand.vmem [shape: bf16[8,9,9,4], index: 0, kind: input, shape index: {}]
  %s1 = inlined_call_operand.vmem [shape: bf16[9,4,128], index: 1, kind: input, shape index: {}]
  %s2 = inlined_call_operand.vmem [shape: f32[2,64,128], index: 2, kind: output, shape index: {0}]
  %s3 = inlined_call_operand.vmem [shape: f32[2,2,128], index: 3, kind: output, shape index: {1}]
  %4 = xla_tuple %s2, %s3
  %s5 = sld [smem:[#allocation0]]
  $region49: #{basic_block_forward.3} parent=0
    _
  %s7 = ssub.s32 1, %s5
  %s8 = scalar_select 0, %s7, %s5
  loop: start=0, step=1, limit=4
  $region2: #{basic_block_forward.3} parent=0 // loop_pre_header
    _
  $region3: #{basic_block_forward.3} parent=0 // loop_header
    %s10 = sphi 0, %s14
    %p11 = scmp.ge.s32.totalorder %s10, 4
    %s20 = sphi 0, %s22
    %s23 = sphi 0, %s20
    %s24 = sphi 0, %s23
    %s40 = sphi 0, %s24
    %s44 = sphi 0, %s44
    %s46 = sphi 0, %s44
    %s47 = sphi 0, %s46
    %s61 = sphi 0, %s47
    %s67 = sphi 0, %s69
    %s70 = sphi 0, %s67
    %s71 = sphi 0, %s70
    %s87 = sphi 0, %s71
    %s93 = sphi 0, %s95
    %s96 = sphi 0, %s93
    %s97 = sphi 0, %s96
    %s113 = sphi 0, %s97
  $region4: #{basic_block_forward.3} parent=0 // loop_header_branch
    %13 = sbr.rel (%p11) target = $region8
  $region5: #{basic_block_forward.3} parent=0 // loop_body
    %s15 = ssub.s32 %s10, 1
    %s16 = ssub.s32 %s10, 2
    %s17 = sadd.s32 %s10, 1
    %s18 = ssub.s32 %s10, %s17
    %p19 = scmp.eq.s32.totalorder %s18, 0
    %s21 = sadd.s32 %s20, 1
    %s22 = scalar_select %p19, %s20, %s21
    %p25 = pneg %p19
    %p26 = scmp.eq.s32.totalorder %s10, 1
    %p27 = por %p25, %p26
    %p28 = scmp.ne.s32.totalorder %s20, %s23
    %p29 = scmp.eq.s32.totalorder %s10, 0
    %p30 = por %p28, %p29
    %p31 = scmp.ne.s32.totalorder %s20, %s23
    %p32 = scmp.eq.s32.totalorder %s15, 1
    %p33 = por %p31, %p32
    %p34 = scmp.ne.s32.totalorder %s23, %s24
    %p35 = scmp.eq.s32.totalorder %s15, 0
    %p36 = por %p34, %p35
    %p37 = scmp.ne.s32.totalorder %s23, %s24
    %p38 = scmp.eq.s32.totalorder %s16, 1
    %p39 = por %p37, %p38
    %p41 = scmp.ne.s32.totalorder %s24, %s40
    %p42 = scmp.eq.s32.totalorder %s16, 0
    %p43 = por %p41, %p42
    %s45 = sadd.s32 %s44, 1
    %p48 = scmp.eq.s32.totalorder %s10, 1
    %p49 = scmp.ne.s32.totalorder %s44, %s46
    %p50 = scmp.eq.s32.totalorder %s10, 0
    %p51 = por %p49, %p50
    %p52 = scmp.ne.s32.totalorder %s44, %s46
    %p53 = scmp.eq.s32.totalorder %s15, 1
    %p54 = por %p52, %p53
    %p55 = scmp.ne.s32.totalorder %s46, %s47
    %p56 = scmp.eq.s32.totalorder %s15, 0
    %p57 = por %p55, %p56
    %p58 = scmp.ne.s32.totalorder %s46, %s47
    %p59 = scmp.eq.s32.totalorder %s16, 1
    %p60 = por %p58, %p59
    %p62 = scmp.ne.s32.totalorder %s47, %s61
    %p63 = scmp.eq.s32.totalorder %s16, 0
    %p64 = por %p62, %p63
    %s65 = ssub.s32 %s10, %s17
    %p66 = scmp.eq.s32.totalorder %s65, 0
    %s68 = sadd.s32 %s67, 1
    %s69 = scalar_select %p66, %s67, %s68
    %p72 = pneg %p66
    %p73 = scmp.eq.s32.totalorder %s10, 1
    %p74 = por %p72, %p73
    %p75 = scmp.ne.s32.totalorder %s67, %s70
    %p76 = scmp.eq.s32.totalorder %s10, 0
    %p77 = por %p75, %p76
    %p78 = scmp.ne.s32.totalorder %s67, %s70
    %p79 = scmp.eq.s32.totalorder %s15, 1
    %p80 = por %p78, %p79
    %p81 = scmp.ne.s32.totalorder %s70, %s71
    %p82 = scmp.eq.s32.totalorder %s15, 0
    %p83 = por %p81, %p82
    %p84 = scmp.ne.s32.totalorder %s70, %s71
    %p85 = scmp.eq.s32.totalorder %s16, 1
    %p86 = por %p84, %p85
    %p88 = scmp.ne.s32.totalorder %s71, %s87
    %p89 = scmp.eq.s32.totalorder %s16, 0
    %p90 = por %p88, %p89
    %s91 = ssub.s32 %s10, %s17
    %p92 = scmp.eq.s32.totalorder %s91, 0
    %s94 = sadd.s32 %s93, 1
    %s95 = scalar_select %p92, %s93, %s94
    %p98 = pneg %p92
    %p99 = scmp.eq.s32.totalorder %s10, 1
    %p100 = por %p98, %p99
    %p101 = scmp.ne.s32.totalorder %s93, %s96
    %p102 = scmp.eq.s32.totalorder %s10, 0
    %p103 = por %p101, %p102
    %p104 = scmp.ne.s32.totalorder %s93, %s96
    %p105 = scmp.eq.s32.totalorder %s15, 1
    %p106 = por %p104, %p105
    %p107 = scmp.ne.s32.totalorder %s96, %s97
    %p108 = scmp.eq.s32.totalorder %s15, 0
    %p109 = por %p107, %p108
    %p110 = scmp.ne.s32.totalorder %s96, %s97
    %p111 = scmp.eq.s32.totalorder %s16, 1
    %p112 = por %p110, %p111
    %p114 = scmp.ne.s32.totalorder %s97, %s113
    %p115 = scmp.eq.s32.totalorder %s16, 0
    %p116 = por %p114, %p115
    %p117 = scmp.le.s32.totalorder 1, %s10
    %p118 = scmp.lt.s32.totalorder %s10, 3
    %p119 = pnand %p117, %p118
    %p120 = pneg %p119
    // Predicated region
    $region9: #{basic_block_forward.3} parent=5 // pred_check
      _
    $region10: #{basic_block_forward.3} parent=5 // pred_check_branch
      %122 = sbr.rel (%p119) target = $region12
    $region11: #{basic_block_forward.3} parent=5 // pred_region
      %s123 = ssub.s32 %s10, 1
      // Predicated region
      $region13: #{basic_block_forward.3} parent=11 // pred_check
        %p124 = pneg %p57
      $region14: #{basic_block_forward.3} parent=11 // pred_check_branch
        %126 = sbr.rel (%p124) target = $region16
      $region15: #{basic_block_forward.3} parent=11 // pred_region
        _
      $region16: #{basic_block_forward.3} parent=11 // pred_fallthru
        _
    $region12: #{basic_block_forward.3} parent=5 // pred_fallthru
      _
    %p127 = scmp.lt.s32.totalorder %s10, 2
    // Predicated region
    $region17: #{basic_block_forward.3} parent=5 // pred_check
      %p128 = pneg %p127
    $region18: #{basic_block_forward.3} parent=5 // pred_check_branch
      %130 = sbr.rel (%p128) target = $region20
    $region19: #{basic_block_forward.3} parent=5 // pred_region
      // Predicated region
      $region21: #{basic_block_forward.3} parent=19 // pred_check
        %p131 = pneg %p30
      $region22: #{basic_block_forward.3} parent=19 // pred_check_branch
        %133 = sbr.rel (%p131) target = $region24
      $region23: #{basic_block_forward.3} parent=19 // pred_region
        %s134 = smul.u32 4, %s10
        %p135 = scmp.lt.s32.totalorder %s134, 7
        %s136 = scalar_select %p135, %s134, 7
        %s137 = smul.addr %s136, 18
        %s138 = smul.addr %s137, 4
        %s139 = scalar_lea.vmem %s0, %s138
        %s140 = smul.u32 4, %s10
      $region24: #{basic_block_forward.3} parent=19 // pred_fallthru
        _
    $region20: #{basic_block_forward.3} parent=5 // pred_fallthru
      _
    %p141 = scmp.le.s32.totalorder 1, %s10
    %p142 = scmp.lt.s32.totalorder %s10, 3
    %p143 = pnand %p141, %p142
    %p144 = pneg %p143
    // Predicated region
    $region25: #{basic_block_forward.3} parent=5 // pred_check
      _
    $region26: #{basic_block_forward.3} parent=5 // pred_check_branch
      %146 = sbr.rel (%p143) target = $region28
    $region27: #{basic_block_forward.3} parent=5 // pred_region
      %s147 = ssub.s32 %s10, 1
      %s148 = smul.u32 4, %s15
      %p149 = scmp.lt.s32.totalorder %s148, 7
      %s150 = scalar_select %p149, %s148, 7
      %s151 = smul.addr %s150, 18
      %s152 = smul.addr %s151, 4
      %s153 = scalar_lea.vmem %s0, %s152
      %p154 = pneg %p36
      %p155 = pneg %p33
      %p156 = pneg %p57
      %p157 = pneg %p54
      %p158 = pneg %p83
      %p159 = pneg %p80
      %p160 = scmp.lt.s32.totalorder %s15, 1
      %s161 = scalar_select %p160, %s15, 1
      %s162 = smul.addr %s161, 8
      %s163 = smul.addr %s162, 8
      %s164 = scalar_lea.vmem %s2, %s163
      %p165 = pneg %p109
      %p166 = pneg %p106
      %p167 = scmp.lt.s32.totalorder %s15, 1
      %s168 = scalar_select %p167, %s15, 1
      %s169 = smul.addr %s168, 2
      %s170 = scalar_lea.vmem %s3, %s169
      %s171 = smul.u32 4, %s15
      %p172 = scmp.lt.s32.totalorder %s171, 7
      %s173 = scalar_select %p172, %s171, 7
      %s174 = smul.addr %s173, 18
      %s175 = smul.addr %s174, 4
      %s176 = scalar_lea.vmem %s0, %s175
      %s177 = smul.u32 4, %s15
      %p178 = scmp.lt.s32.totalorder %s15, 1
      %s179 = scalar_select %p178, %s15, 1
      %s180 = smul.addr %s179, 8
      %s181 = smul.addr %s180, 8
      %s182 = scalar_lea.vmem %s2, %s181
      %p183 = scmp.lt.s32.totalorder %s15, 1
      %s184 = scalar_select %p183, %s15, 1
      %s185 = smul.addr %s184, 2
      %s186 = scalar_lea.vmem %s3, %s185
      %v188 = vld [vmem:[%s176] sm:$0xf]
      %v189 = vld [vmem:[%s176 + $0x8] sm:$0xf]
      %v190 = vld [vmem:[%s176 + $0x10] sm:$0xf]
      %v191 = vld [vmem:[%s176 + $0x18] sm:$0xf]
      %v192 = vld [vmem:[%s176 + $0x20] sm:$0xf]
      %v193 = vld [vmem:[%s176 + $0x28] sm:$0xf]
      %v194 = vld [vmem:[%s176 + $0x30] sm:$0xf]
      %v195 = vld [vmem:[%s176 + $0x38] sm:$0xf]
      %v196 = vld [vmem:[%s1] sm:$0x3]
      %s197 = scalar_lea.vmem %s176, 72
      %v198 = vld [vmem:[%s197] sm:$0xf]
      %v199 = vld [vmem:[%s197 + $0x8] sm:$0xf]
      %v200 = vld [vmem:[%s197 + $0x10] sm:$0xf]
      %v201 = vld [vmem:[%s197 + $0x18] sm:$0xf]
      %v202 = vld [vmem:[%s197 + $0x20] sm:$0xf]
      %v203 = vld [vmem:[%s197 + $0x28] sm:$0xf]
      %v204 = vld [vmem:[%s197 + $0x30] sm:$0xf]
      %v205 = vld [vmem:[%s197 + $0x38] sm:$0xf]
      %s206 = scalar_lea.vmem %s1, 2
      %v207 = vld [vmem:[%s206] sm:$0x3]
      %v216 = vunpack.c.l.b16 %v198
      %v217 = vunpack.c.l.b16 %v199
      %v218 = vunpack.c.l.b16 %v200
      %v219 = vunpack.c.l.b16 %v201
      %v220 = vunpack.c.l.b16 %v202
      %v221 = vunpack.c.l.b16 %v203
      %v222 = vunpack.c.l.b16 %v204
      %v223 = vunpack.c.l.b16 %v205
      %v224 = vpack.c.b16 %v217, %v216
      %v225 = vpack.c.b16 %v219, %v218
      %v226 = vpack.c.b16 %v221, %v220
      %v227 = vpack.c.b16 %v223, %v222
      %vm228 = vcmask 31744
      %v230 = vsel %vm228, %v224, 0
      %v233 = vsel %vm228, %v225, 0
      %v236 = vsel %vm228, %v226, 0
      %v239 = vsel %vm228, %v227, 0
      %vm241 = vcmask 1041408
      %v243 = vsel %vm241, %v207, 0
      %245 = vmatpush.bf16.msra.mxu0 0
      %246 = vmatpush.bf16.msra.mxu0 0
      %247 = vmatpush.bf16.msra.mxu0 0
      %248 = vmatpush.bf16.msra.mxu0 0
      %249 = vmatpush.bf16.msra.mxu0 0
      %250 = vmatpush.bf16.msra.mxu0 0
      %251 = vmatpush.bf16.msra.mxu0 0
      %252 = vmatpush.bf16.msra.mxu0 %v243
      %253 = vmatmul.bf16.gmra.mxu0 %v230
      %v254 = vpop.f32.mrf.mxu0
      %v255 = vadd.f32 0.0, %v254
      %v256 = vpop.f32.mrf.mxu0
      %v257 = vadd.f32 0.0, %v256
      %258 = vmatmul.bf16.gmra.mxu0 %v233
      %v259 = vpop.f32.mrf.mxu0
      %v260 = vadd.f32 0.0, %v259
      %v261 = vpop.f32.mrf.mxu0
      %v262 = vadd.f32 0.0, %v261
      %263 = vmatmul.bf16.gmra.mxu0 %v236
      %v264 = vpop.f32.mrf.mxu0
      %v265 = vadd.f32 0.0, %v264
      %v266 = vpop.f32.mrf.mxu0
      %v267 = vadd.f32 0.0, %v266
      %268 = vmatmul.bf16.gmra.mxu0 %v239
      %v269 = vpop.f32.mrf.mxu0
      %v270 = vadd.f32 0.0, %v269
      %v271 = vpop.f32.mrf.mxu0
      %v272 = vadd.f32 0.0, %v271
      %273 = vdwg.mxu0
      %v282 = vunpack.c.l.b16 %v188
      %v283 = vunpack.c.l.b16 %v189
      %v284 = vunpack.c.l.b16 %v190
      %v285 = vunpack.c.l.b16 %v191
      %v286 = vunpack.c.l.b16 %v192
      %v287 = vunpack.c.l.b16 %v193
      %v288 = vunpack.c.l.b16 %v194
      %v289 = vunpack.c.l.b16 %v195
      %v290 = vpack.c.b16 %v283, %v282
      %v291 = vpack.c.b16 %v285, %v284
      %v292 = vpack.c.b16 %v287, %v286
      %v293 = vpack.c.b16 %v289, %v288
      %v295 = vsel %vm228, %v290, 0
      %v298 = vsel %vm228, %v291, 0
      %v301 = vsel %vm228, %v292, 0
      %v304 = vsel %vm228, %v293, 0
      %v307 = vsel %vm241, %v196, 0
      %309 = vmatpush.bf16.msra.mxu0 0
      %310 = vmatpush.bf16.msra.mxu0 0
      %311 = vmatpush.bf16.msra.mxu0 0
      %312 = vmatpush.bf16.msra.mxu0 0
      %313 = vmatpush.bf16.msra.mxu0 0
      %314 = vmatpush.bf16.msra.mxu0 0
      %315 = vmatpush.bf16.msra.mxu0 0
      %316 = vmatpush.bf16.msra.mxu0 %v307
      %317 = vmatmul.bf16.gmra.mxu0 %v295
      %v318 = vpop.f32.mrf.mxu0
      %v319 = vadd.f32 %v255, %v318
      %v320 = vpop.f32.mrf.mxu0
      %v321 = vadd.f32 %v257, %v320
      %322 = vmatmul.bf16.gmra.mxu0 %v298
      %v323 = vpop.f32.mrf.mxu0
      %v324 = vadd.f32 %v260, %v323
      %v325 = vpop.f32.mrf.mxu0
      %v326 = vadd.f32 %v262, %v325
      %327 = vmatmul.bf16.gmra.mxu0 %v301
      %v328 = vpop.f32.mrf.mxu0
      %v329 = vadd.f32 %v265, %v328
      %v330 = vpop.f32.mrf.mxu0
      %v331 = vadd.f32 %v267, %v330
      %332 = vmatmul.bf16.gmra.mxu0 %v304
      %v333 = vpop.f32.mrf.mxu0
      %v334 = vadd.f32 %v270, %v333
      %v335 = vpop.f32.mrf.mxu0
      %v336 = vadd.f32 %v272, %v335
      %337 = vdwg.mxu0
      %v338 = vld [vmem:[%s176] sm:$0xf]
      %v339 = vld [vmem:[%s176 + $0x4] sm:$0x1]
      %v340 = vld [vmem:[%s176 + $0x8] sm:$0xf]
      %v341 = vld [vmem:[%s176 + $0xc] sm:$0x1]
      %v342 = vld [vmem:[%s176 + $0x10] sm:$0xf]
      %v343 = vld [vmem:[%s176 + $0x14] sm:$0x1]
      %v344 = vld [vmem:[%s176 + $0x18] sm:$0xf]
      %v345 = vld [vmem:[%s176 + $0x1c] sm:$0x1]
      %v346 = vld [vmem:[%s176 + $0x20] sm:$0xf]
      %v347 = vld [vmem:[%s176 + $0x24] sm:$0x1]
      %v348 = vld [vmem:[%s176 + $0x28] sm:$0xf]
      %v349 = vld [vmem:[%s176 + $0x2c] sm:$0x1]
      %v350 = vld [vmem:[%s176 + $0x30] sm:$0xf]
      %v351 = vld [vmem:[%s176 + $0x34] sm:$0x1]
      %v352 = vld [vmem:[%s176 + $0x38] sm:$0xf]
      %v353 = vld [vmem:[%s176 + $0x3c] sm:$0x1]
      %vm354 = vsmask.f32 3328
      %vm355 = vsmask.f32 7440
      %vm356 = vmor %vm354, %vm355
      %v358 = vshrl.u32 %v338, 16
      %v360 = vrot.slane %v358, 4
      %v361 = vshll.u32 %v338, 16
      %v363 = vrot.slane %v361, 5
      %v364 = vor.u32 %v360, %v363
      %v365 = vrot.slane %v364, 4
      %v367 = vshll.u32 %v339, 16
      %v369 = vrot.slane %v367, 5
      %v370 = vsel %vm356, %v365, %v369
      %v372 = vshrl.u32 %v340, 16
      %v374 = vrot.slane %v372, 4
      %v375 = vshll.u32 %v340, 16
      %v377 = vrot.slane %v375, 5
      %v378 = vor.u32 %v374, %v377
      %v379 = vrot.slane %v378, 4
      %v381 = vshll.u32 %v341, 16
      %v383 = vrot.slane %v381, 5
      %v384 = vsel %vm356, %v379, %v383
      %v386 = vshrl.u32 %v342, 16
      %v388 = vrot.slane %v386, 4
      %v389 = vshll.u32 %v342, 16
      %v391 = vrot.slane %v389, 5
      %v392 = vor.u32 %v388, %v391
      %v393 = vrot.slane %v392, 4
      %v395 = vshll.u32 %v343, 16
      %v397 = vrot.slane %v395, 5
      %v398 = vsel %vm356, %v393, %v397
      %v400 = vshrl.u32 %v344, 16
      %v402 = vrot.slane %v400, 4
      %v403 = vshll.u32 %v344, 16
      %v405 = vrot.slane %v403, 5
      %v406 = vor.u32 %v402, %v405
      %v407 = vrot.slane %v406, 4
      %v409 = vshll.u32 %v345, 16
      %v411 = vrot.slane %v409, 5
      %v412 = vsel %vm356, %v407, %v411
      %v414 = vshrl.u32 %v346, 16
      %v416 = vrot.slane %v414, 4
      %v417 = vshll.u32 %v346, 16
      %v419 = vrot.slane %v417, 5
      %v420 = vor.u32 %v416, %v419
      %v421 = vrot.slane %v420, 4
      %v423 = vshll.u32 %v347, 16
      %v425 = vrot.slane %v423, 5
      %v426 = vsel %vm356, %v421, %v425
      %v428 = vshrl.u32 %v348, 16
      %v430 = vrot.slane %v428, 4
      %v431 = vshll.u32 %v348, 16
      %v433 = vrot.slane %v431, 5
      %v434 = vor.u32 %v430, %v433
      %v435 = vrot.slane %v434, 4
      %v437 = vshll.u32 %v349, 16
      %v439 = vrot.slane %v437, 5
      %v440 = vsel %vm356, %v435, %v439
      %v442 = vshrl.u32 %v350, 16
      %v444 = vrot.slane %v442, 4
      %v445 = vshll.u32 %v350, 16
      %v447 = vrot.slane %v445, 5
      %v448 = vor.u32 %v444, %v447
      %v449 = vrot.slane %v448, 4
      %v451 = vshll.u32 %v351, 16
      %v453 = vrot.slane %v451, 5
      %v454 = vsel %vm356, %v449, %v453
      %v456 = vshrl.u32 %v352, 16
      %v458 = vrot.slane %v456, 4
      %v459 = vshll.u32 %v352, 16
      %v461 = vrot.slane %v459, 5
      %v462 = vor.u32 %v458, %v461
      %v463 = vrot.slane %v462, 4
      %v465 = vshll.u32 %v353, 16
      %v467 = vrot.slane %v465, 5
      %v468 = vsel %vm356, %v463, %v467
      %s469 = scalar_lea.vmem %s1, 4
      %v470 = vld [vmem:[%s469] sm:$0x3]
      %v471 = vunpack.c.l.b16 %v370
      %v472 = vunpack.c.l.b16 %v384
      %v473 = vunpack.c.l.b16 %v398
      %v474 = vunpack.c.l.b16 %v412
      %v475 = vunpack.c.l.b16 %v426
      %v476 = vunpack.c.l.b16 %v440
      %v477 = vunpack.c.l.b16 %v454
      %v478 = vunpack.c.l.b16 %v468
      %v479 = vpack.c.b16 %v472, %v471
      %v480 = vpack.c.b16 %v474, %v473
      %v481 = vpack.c.b16 %v476, %v475
      %v482 = vpack.c.b16 %v478, %v477
      %v484 = vsel %vm228, %v479, 0
      %v487 = vsel %vm228, %v480, 0
      %v490 = vsel %vm228, %v481, 0
      %v493 = vsel %vm228, %v482, 0
      %v496 = vsel %vm241, %v470, 0
      %498 = vmatpush.bf16.msra.mxu0 0
      %499 = vmatpush.bf16.msra.mxu0 0
      %500 = vmatpush.bf16.msra.mxu0 0
      %501 = vmatpush.bf16.msra.mxu0 0
      %502 = vmatpush.bf16.msra.mxu0 0
      %503 = vmatpush.bf16.msra.mxu0 0
      %504 = vmatpush.bf16.msra.mxu0 0
      %505 = vmatpush.bf16.msra.mxu0 %v496
      %506 = vmatmul.bf16.gmra.mxu0 %v484
      %v507 = vpop.f32.mrf.mxu0
      %v508 = vadd.f32 0.0, %v507
      %v509 = vpop.f32.mrf.mxu0
      %v510 = vadd.f32 0.0, %v509
      %511 = vmatmul.bf16.gmra.mxu0 %v487
      %v512 = vpop.f32.mrf.mxu0
      %v513 = vadd.f32 0.0, %v512
      %v514 = vpop.f32.mrf.mxu0
      %v515 = vadd.f32 0.0, %v514
      %516 = vmatmul.bf16.gmra.mxu0 %v490
      %v517 = vpop.f32.mrf.mxu0
      %v518 = vadd.f32 0.0, %v517
      %v519 = vpop.f32.mrf.mxu0
      %v520 = vadd.f32 0.0, %v519
      %521 = vmatmul.bf16.gmra.mxu0 %v493
      %v522 = vpop.f32.mrf.mxu0
      %v523 = vadd.f32 0.0, %v522
      %v524 = vpop.f32.mrf.mxu0
      %v525 = vadd.f32 0.0, %v524
      %526 = vdwg.mxu0
      %v527 = vadd.f32 %v319, %v508
      %v528 = vadd.f32 %v321, %v510
      %v529 = vadd.f32 %v324, %v513
      %v530 = vadd.f32 %v326, %v515
      %v531 = vadd.f32 %v329, %v518
      %v532 = vadd.f32 %v331, %v520
      %v533 = vadd.f32 %v334, %v523
      %v534 = vadd.f32 %v336, %v525
      %s535 = scalar_lea.vmem %s176, 144
      %v536 = vld [vmem:[%s535] sm:$0xf]
      %v537 = vld [vmem:[%s535 + $0x8] sm:$0xf]
      %v538 = vld [vmem:[%s535 + $0x10] sm:$0xf]
      %v539 = vld [vmem:[%s535 + $0x18] sm:$0xf]
      %v540 = vld [vmem:[%s535 + $0x20] sm:$0xf]
      %v541 = vld [vmem:[%s535 + $0x28] sm:$0xf]
      %v542 = vld [vmem:[%s535 + $0x30] sm:$0xf]
      %v543 = vld [vmem:[%s535 + $0x38] sm:$0xf]
      %s544 = scalar_lea.vmem %s1, 6
      %v545 = vld [vmem:[%s544] sm:$0x3]
      %v554 = vunpack.c.l.b16 %v536
      %v555 = vunpack.c.l.b16 %v537
      %v556 = vunpack.c.l.b16 %v538
      %v557 = vunpack.c.l.b16 %v539
      %v558 = vunpack.c.l.b16 %v540
      %v559 = vunpack.c.l.b16 %v541
      %v560 = vunpack.c.l.b16 %v542
      %v561 = vunpack.c.l.b16 %v543
      %v562 = vpack.c.b16 %v555, %v554
      %v563 = vpack.c.b16 %v557, %v556
      %v564 = vpack.c.b16 %v559, %v558
      %v565 = vpack.c.b16 %v561, %v560
      %v567 = vsel %vm228, %v562, 0
      %v570 = vsel %vm228, %v563, 0
      %v573 = vsel %vm228, %v564, 0
      %v576 = vsel %vm228, %v565, 0
      %v579 = vsel %vm241, %v545, 0
      %581 = vmatpush.bf16.msra.mxu0 0
      %582 = vmatpush.bf16.msra.mxu0 0
      %583 = vmatpush.bf16.msra.mxu0 0
      %584 = vmatpush.bf16.msra.mxu0 0
      %585 = vmatpush.bf16.msra.mxu0 0
      %586 = vmatpush.bf16.msra.mxu0 0
      %587 = vmatpush.bf16.msra.mxu0 0
      %588 = vmatpush.bf16.msra.mxu0 %v579
      %589 = vmatmul.bf16.gmra.mxu0 %v567
      %v590 = vpop.f32.mrf.mxu0
      %v591 = vadd.f32 0.0, %v590
      %v592 = vpop.f32.mrf.mxu0
      %v593 = vadd.f32 0.0, %v592
      %594 = vmatmul.bf16.gmra.mxu0 %v570
      %v595 = vpop.f32.mrf.mxu0
      %v596 = vadd.f32 0.0, %v595
      %v597 = vpop.f32.mrf.mxu0
      %v598 = vadd.f32 0.0, %v597
      %599 = vmatmul.bf16.gmra.mxu0 %v573
      %v600 = vpop.f32.mrf.mxu0
      %v601 = vadd.f32 0.0, %v600
      %v602 = vpop.f32.mrf.mxu0
      %v603 = vadd.f32 0.0, %v602
      %604 = vmatmul.bf16.gmra.mxu0 %v576
      %v605 = vpop.f32.mrf.mxu0
      %v606 = vadd.f32 0.0, %v605
      %v607 = vpop.f32.mrf.mxu0
      %v608 = vadd.f32 0.0, %v607
      %609 = vdwg.mxu0
      %v610 = vadd.f32 %v527, %v591
      %v611 = vadd.f32 %v528, %v593
      %v612 = vadd.f32 %v529, %v596
      %v613 = vadd.f32 %v530, %v598
      %v614 = vadd.f32 %v531, %v601
      %v615 = vadd.f32 %v532, %v603
      %v616 = vadd.f32 %v533, %v606
      %v617 = vadd.f32 %v534, %v608
      %s618 = scalar_lea.vmem %s176, 216
      %v619 = vld [vmem:[%s618] sm:$0xf]
      %v620 = vld [vmem:[%s618 + $0x8] sm:$0xf]
      %v621 = vld [vmem:[%s618 + $0x10] sm:$0xf]
      %v622 = vld [vmem:[%s618 + $0x18] sm:$0xf]
      %v623 = vld [vmem:[%s618 + $0x20] sm:$0xf]
      %v624 = vld [vmem:[%s618 + $0x28] sm:$0xf]
      %v625 = vld [vmem:[%s618 + $0x30] sm:$0xf]
      %v626 = vld [vmem:[%s618 + $0x38] sm:$0xf]
      %s627 = scalar_lea.vmem %s1, 8
      %v628 = vld [vmem:[%s627] sm:$0x3]
      %v637 = vunpack.c.l.b16 %v619
      %v638 = vunpack.c.l.b16 %v620
      %v639 = vunpack.c.l.b16 %v621
      %v640 = vunpack.c.l.b16 %v622
      %v641 = vunpack.c.l.b16 %v623
      %v642 = vunpack.c.l.b16 %v624
      %v643 = vunpack.c.l.b16 %v625
      %v644 = vunpack.c.l.b16 %v626
      %v645 = vpack.c.b16 %v638, %v637
      %v646 = vpack.c.b16 %v640, %v639
      %v647 = vpack.c.b16 %v642, %v641
      %v648 = vpack.c.b16 %v644, %v643
      %v650 = vsel %vm228, %v645, 0
      %v653 = vsel %vm228, %v646, 0
      %v656 = vsel %vm228, %v647, 0
      %v659 = vsel %vm228, %v648, 0
      %v662 = vsel %vm241, %v628, 0
      %664 = vmatpush.bf16.msra.mxu0 0
      %665 = vmatpush.bf16.msra.mxu0 0
      %666 = vmatpush.bf16.msra.mxu0 0
      %667 = vmatpush.bf16.msra.mxu0 0
      %668 = vmatpush.bf16.msra.mxu0 0
      %669 = vmatpush.bf16.msra.mxu0 0
      %670 = vmatpush.bf16.msra.mxu0 0
      %671 = vmatpush.bf16.msra.mxu0 %v662
      %672 = vmatmul.bf16.gmra.mxu0 %v650
      %v673 = vpop.f32.mrf.mxu0
      %v674 = vadd.f32 0.0, %v673
      %v675 = vpop.f32.mrf.mxu0
      %v676 = vadd.f32 0.0, %v675
      %677 = vmatmul.bf16.gmra.mxu0 %v653
      %v678 = vpop.f32.mrf.mxu0
      %v679 = vadd.f32 0.0, %v678
      %v680 = vpop.f32.mrf.mxu0
      %v681 = vadd.f32 0.0, %v680
      %682 = vmatmul.bf16.gmra.mxu0 %v656
      %v683 = vpop.f32.mrf.mxu0
      %v684 = vadd.f32 0.0, %v683
      %v685 = vpop.f32.mrf.mxu0
      %v686 = vadd.f32 0.0, %v685
      %687 = vmatmul.bf16.gmra.mxu0 %v659
      %v688 = vpop.f32.mrf.mxu0
      %v689 = vadd.f32 0.0, %v688
      %v690 = vpop.f32.mrf.mxu0
      %v691 = vadd.f32 0.0, %v690
      %692 = vdwg.mxu0
      %v693 = vadd.f32 %v610, %v674
      %v694 = vadd.f32 %v611, %v676
      %v695 = vadd.f32 %v612, %v679
      %v696 = vadd.f32 %v613, %v681
      %v697 = vadd.f32 %v614, %v684
      %v698 = vadd.f32 %v615, %v686
      %v699 = vadd.f32 %v616, %v689
      %v700 = vadd.f32 %v617, %v691
      %v701 = vld [vmem:[%s535] sm:$0xf]
      %v702 = vld [vmem:[%s535 + $0x4] sm:$0x1]
      %v703 = vld [vmem:[%s535 + $0x8] sm:$0xf]
      %v704 = vld [vmem:[%s535 + $0xc] sm:$0x1]
      %v705 = vld [vmem:[%s535 + $0x10] sm:$0xf]
      %v706 = vld [vmem:[%s535 + $0x14] sm:$0x1]
      %v707 = vld [vmem:[%s535 + $0x18] sm:$0xf]
      %v708 = vld [vmem:[%s535 + $0x1c] sm:$0x1]
      %v709 = vld [vmem:[%s535 + $0x20] sm:$0xf]
      %v710 = vld [vmem:[%s535 + $0x24] sm:$0x1]
      %v711 = vld [vmem:[%s535 + $0x28] sm:$0xf]
      %v712 = vld [vmem:[%s535 + $0x2c] sm:$0x1]
      %v713 = vld [vmem:[%s535 + $0x30] sm:$0xf]
      %v714 = vld [vmem:[%s535 + $0x34] sm:$0x1]
      %v715 = vld [vmem:[%s535 + $0x38] sm:$0xf]
      %v716 = vld [vmem:[%s535 + $0x3c] sm:$0x1]
      %v718 = vshrl.u32 %v701, 16
      %v720 = vrot.slane %v718, 4
      %v721 = vshll.u32 %v701, 16
      %v723 = vrot.slane %v721, 5
      %v724 = vor.u32 %v720, %v723
      %v725 = vrot.slane %v724, 4
      %v727 = vshll.u32 %v702, 16
      %v729 = vrot.slane %v727, 5
      %v730 = vsel %vm356, %v725, %v729
      %v732 = vshrl.u32 %v703, 16
      %v734 = vrot.slane %v732, 4
      %v735 = vshll.u32 %v703, 16
      %v737 = vrot.slane %v735, 5
      %v738 = vor.u32 %v734, %v737
      %v739 = vrot.slane %v738, 4
      %v741 = vshll.u32 %v704, 16
      %v743 = vrot.slane %v741, 5
      %v744 = vsel %vm356, %v739, %v743
      %v746 = vshrl.u32 %v705, 16
      %v748 = vrot.slane %v746, 4
      %v749 = vshll.u32 %v705, 16
      %v751 = vrot.slane %v749, 5
      %v752 = vor.u32 %v748, %v751
      %v753 = vrot.slane %v752, 4
      %v755 = vshll.u32 %v706, 16
      %v757 = vrot.slane %v755, 5
      %v758 = vsel %vm356, %v753, %v757
      %v760 = vshrl.u32 %v707, 16
      %v762 = vrot.slane %v760, 4
      %v763 = vshll.u32 %v707, 16
      %v765 = vrot.slane %v763, 5
      %v766 = vor.u32 %v762, %v765
      %v767 = vrot.slane %v766, 4
      %v769 = vshll.u32 %v708, 16
      %v771 = vrot.slane %v769, 5
      %v772 = vsel %vm356, %v767, %v771
      %v774 = vshrl.u32 %v709, 16
      %v776 = vrot.slane %v774, 4
      %v777 = vshll.u32 %v709, 16
      %v779 = vrot.slane %v777, 5
      %v780 = vor.u32 %v776, %v779
      %v781 = vrot.slane %v780, 4
      %v783 = vshll.u32 %v710, 16
      %v785 = vrot.slane %v783, 5
      %v786 = vsel %vm356, %v781, %v785
      %v788 = vshrl.u32 %v711, 16
      %v790 = vrot.slane %v788, 4
      %v791 = vshll.u32 %v711, 16
      %v793 = vrot.slane %v791, 5
      %v794 = vor.u32 %v790, %v793
      %v795 = vrot.slane %v794, 4
      %v797 = vshll.u32 %v712, 16
      %v799 = vrot.slane %v797, 5
      %v800 = vsel %vm356, %v795, %v799
      %v802 = vshrl.u32 %v713, 16
      %v804 = vrot.slane %v802, 4
      %v805 = vshll.u32 %v713, 16
      %v807 = vrot.slane %v805, 5
      %v808 = vor.u32 %v804, %v807
      %v809 = vrot.slane %v808, 4
      %v811 = vshll.u32 %v714, 16
      %v813 = vrot.slane %v811, 5
      %v814 = vsel %vm356, %v809, %v813
      %v816 = vshrl.u32 %v715, 16
      %v818 = vrot.slane %v816, 4
      %v819 = vshll.u32 %v715, 16
      %v821 = vrot.slane %v819, 5
      %v822 = vor.u32 %v818, %v821
      %v823 = vrot.slane %v822, 4
      %v825 = vshll.u32 %v716, 16
      %v827 = vrot.slane %v825, 5
      %v828 = vsel %vm356, %v823, %v827
      %s829 = scalar_lea.vmem %s1, 10
      %v830 = vld [vmem:[%s829] sm:$0x3]
      %v831 = vunpack.c.l.b16 %v730
      %v832 = vunpack.c.l.b16 %v744
      %v833 = vunpack.c.l.b16 %v758
      %v834 = vunpack.c.l.b16 %v772
      %v835 = vunpack.c.l.b16 %v786
      %v836 = vunpack.c.l.b16 %v800
      %v837 = vunpack.c.l.b16 %v814
      %v838 = vunpack.c.l.b16 %v828
      %v839 = vpack.c.b16 %v832, %v831
      %v840 = vpack.c.b16 %v834, %v833
      %v841 = vpack.c.b16 %v836, %v835
      %v842 = vpack.c.b16 %v838, %v837
      %v844 = vsel %vm228, %v839, 0
      %v847 = vsel %vm228, %v840, 0
      %v850 = vsel %vm228, %v841, 0
      %v853 = vsel %vm228, %v842, 0
      %v856 = vsel %vm241, %v830, 0
      %858 = vmatpush.bf16.msra.mxu0 0
      %859 = vmatpush.bf16.msra.mxu0 0
      %860 = vmatpush.bf16.msra.mxu0 0
      %861 = vmatpush.bf16.msra.mxu0 0
      %862 = vmatpush.bf16.msra.mxu0 0
      %863 = vmatpush.bf16.msra.mxu0 0
      %864 = vmatpush.bf16.msra.mxu0 0
      %865 = vmatpush.bf16.msra.mxu0 %v856
      %866 = vmatmul.bf16.gmra.mxu0 %v844
      %v867 = vpop.f32.mrf.mxu0
      %v868 = vadd.f32 0.0, %v867
      %v869 = vpop.f32.mrf.mxu0
      %v870 = vadd.f32 0.0, %v869
      %871 = vmatmul.bf16.gmra.mxu0 %v847
      %v872 = vpop.f32.mrf.mxu0
      %v873 = vadd.f32 0.0, %v872
      %v874 = vpop.f32.mrf.mxu0
      %v875 = vadd.f32 0.0, %v874
      %876 = vmatmul.bf16.gmra.mxu0 %v850
      %v877 = vpop.f32.mrf.mxu0
      %v878 = vadd.f32 0.0, %v877
      %v879 = vpop.f32.mrf.mxu0
      %v880 = vadd.f32 0.0, %v879
      %881 = vmatmul.bf16.gmra.mxu0 %v853
      %v882 = vpop.f32.mrf.mxu0
      %v883 = vadd.f32 0.0, %v882
      %v884 = vpop.f32.mrf.mxu0
      %v885 = vadd.f32 0.0, %v884
      %886 = vdwg.mxu0
      %v887 = vadd.f32 %v693, %v868
      %v888 = vadd.f32 %v694, %v870
      %v889 = vadd.f32 %v695, %v873
      %v890 = vadd.f32 %v696, %v875
      %v891 = vadd.f32 %v697, %v878
      %v892 = vadd.f32 %v698, %v880
      %v893 = vadd.f32 %v699, %v883
      %v894 = vadd.f32 %v700, %v885
      %s895 = scalar_lea.vmem %s176, 8
      %v896 = vld [vmem:[%s895] sm:$0xf]
      %v897 = vld [vmem:[%s895 + $0x8] sm:$0xf]
      %v898 = vld [vmem:[%s895 + $0x10] sm:$0xf]
      %v899 = vld [vmem:[%s895 + $0x18] sm:$0xf]
      %v900 = vld [vmem:[%s895 + $0x20] sm:$0xf]
      %v901 = vld [vmem:[%s895 + $0x28] sm:$0xf]
      %v902 = vld [vmem:[%s895 + $0x30] sm:$0xf]
      %v903 = vld [vmem:[%s895 + $0x38] sm:$0xf]
      %s904 = scalar_lea.vmem %s1, 12
      %v905 = vld [vmem:[%s904] sm:$0x3]
      %v914 = vunpack.c.l.b16 %v896
      %v915 = vunpack.c.l.b16 %v897
      %v916 = vunpack.c.l.b16 %v898
      %v917 = vunpack.c.l.b16 %v899
      %v918 = vunpack.c.l.b16 %v900
      %v919 = vunpack.c.l.b16 %v901
      %v920 = vunpack.c.l.b16 %v902
      %v921 = vunpack.c.l.b16 %v903
      %v922 = vpack.c.b16 %v915, %v914
      %v923 = vpack.c.b16 %v917, %v916
      %v924 = vpack.c.b16 %v919, %v918
      %v925 = vpack.c.b16 %v921, %v920
      %v927 = vsel %vm228, %v922, 0
      %v930 = vsel %vm228, %v923, 0
      %v933 = vsel %vm228, %v924, 0
      %v936 = vsel %vm228, %v925, 0
      %v939 = vsel %vm241, %v905, 0
      %941 = vmatpush.bf16.msra.mxu0 0
      %942 = vmatpush.bf16.msra.mxu0 0
      %943 = vmatpush.bf16.msra.mxu0 0
      %944 = vmatpush.bf16.msra.mxu0 0
      %945 = vmatpush.bf16.msra.mxu0 0
      %946 = vmatpush.bf16.msra.mxu0 0
      %947 = vmatpush.bf16.msra.mxu0 0
      %948 = vmatpush.bf16.msra.mxu0 %v939
      %949 = vmatmul.bf16.gmra.mxu0 %v927
      %v950 = vpop.f32.mrf.mxu0
      %v951 = vadd.f32 0.0, %v950
      %v952 = vpop.f32.mrf.mxu0
      %v953 = vadd.f32 0.0, %v952
      %954 = vmatmul.bf16.gmra.mxu0 %v930
      %v955 = vpop.f32.mrf.mxu0
      %v956 = vadd.f32 0.0, %v955
      %v957 = vpop.f32.mrf.mxu0
      %v958 = vadd.f32 0.0, %v957
      %959 = vmatmul.bf16.gmra.mxu0 %v933
      %v960 = vpop.f32.mrf.mxu0
      %v961 = vadd.f32 0.0, %v960
      %v962 = vpop.f32.mrf.mxu0
      %v963 = vadd.f32 0.0, %v962
      %964 = vmatmul.bf16.gmra.mxu0 %v936
      %v965 = vpop.f32.mrf.mxu0
      %v966 = vadd.f32 0.0, %v965
      %v967 = vpop.f32.mrf.mxu0
      %v968 = vadd.f32 0.0, %v967
      %969 = vdwg.mxu0
      %v970 = vadd.f32 %v887, %v951
      %v971 = vadd.f32 %v888, %v953
      %v972 = vadd.f32 %v889, %v956
      %v973 = vadd.f32 %v890, %v958
      %v974 = vadd.f32 %v891, %v961
      %v975 = vadd.f32 %v892, %v963
      %v976 = vadd.f32 %v893, %v966
      %v977 = vadd.f32 %v894, %v968
      %s978 = scalar_lea.vmem %s176, 80
      %v979 = vld [vmem:[%s978] sm:$0xf]
      %v980 = vld [vmem:[%s978 + $0x8] sm:$0xf]
      %v981 = vld [vmem:[%s978 + $0x10] sm:$0xf]
      %v982 = vld [vmem:[%s978 + $0x18] sm:$0xf]
      %v983 = vld [vmem:[%s978 + $0x20] sm:$0xf]
      %v984 = vld [vmem:[%s978 + $0x28] sm:$0xf]
      %v985 = vld [vmem:[%s978 + $0x30] sm:$0xf]
      %v986 = vld [vmem:[%s978 + $0x38] sm:$0xf]
      %s987 = scalar_lea.vmem %s1, 14
      %v988 = vld [vmem:[%s987] sm:$0x3]
      %v997 = vunpack.c.l.b16 %v979
      %v998 = vunpack.c.l.b16 %v980
      %v999 = vunpack.c.l.b16 %v981
      %v1000 = vunpack.c.l.b16 %v982
      %v1001 = vunpack.c.l.b16 %v983
      %v1002 = vunpack.c.l.b16 %v984
      %v1003 = vunpack.c.l.b16 %v985
      %v1004 = vunpack.c.l.b16 %v986
      %v1005 = vpack.c.b16 %v998, %v997
      %v1006 = vpack.c.b16 %v1000, %v999
      %v1007 = vpack.c.b16 %v1002, %v1001
      %v1008 = vpack.c.b16 %v1004, %v1003
      %v1010 = vsel %vm228, %v1005, 0
      %v1013 = vsel %vm228, %v1006, 0
      %v1016 = vsel %vm228, %v1007, 0
      %v1019 = vsel %vm228, %v1008, 0
      %v1022 = vsel %vm241, %v988, 0
      %1024 = vmatpush.bf16.msra.mxu0 0
      %1025 = vmatpush.bf16.msra.mxu0 0
      %1026 = vmatpush.bf16.msra.mxu0 0
      %1027 = vmatpush.bf16.msra.mxu0 0
      %1028 = vmatpush.bf16.msra.mxu0 0
      %1029 = vmatpush.bf16.msra.mxu0 0
      %1030 = vmatpush.bf16.msra.mxu0 0
      %1031 = vmatpush.bf16.msra.mxu0 %v1022
      %1032 = vmatmul.bf16.gmra.mxu0 %v1010
      %v1033 = vpop.f32.mrf.mxu0
      %v1034 = vadd.f32 0.0, %v1033
      %v1035 = vpop.f32.mrf.mxu0
      %v1036 = vadd.f32 0.0, %v1035
      %1037 = vmatmul.bf16.gmra.mxu0 %v1013
      %v1038 = vpop.f32.mrf.mxu0
      %v1039 = vadd.f32 0.0, %v1038
      %v1040 = vpop.f32.mrf.mxu0
      %v1041 = vadd.f32 0.0, %v1040
      %1042 = vmatmul.bf16.gmra.mxu0 %v1016
      %v1043 = vpop.f32.mrf.mxu0
      %v1044 = vadd.f32 0.0, %v1043
      %v1045 = vpop.f32.mrf.mxu0
      %v1046 = vadd.f32 0.0, %v1045
      %1047 = vmatmul.bf16.gmra.mxu0 %v1019
      %v1048 = vpop.f32.mrf.mxu0
      %v1049 = vadd.f32 0.0, %v1048
      %v1050 = vpop.f32.mrf.mxu0
      %v1051 = vadd.f32 0.0, %v1050
      %1052 = vdwg.mxu0
      %v1053 = vadd.f32 %v970, %v1034
      %v1054 = vadd.f32 %v971, %v1036
      %v1055 = vadd.f32 %v972, %v1039
      %v1056 = vadd.f32 %v973, %v1041
      %v1057 = vadd.f32 %v974, %v1044
      %v1058 = vadd.f32 %v975, %v1046
      %v1059 = vadd.f32 %v976, %v1049
      %v1060 = vadd.f32 %v977, %v1051
      %v1061 = vld [vmem:[%s895] sm:$0xf]
      %v1062 = vld [vmem:[%s895 + $0x4] sm:$0x1]
      %v1063 = vld [vmem:[%s895 + $0x8] sm:$0xf]
      %v1064 = vld [vmem:[%s895 + $0xc] sm:$0x1]
      %v1065 = vld [vmem:[%s895 + $0x10] sm:$0xf]
      %v1066 = vld [vmem:[%s895 + $0x14] sm:$0x1]
      %v1067 = vld [vmem:[%s895 + $0x18] sm:$0xf]
      %v1068 = vld [vmem:[%s895 + $0x1c] sm:$0x1]
      %v1069 = vld [vmem:[%s895 + $0x20] sm:$0xf]
      %v1070 = vld [vmem:[%s895 + $0x24] sm:$0x1]
      %v1071 = vld [vmem:[%s895 + $0x28] sm:$0xf]
      %v1072 = vld [vmem:[%s895 + $0x2c] sm:$0x1]
      %v1073 = vld [vmem:[%s895 + $0x30] sm:$0xf]
      %v1074 = vld [vmem:[%s895 + $0x34] sm:$0x1]
      %v1075 = vld [vmem:[%s895 + $0x38] sm:$0xf]
      %v1076 = vld [vmem:[%s895 + $0x3c] sm:$0x1]
      %v1078 = vshrl.u32 %v1061, 16
      %v1080 = vrot.slane %v1078, 4
      %v1081 = vshll.u32 %v1061, 16
      %v1083 = vrot.slane %v1081, 5
      %v1084 = vor.u32 %v1080, %v1083
      %v1085 = vrot.slane %v1084, 4
      %v1087 = vshll.u32 %v1062, 16
      %v1089 = vrot.slane %v1087, 5
      %v1090 = vsel %vm356, %v1085, %v1089
      %v1092 = vshrl.u32 %v1063, 16
      %v1094 = vrot.slane %v1092, 4
      %v1095 = vshll.u32 %v1063, 16
      %v1097 = vrot.slane %v1095, 5
      %v1098 = vor.u32 %v1094, %v1097
      %v1099 = vrot.slane %v1098, 4
      %v1101 = vshll.u32 %v1064, 16
      %v1103 = vrot.slane %v1101, 5
      %v1104 = vsel %vm356, %v1099, %v1103
      %v1106 = vshrl.u32 %v1065, 16
      %v1108 = vrot.slane %v1106, 4
      %v1109 = vshll.u32 %v1065, 16
      %v1111 = vrot.slane %v1109, 5
      %v1112 = vor.u32 %v1108, %v1111
      %v1113 = vrot.slane %v1112, 4
      %v1115 = vshll.u32 %v1066, 16
      %v1117 = vrot.slane %v1115, 5
      %v1118 = vsel %vm356, %v1113, %v1117
      %v1120 = vshrl.u32 %v1067, 16
      %v1122 = vrot.slane %v1120, 4
      %v1123 = vshll.u32 %v1067, 16
      %v1125 = vrot.slane %v1123, 5
      %v1126 = vor.u32 %v1122, %v1125
      %v1127 = vrot.slane %v1126, 4
      %v1129 = vshll.u32 %v1068, 16
      %v1131 = vrot.slane %v1129, 5
      %v1132 = vsel %vm356, %v1127, %v1131
      %v1134 = vshrl.u32 %v1069, 16
      %v1136 = vrot.slane %v1134, 4
      %v1137 = vshll.u32 %v1069, 16
      %v1139 = vrot.slane %v1137, 5
      %v1140 = vor.u32 %v1136, %v1139
      %v1141 = vrot.slane %v1140, 4
      %v1143 = vshll.u32 %v1070, 16
      %v1145 = vrot.slane %v1143, 5
      %v1146 = vsel %vm356, %v1141, %v1145
      %v1148 = vshrl.u32 %v1071, 16
      %v1150 = vrot.slane %v1148, 4
      %v1151 = vshll.u32 %v1071, 16
      %v1153 = vrot.slane %v1151, 5
      %v1154 = vor.u32 %v1150, %v1153
      %v1155 = vrot.slane %v1154, 4
      %v1157 = vshll.u32 %v1072, 16
      %v1159 = vrot.slane %v1157, 5
      %v1160 = vsel %vm356, %v1155, %v1159
      %v1162 = vshrl.u32 %v1073, 16
      %v1164 = vrot.slane %v1162, 4
      %v1165 = vshll.u32 %v1073, 16
      %v1167 = vrot.slane %v1165, 5
      %v1168 = vor.u32 %v1164, %v1167
      %v1169 = vrot.slane %v1168, 4
      %v1171 = vshll.u32 %v1074, 16
      %v1173 = vrot.slane %v1171, 5
      %v1174 = vsel %vm356, %v1169, %v1173
      %v1176 = vshrl.u32 %v1075, 16
      %v1178 = vrot.slane %v1176, 4
      %v1179 = vshll.u32 %v1075, 16
      %v1181 = vrot.slane %v1179, 5
      %v1182 = vor.u32 %v1178, %v1181
      %v1183 = vrot.slane %v1182, 4
      %v1185 = vshll.u32 %v1076, 16
      %v1187 = vrot.slane %v1185, 5
      %v1188 = vsel %vm356, %v1183, %v1187
      %s1189 = scalar_lea.vmem %s1, 16
      %v1190 = vld [vmem:[%s1189] sm:$0x3]
      %v1191 = vunpack.c.l.b16 %v1090
      %v1192 = vunpack.c.l.b16 %v1104
      %v1193 = vunpack.c.l.b16 %v1118
      %v1194 = vunpack.c.l.b16 %v1132
      %v1195 = vunpack.c.l.b16 %v1146
      %v1196 = vunpack.c.l.b16 %v1160
      %v1197 = vunpack.c.l.b16 %v1174
      %v1198 = vunpack.c.l.b16 %v1188
      %v1199 = vpack.c.b16 %v1192, %v1191
      %v1200 = vpack.c.b16 %v1194, %v1193
      %v1201 = vpack.c.b16 %v1196, %v1195
      %v1202 = vpack.c.b16 %v1198, %v1197
      %v1204 = vsel %vm228, %v1199, 0
      %v1207 = vsel %vm228, %v1200, 0
      %v1210 = vsel %vm228, %v1201, 0
      %v1213 = vsel %vm228, %v1202, 0
      %v1216 = vsel %vm241, %v1190, 0
      %1218 = vmatpush.bf16.msra.mxu0 0
      %1219 = vmatpush.bf16.msra.mxu0 0
      %1220 = vmatpush.bf16.msra.mxu0 0
      %1221 = vmatpush.bf16.msra.mxu0 0
      %1222 = vmatpush.bf16.msra.mxu0 0
      %1223 = vmatpush.bf16.msra.mxu0 0
      %1224 = vmatpush.bf16.msra.mxu0 0
      %1225 = vmatpush.bf16.msra.mxu0 %v1216
      %1226 = vmatmul.bf16.gmra.mxu0 %v1204
      %v1227 = vpop.f32.mrf.mxu0
      %v1228 = vadd.f32 0.0, %v1227
      %v1229 = vpop.f32.mrf.mxu0
      %v1230 = vadd.f32 0.0, %v1229
      %1231 = vmatmul.bf16.gmra.mxu0 %v1207
      %v1232 = vpop.f32.mrf.mxu0
      %v1233 = vadd.f32 0.0, %v1232
      %v1234 = vpop.f32.mrf.mxu0
      %v1235 = vadd.f32 0.0, %v1234
      %1236 = vmatmul.bf16.gmra.mxu0 %v1210
      %v1237 = vpop.f32.mrf.mxu0
      %v1238 = vadd.f32 0.0, %v1237
      %v1239 = vpop.f32.mrf.mxu0
      %v1240 = vadd.f32 0.0, %v1239
      %1241 = vmatmul.bf16.gmra.mxu0 %v1213
      %v1242 = vpop.f32.mrf.mxu0
      %v1243 = vadd.f32 0.0, %v1242
      %v1244 = vpop.f32.mrf.mxu0
      %v1245 = vadd.f32 0.0, %v1244
      %1246 = vdwg.mxu0
      %v1247 = vadd.f32 %v1053, %v1228
      %v1248 = vadd.f32 %v1054, %v1230
      %v1249 = vadd.f32 %v1055, %v1233
      %v1250 = vadd.f32 %v1056, %v1235
      %v1251 = vadd.f32 %v1057, %v1238
      %v1252 = vadd.f32 %v1058, %v1240
      %v1253 = vadd.f32 %v1059, %v1243
      %v1254 = vadd.f32 %v1060, %v1245
      %1255 = vst [vmem:[%s182] sm:$0xff] %v1247
      %1256 = vst [vmem:[%s182 + $0x8] sm:$0xff] %v1248
      %1257 = vst [vmem:[%s182 + $0x10] sm:$0xff] %v1249
      %1258 = vst [vmem:[%s182 + $0x18] sm:$0xff] %v1250
      %1259 = vst [vmem:[%s182 + $0x20] sm:$0xff] %v1251
      %1260 = vst [vmem:[%s182 + $0x28] sm:$0xff] %v1252
      %1261 = vst [vmem:[%s182 + $0x30] sm:$0xff] %v1253
      %1262 = vst [vmem:[%s182 + $0x38] sm:$0xff] %v1254
      %v1263 = vadd.f32 %v1247, %v1248
      %v1264 = vadd.f32 %v1263, %v1249
      %v1265 = vadd.f32 %v1264, %v1250
      %v1266 = vadd.f32 %v1265, %v1251
      %v1267 = vadd.f32 %v1266, %v1252
      %v1268 = vadd.f32 %v1267, %v1253
      %v1269 = vadd.f32 %v1268, %v1254
      %v1270 = vrot.slane %v1269, 4
      %v1271 = vadd.f32 %v1269, %v1270
      %v1272 = vrot.slane %v1271, 2
      %v1273 = vadd.f32 %v1271, %v1272
      %v1274 = vrot.slane %v1273, 1
      %v1275 = vadd.f32 %v1273, %v1274
      %v1276 = vmul.f32 %v1247, %v1247
      %v1277 = vmul.f32 %v1248, %v1248
      %v1278 = vmul.f32 %v1249, %v1249
      %v1279 = vmul.f32 %v1250, %v1250
      %v1280 = vmul.f32 %v1251, %v1251
      %v1281 = vmul.f32 %v1252, %v1252
      %v1282 = vmul.f32 %v1253, %v1253
      %v1283 = vmul.f32 %v1254, %v1254
      %v1284 = vadd.f32 %v1276, %v1277
      %v1285 = vadd.f32 %v1284, %v1278
      %v1286 = vadd.f32 %v1285, %v1279
      %v1287 = vadd.f32 %v1286, %v1280
      %v1288 = vadd.f32 %v1287, %v1281
      %v1289 = vadd.f32 %v1288, %v1282
      %v1290 = vadd.f32 %v1289, %v1283
      %v1291 = vrot.slane %v1290, 4
      %v1292 = vadd.f32 %v1290, %v1291
      %v1293 = vrot.slane %v1292, 2
      %v1294 = vadd.f32 %v1292, %v1293
      %v1295 = vrot.slane %v1294, 1
      %v1296 = vadd.f32 %v1294, %v1295
      %vm1297 = vcmask 1040384
      %v1298 = vsel %vm1297, %v1275, %v1296
      %1299 = vst [vmem:[%s186] sm:$0x3] %v1298
      %p1300 = scmp.lt.s32.totalorder %s15, 1
      %s1301 = scalar_select %p1300, %s15, 1
      %s1302 = smul.addr %s1301, 8
      %s1303 = smul.addr %s1302, 8
      %s1304 = scalar_lea.vmem %s2, %s1303
      %p1305 = scmp.lt.s32.totalorder %s15, 1
      %s1306 = scalar_select %p1305, %s15, 1
      %s1307 = smul.addr %s1306, 2
      %s1308 = scalar_lea.vmem %s3, %s1307
      // Predicated region
      $region29: #{basic_block_forward.3} parent=27 // pred_check
        %p1309 = pneg %p80
      $region30: #{basic_block_forward.3} parent=27 // pred_check_branch
        %1311 = sbr.rel (%p1309) target = $region32
      $region31: #{basic_block_forward.3} parent=27 // pred_region
        _
      $region32: #{basic_block_forward.3} parent=27 // pred_fallthru
        _
      // Predicated region
      $region33: #{basic_block_forward.3} parent=27 // pred_check
        %p1312 = pneg %p106
      $region34: #{basic_block_forward.3} parent=27 // pred_check_branch
        %1314 = sbr.rel (%p1312) target = $region36
      $region35: #{basic_block_forward.3} parent=27 // pred_region
        _
      $region36: #{basic_block_forward.3} parent=27 // pred_fallthru
        _
    $region28: #{basic_block_forward.3} parent=5 // pred_fallthru
      _
    %p1315 = scmp.le.s32.totalorder 2, %s10
    // Predicated region
    $region37: #{basic_block_forward.3} parent=5 // pred_check
      %p1316 = pneg %p1315
    $region38: #{basic_block_forward.3} parent=5 // pred_check_branch
      %1318 = sbr.rel (%p1316) target = $region40
    $region39: #{basic_block_forward.3} parent=5 // pred_region
      %s1319 = ssub.s32 %s10, 2
      // Predicated region
      $region41: #{basic_block_forward.3} parent=39 // pred_check
        %p1320 = pneg %p86
      $region42: #{basic_block_forward.3} parent=39 // pred_check_branch
        %1322 = sbr.rel (%p1320) target = $region44
      $region43: #{basic_block_forward.3} parent=39 // pred_region
        %p1323 = scmp.lt.s32.totalorder %s16, 1
        %s1324 = scalar_select %p1323, %s16, 1
        %s1325 = smul.addr %s1324, 8
        %s1326 = smul.addr %s1325, 8
        %s1327 = scalar_lea.vmem %s2, %s1326
      $region44: #{basic_block_forward.3} parent=39 // pred_fallthru
        _
      // Predicated region
      $region45: #{basic_block_forward.3} parent=39 // pred_check
        %p1328 = pneg %p112
      $region46: #{basic_block_forward.3} parent=39 // pred_check_branch
        %1330 = sbr.rel (%p1328) target = $region48
      $region47: #{basic_block_forward.3} parent=39 // pred_region
        %p1331 = scmp.lt.s32.totalorder %s16, 1
        %s1332 = scalar_select %p1331, %s16, 1
        %s1333 = smul.addr %s1332, 2
        %s1334 = scalar_lea.vmem %s3, %s1333
      $region48: #{basic_block_forward.3} parent=39 // pred_fallthru
        _
    $region40: #{basic_block_forward.3} parent=5 // pred_fallthru
      _
  $region6: #{basic_block_forward.3} parent=0 // loop_footer
    %s14 = sadd.s32 1, %s10
  $region7: #{basic_block_forward.3} parent=0 // loop_footer_branch
    %9 = sbr.rel target = $region3
  $region8: #{basic_block_forward.3} parent=0 // loop_exit
    _

// kernel: basic_block_forward.4
$region0: #{basic_block_forward.4}
  #allocation0 [shape = 'u32[]', space=smem, size = 0x4, offset = 0x4, fixed_abs, tag = 'smem constant byte address 0x4 - core index']
  #allocation1 [shape = 'u32[72,128]{1,0:T(1,128)}', space=vmem, size = 0x9000, scoped, tag = 'internal scratch']
  #allocation2 [shape = 'f32[10,10,128]{2,1,0:T(8,128)}', space=vmem, size = 0x14000, scoped, tag = 'scratch operand']
  %s0 = inlined_call_operand.vmem [shape: f32[2,64,128], index: 0, kind: input, shape index: {}]
  %s1 = inlined_call_operand.vmem [shape: f32[1,128], index: 1, kind: input, shape index: {}]
  %s2 = inlined_call_operand.vmem [shape: f32[1,128], index: 2, kind: input, shape index: {}]
  %s3 = inlined_call_operand.vmem [shape: bf16[9,128,128], index: 3, kind: input, shape index: {}]
  %s4 = inlined_call_operand.vmem [shape: bf16[2,64,4], index: 4, kind: input, shape index: {}]
  %s5 = inlined_call_operand.vmem [shape: bf16[4,128], index: 5, kind: input, shape index: {}]
  %s6 = inlined_call_operand.vmem [shape: f32[2,64,128], index: 6, kind: output, shape index: {0}]
  %s7 = inlined_call_operand.vmem [shape: f32[2,2,128], index: 7, kind: output, shape index: {1}]
  %s8 = inlined_call_operand.vmem [shape: f32[2,64,128], index: 8, kind: output, shape index: {2}]
  %s9 = inlined_call_operand.vmem [shape: f32[2,2,128], index: 9, kind: output, shape index: {3}]
  %10 = xla_tuple %s6, %s7, %s8, %s9
  %s11 = sld [smem:[#allocation0]]
  $region81: #{basic_block_forward.4} parent=0
    _
  %s13 = ssub.s32 1, %s11
  %s14 = scalar_select 0, %s13, %s11
  loop: start=0, step=1, limit=4
  $region2: #{basic_block_forward.4} parent=0 // loop_pre_header
    _
  $region3: #{basic_block_forward.4} parent=0 // loop_header
    %s16 = sphi 0, %s20
    %p17 = scmp.ge.s32.totalorder %s16, 4
    %s26 = sphi 0, %s28
    %s29 = sphi 0, %s26
    %s30 = sphi 0, %s29
    %s46 = sphi 0, %s30
    %s50 = sphi 0, %s50
    %s52 = sphi 0, %s50
    %s53 = sphi 0, %s52
    %s67 = sphi 0, %s53
    %s71 = sphi 0, %s71
    %s73 = sphi 0, %s71
    %s74 = sphi 0, %s73
    %s88 = sphi 0, %s74
    %s92 = sphi 0, %s92
    %s94 = sphi 0, %s92
    %s95 = sphi 0, %s94
    %s109 = sphi 0, %s95
    %s115 = sphi 0, %s117
    %s118 = sphi 0, %s115
    %s119 = sphi 0, %s118
    %s135 = sphi 0, %s119
    %s139 = sphi 0, %s139
    %s141 = sphi 0, %s139
    %s142 = sphi 0, %s141
    %s156 = sphi 0, %s142
    %s162 = sphi 0, %s164
    %s165 = sphi 0, %s162
    %s166 = sphi 0, %s165
    %s182 = sphi 0, %s166
    %s188 = sphi 0, %s190
    %s191 = sphi 0, %s188
    %s192 = sphi 0, %s191
    %s208 = sphi 0, %s192
    %s214 = sphi 0, %s216
    %s217 = sphi 0, %s214
    %s218 = sphi 0, %s217
    %s234 = sphi 0, %s218
    %s240 = sphi 0, %s242
    %s243 = sphi 0, %s240
    %s244 = sphi 0, %s243
    %s260 = sphi 0, %s244
  $region4: #{basic_block_forward.4} parent=0 // loop_header_branch
    %19 = sbr.rel (%p17) target = $region8
  $region5: #{basic_block_forward.4} parent=0 // loop_body
    %s21 = ssub.s32 %s16, 1
    %s22 = ssub.s32 %s16, 2
    %s23 = sadd.s32 %s16, 1
    %s24 = ssub.s32 %s16, %s23
    %p25 = scmp.eq.s32.totalorder %s24, 0
    %s27 = sadd.s32 %s26, 1
    %s28 = scalar_select %p25, %s26, %s27
    %p31 = pneg %p25
    %p32 = scmp.eq.s32.totalorder %s16, 1
    %p33 = por %p31, %p32
    %p34 = scmp.ne.s32.totalorder %s26, %s29
    %p35 = scmp.eq.s32.totalorder %s16, 0
    %p36 = por %p34, %p35
    %p37 = scmp.ne.s32.totalorder %s26, %s29
    %p38 = scmp.eq.s32.totalorder %s21, 1
    %p39 = por %p37, %p38
    %p40 = scmp.ne.s32.totalorder %s29, %s30
    %p41 = scmp.eq.s32.totalorder %s21, 0
    %p42 = por %p40, %p41
    %p43 = scmp.ne.s32.totalorder %s29, %s30
    %p44 = scmp.eq.s32.totalorder %s22, 1
    %p45 = por %p43, %p44
    %p47 = scmp.ne.s32.totalorder %s30, %s46
    %p48 = scmp.eq.s32.totalorder %s22, 0
    %p49 = por %p47, %p48
    %s51 = sadd.s32 %s50, 1
    %p54 = scmp.eq.s32.totalorder %s16, 1
    %p55 = scmp.ne.s32.totalorder %s50, %s52
    %p56 = scmp.eq.s32.totalorder %s16, 0
    %p57 = por %p55, %p56
    %p58 = scmp.ne.s32.totalorder %s50, %s52
    %p59 = scmp.eq.s32.totalorder %s21, 1
    %p60 = por %p58, %p59
    %p61 = scmp.ne.s32.totalorder %s52, %s53
    %p62 = scmp.eq.s32.totalorder %s21, 0
    %p63 = por %p61, %p62
    %p64 = scmp.ne.s32.totalorder %s52, %s53
    %p65 = scmp.eq.s32.totalorder %s22, 1
    %p66 = por %p64, %p65
    %p68 = scmp.ne.s32.totalorder %s53, %s67
    %p69 = scmp.eq.s32.totalorder %s22, 0
    %p70 = por %p68, %p69
    %s72 = sadd.s32 %s71, 1
    %p75 = scmp.eq.s32.totalorder %s16, 1
    %p76 = scmp.ne.s32.totalorder %s71, %s73
    %p77 = scmp.eq.s32.totalorder %s16, 0
    %p78 = por %p76, %p77
    %p79 = scmp.ne.s32.totalorder %s71, %s73
    %p80 = scmp.eq.s32.totalorder %s21, 1
    %p81 = por %p79, %p80
    %p82 = scmp.ne.s32.totalorder %s73, %s74
    %p83 = scmp.eq.s32.totalorder %s21, 0
    %p84 = por %p82, %p83
    %p85 = scmp.ne.s32.totalorder %s73, %s74
    %p86 = scmp.eq.s32.totalorder %s22, 1
    %p87 = por %p85, %p86
    %p89 = scmp.ne.s32.totalorder %s74, %s88
    %p90 = scmp.eq.s32.totalorder %s22, 0
    %p91 = por %p89, %p90
    %s93 = sadd.s32 %s92, 1
    %p96 = scmp.eq.s32.totalorder %s16, 1
    %p97 = scmp.ne.s32.totalorder %s92, %s94
    %p98 = scmp.eq.s32.totalorder %s16, 0
    %p99 = por %p97, %p98
    %p100 = scmp.ne.s32.totalorder %s92, %s94
    %p101 = scmp.eq.s32.totalorder %s21, 1
    %p102 = por %p100, %p101
    %p103 = scmp.ne.s32.totalorder %s94, %s95
    %p104 = scmp.eq.s32.totalorder %s21, 0
    %p105 = por %p103, %p104
    %p106 = scmp.ne.s32.totalorder %s94, %s95
    %p107 = scmp.eq.s32.totalorder %s22, 1
    %p108 = por %p106, %p107
    %p110 = scmp.ne.s32.totalorder %s95, %s109
    %p111 = scmp.eq.s32.totalorder %s22, 0
    %p112 = por %p110, %p111
    %s113 = ssub.s32 %s16, %s23
    %p114 = scmp.eq.s32.totalorder %s113, 0
    %s116 = sadd.s32 %s115, 1
    %s117 = scalar_select %p114, %s115, %s116
    %p120 = pneg %p114
    %p121 = scmp.eq.s32.totalorder %s16, 1
    %p122 = por %p120, %p121
    %p123 = scmp.ne.s32.totalorder %s115, %s118
    %p124 = scmp.eq.s32.totalorder %s16, 0
    %p125 = por %p123, %p124
    %p126 = scmp.ne.s32.totalorder %s115, %s118
    %p127 = scmp.eq.s32.totalorder %s21, 1
    %p128 = por %p126, %p127
    %p129 = scmp.ne.s32.totalorder %s118, %s119
    %p130 = scmp.eq.s32.totalorder %s21, 0
    %p131 = por %p129, %p130
    %p132 = scmp.ne.s32.totalorder %s118, %s119
    %p133 = scmp.eq.s32.totalorder %s22, 1
    %p134 = por %p132, %p133
    %p136 = scmp.ne.s32.totalorder %s119, %s135
    %p137 = scmp.eq.s32.totalorder %s22, 0
    %p138 = por %p136, %p137
    %s140 = sadd.s32 %s139, 1
    %p143 = scmp.eq.s32.totalorder %s16, 1
    %p144 = scmp.ne.s32.totalorder %s139, %s141
    %p145 = scmp.eq.s32.totalorder %s16, 0
    %p146 = por %p144, %p145
    %p147 = scmp.ne.s32.totalorder %s139, %s141
    %p148 = scmp.eq.s32.totalorder %s21, 1
    %p149 = por %p147, %p148
    %p150 = scmp.ne.s32.totalorder %s141, %s142
    %p151 = scmp.eq.s32.totalorder %s21, 0
    %p152 = por %p150, %p151
    %p153 = scmp.ne.s32.totalorder %s141, %s142
    %p154 = scmp.eq.s32.totalorder %s22, 1
    %p155 = por %p153, %p154
    %p157 = scmp.ne.s32.totalorder %s142, %s156
    %p158 = scmp.eq.s32.totalorder %s22, 0
    %p159 = por %p157, %p158
    %s160 = ssub.s32 %s16, %s23
    %p161 = scmp.eq.s32.totalorder %s160, 0
    %s163 = sadd.s32 %s162, 1
    %s164 = scalar_select %p161, %s162, %s163
    %p167 = pneg %p161
    %p168 = scmp.eq.s32.totalorder %s16, 1
    %p169 = por %p167, %p168
    %p170 = scmp.ne.s32.totalorder %s162, %s165
    %p171 = scmp.eq.s32.totalorder %s16, 0
    %p172 = por %p170, %p171
    %p173 = scmp.ne.s32.totalorder %s162, %s165
    %p174 = scmp.eq.s32.totalorder %s21, 1
    %p175 = por %p173, %p174
    %p176 = scmp.ne.s32.totalorder %s165, %s166
    %p177 = scmp.eq.s32.totalorder %s21, 0
    %p178 = por %p176, %p177
    %p179 = scmp.ne.s32.totalorder %s165, %s166
    %p180 = scmp.eq.s32.totalorder %s22, 1
    %p181 = por %p179, %p180
    %p183 = scmp.ne.s32.totalorder %s166, %s182
    %p184 = scmp.eq.s32.totalorder %s22, 0
    %p185 = por %p183, %p184
    %s186 = ssub.s32 %s16, %s23
    %p187 = scmp.eq.s32.totalorder %s186, 0
    %s189 = sadd.s32 %s188, 1
    %s190 = scalar_select %p187, %s188, %s189
    %p193 = pneg %p187
    %p194 = scmp.eq.s32.totalorder %s16, 1
    %p195 = por %p193, %p194
    %p196 = scmp.ne.s32.totalorder %s188, %s191
    %p197 = scmp.eq.s32.totalorder %s16, 0
    %p198 = por %p196, %p197
    %p199 = scmp.ne.s32.totalorder %s188, %s191
    %p200 = scmp.eq.s32.totalorder %s21, 1
    %p201 = por %p199, %p200
    %p202 = scmp.ne.s32.totalorder %s191, %s192
    %p203 = scmp.eq.s32.totalorder %s21, 0
    %p204 = por %p202, %p203
    %p205 = scmp.ne.s32.totalorder %s191, %s192
    %p206 = scmp.eq.s32.totalorder %s22, 1
    %p207 = por %p205, %p206
    %p209 = scmp.ne.s32.totalorder %s192, %s208
    %p210 = scmp.eq.s32.totalorder %s22, 0
    %p211 = por %p209, %p210
    %s212 = ssub.s32 %s16, %s23
    %p213 = scmp.eq.s32.totalorder %s212, 0
    %s215 = sadd.s32 %s214, 1
    %s216 = scalar_select %p213, %s214, %s215
    %p219 = pneg %p213
    %p220 = scmp.eq.s32.totalorder %s16, 1
    %p221 = por %p219, %p220
    %p222 = scmp.ne.s32.totalorder %s214, %s217
    %p223 = scmp.eq.s32.totalorder %s16, 0
    %p224 = por %p222, %p223
    %p225 = scmp.ne.s32.totalorder %s214, %s217
    %p226 = scmp.eq.s32.totalorder %s21, 1
    %p227 = por %p225, %p226
    %p228 = scmp.ne.s32.totalorder %s217, %s218
    %p229 = scmp.eq.s32.totalorder %s21, 0
    %p230 = por %p228, %p229
    %p231 = scmp.ne.s32.totalorder %s217, %s218
    %p232 = scmp.eq.s32.totalorder %s22, 1
    %p233 = por %p231, %p232
    %p235 = scmp.ne.s32.totalorder %s218, %s234
    %p236 = scmp.eq.s32.totalorder %s22, 0
    %p237 = por %p235, %p236
    %s238 = ssub.s32 %s16, %s23
    %p239 = scmp.eq.s32.totalorder %s238, 0
    %s241 = sadd.s32 %s240, 1
    %s242 = scalar_select %p239, %s240, %s241
    %p245 = pneg %p239
    %p246 = scmp.eq.s32.totalorder %s16, 1
    %p247 = por %p245, %p246
    %p248 = scmp.ne.s32.totalorder %s240, %s243
    %p249 = scmp.eq.s32.totalorder %s16, 0
    %p250 = por %p248, %p249
    %p251 = scmp.ne.s32.totalorder %s240, %s243
    %p252 = scmp.eq.s32.totalorder %s21, 1
    %p253 = por %p251, %p252
    %p254 = scmp.ne.s32.totalorder %s243, %s244
    %p255 = scmp.eq.s32.totalorder %s21, 0
    %p256 = por %p254, %p255
    %p257 = scmp.ne.s32.totalorder %s243, %s244
    %p258 = scmp.eq.s32.totalorder %s22, 1
    %p259 = por %p257, %p258
    %p261 = scmp.ne.s32.totalorder %s244, %s260
    %p262 = scmp.eq.s32.totalorder %s22, 0
    %p263 = por %p261, %p262
    %p264 = scmp.le.s32.totalorder 1, %s16
    %p265 = scmp.lt.s32.totalorder %s16, 3
    %p266 = pnand %p264, %p265
    %p267 = pneg %p266
    // Predicated region
    $region9: #{basic_block_forward.4} parent=5 // pred_check
      _
    $region10: #{basic_block_forward.4} parent=5 // pred_check_branch
      %269 = sbr.rel (%p266) target = $region12
    $region11: #{basic_block_forward.4} parent=5 // pred_region
      %s270 = ssub.s32 %s16, 1
      // Predicated region
      $region13: #{basic_block_forward.4} parent=11 // pred_check
        %p271 = pneg %p63
      $region14: #{basic_block_forward.4} parent=11 // pred_check_branch
        %273 = sbr.rel (%p271) target = $region16
      $region15: #{basic_block_forward.4} parent=11 // pred_region
        _
      $region16: #{basic_block_forward.4} parent=11 // pred_fallthru
        _
      // Predicated region
      $region17: #{basic_block_forward.4} parent=11 // pred_check
        %p274 = pneg %p84
      $region18: #{basic_block_forward.4} parent=11 // pred_check_branch
        %276 = sbr.rel (%p274) target = $region20
      $region19: #{basic_block_forward.4} parent=11 // pred_region
        _
      $region20: #{basic_block_forward.4} parent=11 // pred_fallthru
        _
      // Predicated region
      $region21: #{basic_block_forward.4} parent=11 // pred_check
        %p277 = pneg %p105
      $region22: #{basic_block_forward.4} parent=11 // pred_check_branch
        %279 = sbr.rel (%p277) target = $region24
      $region23: #{basic_block_forward.4} parent=11 // pred_region
        _
      $region24: #{basic_block_forward.4} parent=11 // pred_fallthru
        _
      // Predicated region
      $region25: #{basic_block_forward.4} parent=11 // pred_check
        %p280 = pneg %p152
      $region26: #{basic_block_forward.4} parent=11 // pred_check_branch
        %282 = sbr.rel (%p280) target = $region28
      $region27: #{basic_block_forward.4} parent=11 // pred_region
        _
      $region28: #{basic_block_forward.4} parent=11 // pred_fallthru
        _
    $region12: #{basic_block_forward.4} parent=5 // pred_fallthru
      _
    %p283 = scmp.lt.s32.totalorder %s16, 2
    // Predicated region
    $region29: #{basic_block_forward.4} parent=5 // pred_check
      %p284 = pneg %p283
    $region30: #{basic_block_forward.4} parent=5 // pred_check_branch
      %286 = sbr.rel (%p284) target = $region32
    $region31: #{basic_block_forward.4} parent=5 // pred_region
      // Predicated region
      $region33: #{basic_block_forward.4} parent=31 // pred_check
        %p287 = pneg %p36
      $region34: #{basic_block_forward.4} parent=31 // pred_check_branch
        %289 = sbr.rel (%p287) target = $region36
      $region35: #{basic_block_forward.4} parent=31 // pred_region
        %p290 = scmp.lt.s32.totalorder %s16, 1
        %s291 = scalar_select %p290, %s16, 1
        %s292 = smul.addr %s291, 8
        %s293 = smul.addr %s292, 8
        %s294 = scalar_lea.vmem %s0, %s293
      $region36: #{basic_block_forward.4} parent=31 // pred_fallthru
        _
      // Predicated region
      $region37: #{basic_block_forward.4} parent=31 // pred_check
        %p295 = pneg %p125
      $region38: #{basic_block_forward.4} parent=31 // pred_check_branch
        %297 = sbr.rel (%p295) target = $region40
      $region39: #{basic_block_forward.4} parent=31 // pred_region
        %p298 = scmp.lt.s32.totalorder %s16, 1
        %s299 = scalar_select %p298, %s16, 1
        %s300 = smul.addr %s299, 8
        %s301 = smul.addr %s300, 4
        %s302 = scalar_lea.vmem %s4, %s301
      $region40: #{basic_block_forward.4} parent=31 // pred_fallthru
        _
    $region32: #{basic_block_forward.4} parent=5 // pred_fallthru
      _
    %p303 = scmp.le.s32.totalorder 1, %s16
    %p304 = scmp.lt.s32.totalorder %s16, 3
    %p305 = pnand %p303, %p304
    %p306 = pneg %p305
    // Predicated region
    $region41: #{basic_block_forward.4} parent=5 // pred_check
      _
    $region42: #{basic_block_forward.4} parent=5 // pred_check_branch
      %308 = sbr.rel (%p305) target = $region44
    $region43: #{basic_block_forward.4} parent=5 // pred_region
      %s309 = ssub.s32 %s16, 1
      %p310 = scmp.lt.s32.totalorder %s21, 1
      %s311 = scalar_select %p310, %s21, 1
      %s312 = smul.addr %s311, 8
      %s313 = smul.addr %s312, 8
      %s314 = scalar_lea.vmem %s0, %s313
      %p315 = pneg %p42
      %p316 = pneg %p39
      %p317 = pneg %p63
      %p318 = pneg %p60
      %p319 = pneg %p84
      %p320 = pneg %p81
      %p321 = pneg %p105
      %p322 = pneg %p102
      %p323 = scmp.lt.s32.totalorder %s21, 1
      %s324 = scalar_select %p323, %s21, 1
      %s325 = smul.addr %s324, 8
      %s326 = smul.addr %s325, 4
      %s327 = scalar_lea.vmem %s4, %s326
      %p328 = pneg %p131
      %p329 = pneg %p128
      %p330 = pneg %p152
      %p331 = pneg %p149
      %p332 = pneg %p178
      %p333 = pneg %p175
      %p334 = scmp.lt.s32.totalorder %s21, 1
      %s335 = scalar_select %p334, %s21, 1
      %s336 = smul.addr %s335, 8
      %s337 = smul.addr %s336, 8
      %s338 = scalar_lea.vmem %s6, %s337
      %p339 = pneg %p204
      %p340 = pneg %p201
      %p341 = scmp.lt.s32.totalorder %s21, 1
      %s342 = scalar_select %p341, %s21, 1
      %s343 = smul.addr %s342, 2
      %s344 = scalar_lea.vmem %s7, %s343
      %p345 = pneg %p230
      %p346 = pneg %p227
      %p347 = scmp.lt.s32.totalorder %s21, 1
      %s348 = scalar_select %p347, %s21, 1
      %s349 = smul.addr %s348, 8
      %s350 = smul.addr %s349, 8
      %s351 = scalar_lea.vmem %s8, %s350
      %p352 = pneg %p256
      %p353 = pneg %p253
      %p354 = scmp.lt.s32.totalorder %s21, 1
      %s355 = scalar_select %p354, %s21, 1
      %s356 = smul.addr %s355, 2
      %s357 = scalar_lea.vmem %s9, %s356
      %p358 = scmp.lt.s32.totalorder %s21, 1
      %s359 = scalar_select %p358, %s21, 1
      %s360 = smul.addr %s359, 8
      %s361 = smul.addr %s360, 8
      %s362 = scalar_lea.vmem %s0, %s361
      %p363 = scmp.lt.s32.totalorder %s21, 1
      %s364 = scalar_select %p363, %s21, 1
      %s365 = smul.addr %s364, 8
      %s366 = smul.addr %s365, 4
      %s367 = scalar_lea.vmem %s4, %s366
      %p368 = scmp.lt.s32.totalorder %s21, 1
      %s369 = scalar_select %p368, %s21, 1
      %s370 = smul.addr %s369, 8
      %s371 = smul.addr %s370, 8
      %s372 = scalar_lea.vmem %s6, %s371
      %p373 = scmp.lt.s32.totalorder %s21, 1
      %s374 = scalar_select %p373, %s21, 1
      %s375 = smul.addr %s374, 2
      %s376 = scalar_lea.vmem %s7, %s375
      %p377 = scmp.lt.s32.totalorder %s21, 1
      %s378 = scalar_select %p377, %s21, 1
      %s379 = smul.addr %s378, 8
      %s380 = smul.addr %s379, 8
      %s381 = scalar_lea.vmem %s8, %s380
      %p382 = scmp.lt.s32.totalorder %s21, 1
      %s383 = scalar_select %p382, %s21, 1
      %s384 = smul.addr %s383, 2
      %s385 = scalar_lea.vmem %s9, %s384
      %v387 = vld [vmem:[%s362] sm:$0xff]
      %v388 = vld [vmem:[%s362 + $0x8] sm:$0xff]
      %v389 = vld [vmem:[%s362 + $0x10] sm:$0xff]
      %v390 = vld [vmem:[%s362 + $0x18] sm:$0xff]
      %v391 = vld [vmem:[%s362 + $0x20] sm:$0xff]
      %v392 = vld [vmem:[%s362 + $0x28] sm:$0xff]
      %v393 = vld [vmem:[%s362 + $0x30] sm:$0xff]
      %v394 = vld [vmem:[%s362 + $0x38] sm:$0xff]
      %v395 = vld [vmem:[%s1] sm:$0x1]
      %v397 = vperm.slane %v395, 0
      %v399 = vmul.f32 %v387, %v397
      %v400 = vmul.f32 %v388, %v397
      %v401 = vmul.f32 %v389, %v397
      %v402 = vmul.f32 %v390, %v397
      %v403 = vmul.f32 %v391, %v397
      %v404 = vmul.f32 %v392, %v397
      %v405 = vmul.f32 %v393, %v397
      %v406 = vmul.f32 %v394, %v397
      %v407 = vld [vmem:[%s2] sm:$0x1]
      %v409 = vperm.slane %v407, 0
      %v411 = vadd.f32 %v399, %v409
      %v412 = vadd.f32 %v400, %v409
      %v413 = vadd.f32 %v401, %v409
      %v414 = vadd.f32 %v402, %v409
      %v415 = vadd.f32 %v403, %v409
      %v416 = vadd.f32 %v404, %v409
      %v417 = vadd.f32 %v405, %v409
      %v418 = vadd.f32 %v406, %v409
      %v419 = vmax.f32 %v411, 0.0
      %v420 = vmax.f32 %v412, 0.0
      %v421 = vmax.f32 %v413, 0.0
      %v422 = vmax.f32 %v414, 0.0
      %v423 = vmax.f32 %v415, 0.0
      %v424 = vmax.f32 %v416, 0.0
      %v425 = vmax.f32 %v417, 0.0
      %v426 = vmax.f32 %v418, 0.0
      %427 = vst [vmem:[#allocation2] sm:$0xff] 0.0
      %428 = vst [vmem:[#allocation2 + $0x8] sm:$0x3] 0.0
      %429 = vst [vmem:[#allocation2 + $0x10] sm:$0xff] 0.0
      %430 = vst [vmem:[#allocation2 + $0x18] sm:$0x3] 0.0
      %431 = vst [vmem:[#allocation2 + $0x20] sm:$0xff] 0.0
      %432 = vst [vmem:[#allocation2 + $0x28] sm:$0x3] 0.0
      %433 = vst [vmem:[#allocation2 + $0x30] sm:$0xff] 0.0
      %434 = vst [vmem:[#allocation2 + $0x38] sm:$0x3] 0.0
      %435 = vst [vmem:[#allocation2 + $0x40] sm:$0xff] 0.0
      %436 = vst [vmem:[#allocation2 + $0x48] sm:$0x3] 0.0
      %437 = vst [vmem:[#allocation2 + $0x50] sm:$0xff] 0.0
      %438 = vst [vmem:[#allocation2 + $0x58] sm:$0x3] 0.0
      %439 = vst [vmem:[#allocation2 + $0x60] sm:$0xff] 0.0
      %440 = vst [vmem:[#allocation2 + $0x68] sm:$0x3] 0.0
      %441 = vst [vmem:[#allocation2 + $0x70] sm:$0xff] 0.0
      %442 = vst [vmem:[#allocation2 + $0x78] sm:$0x3] 0.0
      %443 = vst [vmem:[#allocation2 + $0x80] sm:$0xff] 0.0
      %444 = vst [vmem:[#allocation2 + $0x88] sm:$0x3] 0.0
      %445 = vst [vmem:[#allocation2 + $0x90] sm:$0xff] 0.0
      %446 = vst [vmem:[#allocation2 + $0x98] sm:$0x3] 0.0
      %s447 = scalar_lea.vmem [#allocation2], 16
      %448 = vst [vmem:[%s447 + $0x1] sm:$0xff] %v419
      %449 = vst [vmem:[%s447 + $0x11] sm:$0xff] %v420
      %450 = vst [vmem:[%s447 + $0x21] sm:$0xff] %v421
      %451 = vst [vmem:[%s447 + $0x31] sm:$0xff] %v422
      %452 = vst [vmem:[%s447 + $0x41] sm:$0xff] %v423
      %453 = vst [vmem:[%s447 + $0x51] sm:$0xff] %v424
      %454 = vst [vmem:[%s447 + $0x61] sm:$0xff] %v425
      %455 = vst [vmem:[%s447 + $0x71] sm:$0xff] %v426
      %v456 = vld [vmem:[#allocation2] sm:$0xff]
      %v457 = vld [vmem:[#allocation2 + $0x10] sm:$0xff]
      %v458 = vld [vmem:[#allocation2 + $0x20] sm:$0xff]
      %v459 = vld [vmem:[#allocation2 + $0x30] sm:$0xff]
      %v460 = vld [vmem:[#allocation2 + $0x40] sm:$0xff]
      %v461 = vld [vmem:[#allocation2 + $0x50] sm:$0xff]
      %v462 = vld [vmem:[#allocation2 + $0x60] sm:$0xff]
      %v463 = vld [vmem:[#allocation2 + $0x70] sm:$0xff]
      %v464 = vpack.c.bf16 %v457, %v456
      %v465 = vpack.c.bf16 %v459, %v458
      %v466 = vpack.c.bf16 %v461, %v460
      %v467 = vpack.c.bf16 %v463, %v462
      %v468 = vld [vmem:[%s3] sm:$0xf]
      %v469 = vld [vmem:[%s3 + $0x4] sm:$0xf]
      %v470 = vld [vmem:[%s3 + $0x8] sm:$0xf]
      %v471 = vld [vmem:[%s3 + $0xc] sm:$0xf]
      %v472 = vld [vmem:[%s3 + $0x10] sm:$0xf]
      %v473 = vld [vmem:[%s3 + $0x14] sm:$0xf]
      %v474 = vld [vmem:[%s3 + $0x18] sm:$0xf]
      %v475 = vld [vmem:[%s3 + $0x1c] sm:$0xf]
      %v476 = vld [vmem:[%s3 + $0x20] sm:$0xf]
      %v477 = vld [vmem:[%s3 + $0x24] sm:$0xf]
      %v478 = vld [vmem:[%s3 + $0x28] sm:$0xf]
      %v479 = vld [vmem:[%s3 + $0x2c] sm:$0xf]
      %v480 = vld [vmem:[%s3 + $0x30] sm:$0xf]
      %v481 = vld [vmem:[%s3 + $0x34] sm:$0xf]
      %v482 = vld [vmem:[%s3 + $0x38] sm:$0xf]
      %v483 = vld [vmem:[%s3 + $0x3c] sm:$0xf]
      %v484 = vld [vmem:[#allocation2 + $0x1] sm:$0xff]
      %v485 = vld [vmem:[#allocation2 + $0x11] sm:$0xff]
      %v486 = vld [vmem:[#allocation2 + $0x21] sm:$0xff]
      %v487 = vld [vmem:[#allocation2 + $0x31] sm:$0xff]
      %v488 = vld [vmem:[#allocation2 + $0x41] sm:$0xff]
      %v489 = vld [vmem:[#allocation2 + $0x51] sm:$0xff]
      %v490 = vld [vmem:[#allocation2 + $0x61] sm:$0xff]
      %v491 = vld [vmem:[#allocation2 + $0x71] sm:$0xff]
      %v492 = vpack.c.bf16 %v485, %v484
      %v493 = vpack.c.bf16 %v487, %v486
      %v494 = vpack.c.bf16 %v489, %v488
      %v495 = vpack.c.bf16 %v491, %v490
      %s496 = scalar_lea.vmem %s3, 64
      %v497 = vld [vmem:[%s496] sm:$0xf]
      %v498 = vld [vmem:[%s496 + $0x4] sm:$0xf]
      %v499 = vld [vmem:[%s496 + $0x8] sm:$0xf]
      %v500 = vld [vmem:[%s496 + $0xc] sm:$0xf]
      %v501 = vld [vmem:[%s496 + $0x10] sm:$0xf]
      %v502 = vld [vmem:[%s496 + $0x14] sm:$0xf]
      %v503 = vld [vmem:[%s496 + $0x18] sm:$0xf]
      %v504 = vld [vmem:[%s496 + $0x1c] sm:$0xf]
      %v505 = vld [vmem:[%s496 + $0x20] sm:$0xf]
      %v506 = vld [vmem:[%s496 + $0x24] sm:$0xf]
      %v507 = vld [vmem:[%s496 + $0x28] sm:$0xf]
      %v508 = vld [vmem:[%s496 + $0x2c] sm:$0xf]
      %v509 = vld [vmem:[%s496 + $0x30] sm:$0xf]
      %v510 = vld [vmem:[%s496 + $0x34] sm:$0xf]
      %v511 = vld [vmem:[%s496 + $0x38] sm:$0xf]
      %v512 = vld [vmem:[%s496 + $0x3c] sm:$0xf]
      %v529 = vunpack.c.l.b16 %v497
      %v530 = vunpack.c.l.b16 %v498
      %v531 = vunpack.c.l.b16 %v499
      %v532 = vunpack.c.l.b16 %v500
      %v533 = vunpack.c.l.b16 %v501
      %v534 = vunpack.c.l.b16 %v502
      %v535 = vunpack.c.l.b16 %v503
      %v536 = vunpack.c.l.b16 %v504
      %v537 = vunpack.c.l.b16 %v505
      %v538 = vunpack.c.l.b16 %v506
      %v539 = vunpack.c.l.b16 %v507
      %v540 = vunpack.c.l.b16 %v508
      %v541 = vunpack.c.l.b16 %v509
      %v542 = vunpack.c.l.b16 %v510
      %v543 = vunpack.c.l.b16 %v511
      %v544 = vunpack.c.l.b16 %v512
      %v545 = vpack.c.b16 %v530, %v529
      %v546 = vpack.c.b16 %v532, %v531
      %v547 = vpack.c.b16 %v534, %v533
      %v548 = vpack.c.b16 %v536, %v535
      %v549 = vpack.c.b16 %v538, %v537
      %v550 = vpack.c.b16 %v540, %v539
      %v551 = vpack.c.b16 %v542, %v541
      %v552 = vpack.c.b16 %v544, %v543
      %561 = vmatpush.bf16.msra.mxu0 %v552
      %562 = vmatpush.bf16.msra.mxu0 %v551
      %563 = vmatpush.bf16.msra.mxu0 %v550
      %564 = vmatpush.bf16.msra.mxu0 %v549
      %565 = vmatpush.bf16.msra.mxu0 %v548
      %566 = vmatpush.bf16.msra.mxu0 %v547
      %567 = vmatpush.bf16.msra.mxu0 %v546
      %568 = vmatpush.bf16.msra.mxu0 %v545
      %569 = vmatmul.bf16.gmra.mxu0 %v492
      %v570 = vpop.f32.mrf.mxu0
      %v571 = vadd.f32 0.0, %v570
      %v572 = vpop.f32.mrf.mxu0
      %v573 = vadd.f32 0.0, %v572
      %574 = vmatmul.bf16.gmra.mxu0 %v493
      %v575 = vpop.f32.mrf.mxu0
      %v576 = vadd.f32 0.0, %v575
      %v577 = vpop.f32.mrf.mxu0
      %v578 = vadd.f32 0.0, %v577
      %579 = vmatmul.bf16.gmra.mxu0 %v494
      %v580 = vpop.f32.mrf.mxu0
      %v581 = vadd.f32 0.0, %v580
      %v582 = vpop.f32.mrf.mxu0
      %v583 = vadd.f32 0.0, %v582
      %584 = vmatmul.bf16.gmra.mxu0 %v495
      %v585 = vpop.f32.mrf.mxu0
      %v586 = vadd.f32 0.0, %v585
      %v587 = vpop.f32.mrf.mxu0
      %v588 = vadd.f32 0.0, %v587
      %589 = vdwg.mxu0
      %v606 = vunpack.c.l.b16 %v468
      %v607 = vunpack.c.l.b16 %v469
      %v608 = vunpack.c.l.b16 %v470
      %v609 = vunpack.c.l.b16 %v471
      %v610 = vunpack.c.l.b16 %v472
      %v611 = vunpack.c.l.b16 %v473
      %v612 = vunpack.c.l.b16 %v474
      %v613 = vunpack.c.l.b16 %v475
      %v614 = vunpack.c.l.b16 %v476
      %v615 = vunpack.c.l.b16 %v477
      %v616 = vunpack.c.l.b16 %v478
      %v617 = vunpack.c.l.b16 %v479
      %v618 = vunpack.c.l.b16 %v480
      %v619 = vunpack.c.l.b16 %v481
      %v620 = vunpack.c.l.b16 %v482
      %v621 = vunpack.c.l.b16 %v483
      %v622 = vpack.c.b16 %v607, %v606
      %v623 = vpack.c.b16 %v609, %v608
      %v624 = vpack.c.b16 %v611, %v610
      %v625 = vpack.c.b16 %v613, %v612
      %v626 = vpack.c.b16 %v615, %v614
      %v627 = vpack.c.b16 %v617, %v616
      %v628 = vpack.c.b16 %v619, %v618
      %v629 = vpack.c.b16 %v621, %v620
      %638 = vmatpush.bf16.msra.mxu0 %v629
      %639 = vmatpush.bf16.msra.mxu0 %v628
      %640 = vmatpush.bf16.msra.mxu0 %v627
      %641 = vmatpush.bf16.msra.mxu0 %v626
      %642 = vmatpush.bf16.msra.mxu0 %v625
      %643 = vmatpush.bf16.msra.mxu0 %v624
      %644 = vmatpush.bf16.msra.mxu0 %v623
      %645 = vmatpush.bf16.msra.mxu0 %v622
      %646 = vmatmul.bf16.gmra.mxu0 %v464
      %v647 = vpop.f32.mrf.mxu0
      %v648 = vadd.f32 %v571, %v647
      %v649 = vpop.f32.mrf.mxu0
      %v650 = vadd.f32 %v573, %v649
      %651 = vmatmul.bf16.gmra.mxu0 %v465
      %v652 = vpop.f32.mrf.mxu0
      %v653 = vadd.f32 %v576, %v652
      %v654 = vpop.f32.mrf.mxu0
      %v655 = vadd.f32 %v578, %v654
      %656 = vmatmul.bf16.gmra.mxu0 %v466
      %v657 = vpop.f32.mrf.mxu0
      %v658 = vadd.f32 %v581, %v657
      %v659 = vpop.f32.mrf.mxu0
      %v660 = vadd.f32 %v583, %v659
      %661 = vmatmul.bf16.gmra.mxu0 %v467
      %v662 = vpop.f32.mrf.mxu0
      %v663 = vadd.f32 %v586, %v662
      %v664 = vpop.f32.mrf.mxu0
      %v665 = vadd.f32 %v588, %v664
      %666 = vdwg.mxu0
      %v667 = vld [vmem:[#allocation2 + $0x2] sm:$0xff]
      %v668 = vld [vmem:[#allocation2 + $0x12] sm:$0xff]
      %v669 = vld [vmem:[#allocation2 + $0x22] sm:$0xff]
      %v670 = vld [vmem:[#allocation2 + $0x32] sm:$0xff]
      %v671 = vld [vmem:[#allocation2 + $0x42] sm:$0xff]
      %v672 = vld [vmem:[#allocation2 + $0x52] sm:$0xff]
      %v673 = vld [vmem:[#allocation2 + $0x62] sm:$0xff]
      %v674 = vld [vmem:[#allocation2 + $0x72] sm:$0xff]
      %v675 = vpack.c.bf16 %v668, %v667
      %v676 = vpack.c.bf16 %v670, %v669
      %v677 = vpack.c.bf16 %v672, %v671
      %v678 = vpack.c.bf16 %v674, %v673
      %s679 = scalar_lea.vmem %s3, 128
      %v680 = vld [vmem:[%s679] sm:$0xf]
      %v681 = vld [vmem:[%s679 + $0x4] sm:$0xf]
      %v682 = vld [vmem:[%s679 + $0x8] sm:$0xf]
      %v683 = vld [vmem:[%s679 + $0xc] sm:$0xf]
      %v684 = vld [vmem:[%s679 + $0x10] sm:$0xf]
      %v685 = vld [vmem:[%s679 + $0x14] sm:$0xf]
      %v686 = vld [vmem:[%s679 + $0x18] sm:$0xf]
      %v687 = vld [vmem:[%s679 + $0x1c] sm:$0xf]
      %v688 = vld [vmem:[%s679 + $0x20] sm:$0xf]
      %v689 = vld [vmem:[%s679 + $0x24] sm:$0xf]
      %v690 = vld [vmem:[%s679 + $0x28] sm:$0xf]
      %v691 = vld [vmem:[%s679 + $0x2c] sm:$0xf]
      %v692 = vld [vmem:[%s679 + $0x30] sm:$0xf]
      %v693 = vld [vmem:[%s679 + $0x34] sm:$0xf]
      %v694 = vld [vmem:[%s679 + $0x38] sm:$0xf]
      %v695 = vld [vmem:[%s679 + $0x3c] sm:$0xf]
      %v712 = vunpack.c.l.b16 %v680
      %v713 = vunpack.c.l.b16 %v681
      %v714 = vunpack.c.l.b16 %v682
      %v715 = vunpack.c.l.b16 %v683
      %v716 = vunpack.c.l.b16 %v684
      %v717 = vunpack.c.l.b16 %v685
      %v718 = vunpack.c.l.b16 %v686
      %v719 = vunpack.c.l.b16 %v687
      %v720 = vunpack.c.l.b16 %v688
      %v721 = vunpack.c.l.b16 %v689
      %v722 = vunpack.c.l.b16 %v690
      %v723 = vunpack.c.l.b16 %v691
      %v724 = vunpack.c.l.b16 %v692
      %v725 = vunpack.c.l.b16 %v693
      %v726 = vunpack.c.l.b16 %v694
      %v727 = vunpack.c.l.b16 %v695
      %v728 = vpack.c.b16 %v713, %v712
      %v729 = vpack.c.b16 %v715, %v714
      %v730 = vpack.c.b16 %v717, %v716
      %v731 = vpack.c.b16 %v719, %v718
      %v732 = vpack.c.b16 %v721, %v720
      %v733 = vpack.c.b16 %v723, %v722
      %v734 = vpack.c.b16 %v725, %v724
      %v735 = vpack.c.b16 %v727, %v726
      %744 = vmatpush.bf16.msra.mxu0 %v735
      %745 = vmatpush.bf16.msra.mxu0 %v734
      %746 = vmatpush.bf16.msra.mxu0 %v733
      %747 = vmatpush.bf16.msra.mxu0 %v732
      %748 = vmatpush.bf16.msra.mxu0 %v731
      %749 = vmatpush.bf16.msra.mxu0 %v730
      %750 = vmatpush.bf16.msra.mxu0 %v729
      %751 = vmatpush.bf16.msra.mxu0 %v728
      %752 = vmatmul.bf16.gmra.mxu0 %v675
      %v753 = vpop.f32.mrf.mxu0
      %v754 = vadd.f32 0.0, %v753
      %v755 = vpop.f32.mrf.mxu0
      %v756 = vadd.f32 0.0, %v755
      %757 = vmatmul.bf16.gmra.mxu0 %v676
      %v758 = vpop.f32.mrf.mxu0
      %v759 = vadd.f32 0.0, %v758
      %v760 = vpop.f32.mrf.mxu0
      %v761 = vadd.f32 0.0, %v760
      %762 = vmatmul.bf16.gmra.mxu0 %v677
      %v763 = vpop.f32.mrf.mxu0
      %v764 = vadd.f32 0.0, %v763
      %v765 = vpop.f32.mrf.mxu0
      %v766 = vadd.f32 0.0, %v765
      %767 = vmatmul.bf16.gmra.mxu0 %v678
      %v768 = vpop.f32.mrf.mxu0
      %v769 = vadd.f32 0.0, %v768
      %v770 = vpop.f32.mrf.mxu0
      %v771 = vadd.f32 0.0, %v770
      %772 = vdwg.mxu0
      %v773 = vadd.f32 %v648, %v754
      %v774 = vadd.f32 %v650, %v756
      %v775 = vadd.f32 %v653, %v759
      %v776 = vadd.f32 %v655, %v761
      %v777 = vadd.f32 %v658, %v764
      %v778 = vadd.f32 %v660, %v766
      %v779 = vadd.f32 %v663, %v769
      %v780 = vadd.f32 %v665, %v771
      %v781 = vld [vmem:[%s447] sm:$0xff]
      %v782 = vld [vmem:[%s447 + $0x10] sm:$0xff]
      %v783 = vld [vmem:[%s447 + $0x20] sm:$0xff]
      %v784 = vld [vmem:[%s447 + $0x30] sm:$0xff]
      %v785 = vld [vmem:[%s447 + $0x40] sm:$0xff]
      %v786 = vld [vmem:[%s447 + $0x50] sm:$0xff]
      %v787 = vld [vmem:[%s447 + $0x60] sm:$0xff]
      %v788 = vld [vmem:[%s447 + $0x70] sm:$0xff]
      %v789 = vpack.c.bf16 %v782, %v781
      %v790 = vpack.c.bf16 %v784, %v783
      %v791 = vpack.c.bf16 %v786, %v785
      %v792 = vpack.c.bf16 %v788, %v787
      %s793 = scalar_lea.vmem %s3, 192
      %v794 = vld [vmem:[%s793] sm:$0xf]
      %v795 = vld [vmem:[%s793 + $0x4] sm:$0xf]
      %v796 = vld [vmem:[%s793 + $0x8] sm:$0xf]
      %v797 = vld [vmem:[%s793 + $0xc] sm:$0xf]
      %v798 = vld [vmem:[%s793 + $0x10] sm:$0xf]
      %v799 = vld [vmem:[%s793 + $0x14] sm:$0xf]
      %v800 = vld [vmem:[%s793 + $0x18] sm:$0xf]
      %v801 = vld [vmem:[%s793 + $0x1c] sm:$0xf]
      %v802 = vld [vmem:[%s793 + $0x20] sm:$0xf]
      %v803 = vld [vmem:[%s793 + $0x24] sm:$0xf]
      %v804 = vld [vmem:[%s793 + $0x28] sm:$0xf]
      %v805 = vld [vmem:[%s793 + $0x2c] sm:$0xf]
      %v806 = vld [vmem:[%s793 + $0x30] sm:$0xf]
      %v807 = vld [vmem:[%s793 + $0x34] sm:$0xf]
      %v808 = vld [vmem:[%s793 + $0x38] sm:$0xf]
      %v809 = vld [vmem:[%s793 + $0x3c] sm:$0xf]
      %v826 = vunpack.c.l.b16 %v794
      %v827 = vunpack.c.l.b16 %v795
      %v828 = vunpack.c.l.b16 %v796
      %v829 = vunpack.c.l.b16 %v797
      %v830 = vunpack.c.l.b16 %v798
      %v831 = vunpack.c.l.b16 %v799
      %v832 = vunpack.c.l.b16 %v800
      %v833 = vunpack.c.l.b16 %v801
      %v834 = vunpack.c.l.b16 %v802
      %v835 = vunpack.c.l.b16 %v803
      %v836 = vunpack.c.l.b16 %v804
      %v837 = vunpack.c.l.b16 %v805
      %v838 = vunpack.c.l.b16 %v806
      %v839 = vunpack.c.l.b16 %v807
      %v840 = vunpack.c.l.b16 %v808
      %v841 = vunpack.c.l.b16 %v809
      %v842 = vpack.c.b16 %v827, %v826
      %v843 = vpack.c.b16 %v829, %v828
      %v844 = vpack.c.b16 %v831, %v830
      %v845 = vpack.c.b16 %v833, %v832
      %v846 = vpack.c.b16 %v835, %v834
      %v847 = vpack.c.b16 %v837, %v836
      %v848 = vpack.c.b16 %v839, %v838
      %v849 = vpack.c.b16 %v841, %v840
      %858 = vmatpush.bf16.msra.mxu0 %v849
      %859 = vmatpush.bf16.msra.mxu0 %v848
      %860 = vmatpush.bf16.msra.mxu0 %v847
      %861 = vmatpush.bf16.msra.mxu0 %v846
      %862 = vmatpush.bf16.msra.mxu0 %v845
      %863 = vmatpush.bf16.msra.mxu0 %v844
      %864 = vmatpush.bf16.msra.mxu0 %v843
      %865 = vmatpush.bf16.msra.mxu0 %v842
      %866 = vmatmul.bf16.gmra.mxu0 %v789
      %v867 = vpop.f32.mrf.mxu0
      %v868 = vadd.f32 0.0, %v867
      %v869 = vpop.f32.mrf.mxu0
      %v870 = vadd.f32 0.0, %v869
      %871 = vmatmul.bf16.gmra.mxu0 %v790
      %v872 = vpop.f32.mrf.mxu0
      %v873 = vadd.f32 0.0, %v872
      %v874 = vpop.f32.mrf.mxu0
      %v875 = vadd.f32 0.0, %v874
      %876 = vmatmul.bf16.gmra.mxu0 %v791
      %v877 = vpop.f32.mrf.mxu0
      %v878 = vadd.f32 0.0, %v877
      %v879 = vpop.f32.mrf.mxu0
      %v880 = vadd.f32 0.0, %v879
      %881 = vmatmul.bf16.gmra.mxu0 %v792
      %v882 = vpop.f32.mrf.mxu0
      %v883 = vadd.f32 0.0, %v882
      %v884 = vpop.f32.mrf.mxu0
      %v885 = vadd.f32 0.0, %v884
      %886 = vdwg.mxu0
      %v887 = vadd.f32 %v773, %v868
      %v888 = vadd.f32 %v774, %v870
      %v889 = vadd.f32 %v775, %v873
      %v890 = vadd.f32 %v776, %v875
      %v891 = vadd.f32 %v777, %v878
      %v892 = vadd.f32 %v778, %v880
      %v893 = vadd.f32 %v779, %v883
      %v894 = vadd.f32 %v780, %v885
      %v895 = vld [vmem:[%s447 + $0x1] sm:$0xff]
      %v896 = vld [vmem:[%s447 + $0x11] sm:$0xff]
      %v897 = vld [vmem:[%s447 + $0x21] sm:$0xff]
      %v898 = vld [vmem:[%s447 + $0x31] sm:$0xff]
      %v899 = vld [vmem:[%s447 + $0x41] sm:$0xff]
      %v900 = vld [vmem:[%s447 + $0x51] sm:$0xff]
      %v901 = vld [vmem:[%s447 + $0x61] sm:$0xff]
      %v902 = vld [vmem:[%s447 + $0x71] sm:$0xff]
      %v903 = vpack.c.bf16 %v896, %v895
      %v904 = vpack.c.bf16 %v898, %v897
      %v905 = vpack.c.bf16 %v900, %v899
      %v906 = vpack.c.bf16 %v902, %v901
      %s907 = scalar_lea.vmem %s3, 256
      %v908 = vld [vmem:[%s907] sm:$0xf]
      %v909 = vld [vmem:[%s907 + $0x4] sm:$0xf]
      %v910 = vld [vmem:[%s907 + $0x8] sm:$0xf]
      %v911 = vld [vmem:[%s907 + $0xc] sm:$0xf]
      %v912 = vld [vmem:[%s907 + $0x10] sm:$0xf]
      %v913 = vld [vmem:[%s907 + $0x14] sm:$0xf]
      %v914 = vld [vmem:[%s907 + $0x18] sm:$0xf]
      %v915 = vld [vmem:[%s907 + $0x1c] sm:$0xf]
      %v916 = vld [vmem:[%s907 + $0x20] sm:$0xf]
      %v917 = vld [vmem:[%s907 + $0x24] sm:$0xf]
      %v918 = vld [vmem:[%s907 + $0x28] sm:$0xf]
      %v919 = vld [vmem:[%s907 + $0x2c] sm:$0xf]
      %v920 = vld [vmem:[%s907 + $0x30] sm:$0xf]
      %v921 = vld [vmem:[%s907 + $0x34] sm:$0xf]
      %v922 = vld [vmem:[%s907 + $0x38] sm:$0xf]
      %v923 = vld [vmem:[%s907 + $0x3c] sm:$0xf]
      %v940 = vunpack.c.l.b16 %v908
      %v941 = vunpack.c.l.b16 %v909
      %v942 = vunpack.c.l.b16 %v910
      %v943 = vunpack.c.l.b16 %v911
      %v944 = vunpack.c.l.b16 %v912
      %v945 = vunpack.c.l.b16 %v913
      %v946 = vunpack.c.l.b16 %v914
      %v947 = vunpack.c.l.b16 %v915
      %v948 = vunpack.c.l.b16 %v916
      %v949 = vunpack.c.l.b16 %v917
      %v950 = vunpack.c.l.b16 %v918
      %v951 = vunpack.c.l.b16 %v919
      %v952 = vunpack.c.l.b16 %v920
      %v953 = vunpack.c.l.b16 %v921
      %v954 = vunpack.c.l.b16 %v922
      %v955 = vunpack.c.l.b16 %v923
      %v956 = vpack.c.b16 %v941, %v940
      %v957 = vpack.c.b16 %v943, %v942
      %v958 = vpack.c.b16 %v945, %v944
      %v959 = vpack.c.b16 %v947, %v946
      %v960 = vpack.c.b16 %v949, %v948
      %v961 = vpack.c.b16 %v951, %v950
      %v962 = vpack.c.b16 %v953, %v952
      %v963 = vpack.c.b16 %v955, %v954
      %972 = vmatpush.bf16.msra.mxu0 %v963
      %973 = vmatpush.bf16.msra.mxu0 %v962
      %974 = vmatpush.bf16.msra.mxu0 %v961
      %975 = vmatpush.bf16.msra.mxu0 %v960
      %976 = vmatpush.bf16.msra.mxu0 %v959
      %977 = vmatpush.bf16.msra.mxu0 %v958
      %978 = vmatpush.bf16.msra.mxu0 %v957
      %979 = vmatpush.bf16.msra.mxu0 %v956
      %980 = vmatmul.bf16.gmra.mxu0 %v903
      %v981 = vpop.f32.mrf.mxu0
      %v982 = vadd.f32 0.0, %v981
      %v983 = vpop.f32.mrf.mxu0
      %v984 = vadd.f32 0.0, %v983
      %985 = vmatmul.bf16.gmra.mxu0 %v904
      %v986 = vpop.f32.mrf.mxu0
      %v987 = vadd.f32 0.0, %v986
      %v988 = vpop.f32.mrf.mxu0
      %v989 = vadd.f32 0.0, %v988
      %990 = vmatmul.bf16.gmra.mxu0 %v905
      %v991 = vpop.f32.mrf.mxu0
      %v992 = vadd.f32 0.0, %v991
      %v993 = vpop.f32.mrf.mxu0
      %v994 = vadd.f32 0.0, %v993
      %995 = vmatmul.bf16.gmra.mxu0 %v906
      %v996 = vpop.f32.mrf.mxu0
      %v997 = vadd.f32 0.0, %v996
      %v998 = vpop.f32.mrf.mxu0
      %v999 = vadd.f32 0.0, %v998
      %1000 = vdwg.mxu0
      %v1001 = vadd.f32 %v887, %v982
      %v1002 = vadd.f32 %v888, %v984
      %v1003 = vadd.f32 %v889, %v987
      %v1004 = vadd.f32 %v890, %v989
      %v1005 = vadd.f32 %v891, %v992
      %v1006 = vadd.f32 %v892, %v994
      %v1007 = vadd.f32 %v893, %v997
      %v1008 = vadd.f32 %v894, %v999
      %v1009 = vld [vmem:[%s447 + $0x2] sm:$0xff]
      %v1010 = vld [vmem:[%s447 + $0x12] sm:$0xff]
      %v1011 = vld [vmem:[%s447 + $0x22] sm:$0xff]
      %v1012 = vld [vmem:[%s447 + $0x32] sm:$0xff]
      %v1013 = vld [vmem:[%s447 + $0x42] sm:$0xff]
      %v1014 = vld [vmem:[%s447 + $0x52] sm:$0xff]
      %v1015 = vld [vmem:[%s447 + $0x62] sm:$0xff]
      %v1016 = vld [vmem:[%s447 + $0x72] sm:$0xff]
      %v1017 = vpack.c.bf16 %v1010, %v1009
      %v1018 = vpack.c.bf16 %v1012, %v1011
      %v1019 = vpack.c.bf16 %v1014, %v1013
      %v1020 = vpack.c.bf16 %v1016, %v1015
      %s1021 = scalar_lea.vmem %s3, 320
      %v1022 = vld [vmem:[%s1021] sm:$0xf]
      %v1023 = vld [vmem:[%s1021 + $0x4] sm:$0xf]
      %v1024 = vld [vmem:[%s1021 + $0x8] sm:$0xf]
      %v1025 = vld [vmem:[%s1021 + $0xc] sm:$0xf]
      %v1026 = vld [vmem:[%s1021 + $0x10] sm:$0xf]
      %v1027 = vld [vmem:[%s1021 + $0x14] sm:$0xf]
      %v1028 = vld [vmem:[%s1021 + $0x18] sm:$0xf]
      %v1029 = vld [vmem:[%s1021 + $0x1c] sm:$0xf]
      %v1030 = vld [vmem:[%s1021 + $0x20] sm:$0xf]
      %v1031 = vld [vmem:[%s1021 + $0x24] sm:$0xf]
      %v1032 = vld [vmem:[%s1021 + $0x28] sm:$0xf]
      %v1033 = vld [vmem:[%s1021 + $0x2c] sm:$0xf]
      %v1034 = vld [vmem:[%s1021 + $0x30] sm:$0xf]
      %v1035 = vld [vmem:[%s1021 + $0x34] sm:$0xf]
      %v1036 = vld [vmem:[%s1021 + $0x38] sm:$0xf]
      %v1037 = vld [vmem:[%s1021 + $0x3c] sm:$0xf]
      %v1054 = vunpack.c.l.b16 %v1022
      %v1055 = vunpack.c.l.b16 %v1023
      %v1056 = vunpack.c.l.b16 %v1024
      %v1057 = vunpack.c.l.b16 %v1025
      %v1058 = vunpack.c.l.b16 %v1026
      %v1059 = vunpack.c.l.b16 %v1027
      %v1060 = vunpack.c.l.b16 %v1028
      %v1061 = vunpack.c.l.b16 %v1029
      %v1062 = vunpack.c.l.b16 %v1030
      %v1063 = vunpack.c.l.b16 %v1031
      %v1064 = vunpack.c.l.b16 %v1032
      %v1065 = vunpack.c.l.b16 %v1033
      %v1066 = vunpack.c.l.b16 %v1034
      %v1067 = vunpack.c.l.b16 %v1035
      %v1068 = vunpack.c.l.b16 %v1036
      %v1069 = vunpack.c.l.b16 %v1037
      %v1070 = vpack.c.b16 %v1055, %v1054
      %v1071 = vpack.c.b16 %v1057, %v1056
      %v1072 = vpack.c.b16 %v1059, %v1058
      %v1073 = vpack.c.b16 %v1061, %v1060
      %v1074 = vpack.c.b16 %v1063, %v1062
      %v1075 = vpack.c.b16 %v1065, %v1064
      %v1076 = vpack.c.b16 %v1067, %v1066
      %v1077 = vpack.c.b16 %v1069, %v1068
      %1086 = vmatpush.bf16.msra.mxu0 %v1077
      %1087 = vmatpush.bf16.msra.mxu0 %v1076
      %1088 = vmatpush.bf16.msra.mxu0 %v1075
      %1089 = vmatpush.bf16.msra.mxu0 %v1074
      %1090 = vmatpush.bf16.msra.mxu0 %v1073
      %1091 = vmatpush.bf16.msra.mxu0 %v1072
      %1092 = vmatpush.bf16.msra.mxu0 %v1071
      %1093 = vmatpush.bf16.msra.mxu0 %v1070
      %1094 = vmatmul.bf16.gmra.mxu0 %v1017
      %v1095 = vpop.f32.mrf.mxu0
      %v1096 = vadd.f32 0.0, %v1095
      %v1097 = vpop.f32.mrf.mxu0
      %v1098 = vadd.f32 0.0, %v1097
      %1099 = vmatmul.bf16.gmra.mxu0 %v1018
      %v1100 = vpop.f32.mrf.mxu0
      %v1101 = vadd.f32 0.0, %v1100
      %v1102 = vpop.f32.mrf.mxu0
      %v1103 = vadd.f32 0.0, %v1102
      %1104 = vmatmul.bf16.gmra.mxu0 %v1019
      %v1105 = vpop.f32.mrf.mxu0
      %v1106 = vadd.f32 0.0, %v1105
      %v1107 = vpop.f32.mrf.mxu0
      %v1108 = vadd.f32 0.0, %v1107
      %1109 = vmatmul.bf16.gmra.mxu0 %v1020
      %v1110 = vpop.f32.mrf.mxu0
      %v1111 = vadd.f32 0.0, %v1110
      %v1112 = vpop.f32.mrf.mxu0
      %v1113 = vadd.f32 0.0, %v1112
      %1114 = vdwg.mxu0
      %v1115 = vadd.f32 %v1001, %v1096
      %v1116 = vadd.f32 %v1002, %v1098
      %v1117 = vadd.f32 %v1003, %v1101
      %v1118 = vadd.f32 %v1004, %v1103
      %v1119 = vadd.f32 %v1005, %v1106
      %v1120 = vadd.f32 %v1006, %v1108
      %v1121 = vadd.f32 %v1007, %v1111
      %v1122 = vadd.f32 %v1008, %v1113
      %s1123 = scalar_lea.vmem [#allocation2], 32
      %v1124 = vld [vmem:[%s1123] sm:$0xff]
      %v1125 = vld [vmem:[%s1123 + $0x10] sm:$0xff]
      %v1126 = vld [vmem:[%s1123 + $0x20] sm:$0xff]
      %v1127 = vld [vmem:[%s1123 + $0x30] sm:$0xff]
      %v1128 = vld [vmem:[%s1123 + $0x40] sm:$0xff]
      %v1129 = vld [vmem:[%s1123 + $0x50] sm:$0xff]
      %v1130 = vld [vmem:[%s1123 + $0x60] sm:$0xff]
      %v1131 = vld [vmem:[%s1123 + $0x70] sm:$0xff]
      %v1132 = vpack.c.bf16 %v1125, %v1124
      %v1133 = vpack.c.bf16 %v1127, %v1126
      %v1134 = vpack.c.bf16 %v1129, %v1128
      %v1135 = vpack.c.bf16 %v1131, %v1130
      %s1136 = scalar_lea.vmem %s3, 384
      %v1137 = vld [vmem:[%s1136] sm:$0xf]
      %v1138 = vld [vmem:[%s1136 + $0x4] sm:$0xf]
      %v1139 = vld [vmem:[%s1136 + $0x8] sm:$0xf]
      %v1140 = vld [vmem:[%s1136 + $0xc] sm:$0xf]
      %v1141 = vld [vmem:[%s1136 + $0x10] sm:$0xf]
      %v1142 = vld [vmem:[%s1136 + $0x14] sm:$0xf]
      %v1143 = vld [vmem:[%s1136 + $0x18] sm:$0xf]
      %v1144 = vld [vmem:[%s1136 + $0x1c] sm:$0xf]
      %v1145 = vld [vmem:[%s1136 + $0x20] sm:$0xf]
      %v1146 = vld [vmem:[%s1136 + $0x24] sm:$0xf]
      %v1147 = vld [vmem:[%s1136 + $0x28] sm:$0xf]
      %v1148 = vld [vmem:[%s1136 + $0x2c] sm:$0xf]
      %v1149 = vld [vmem:[%s1136 + $0x30] sm:$0xf]
      %v1150 = vld [vmem:[%s1136 + $0x34] sm:$0xf]
      %v1151 = vld [vmem:[%s1136 + $0x38] sm:$0xf]
      %v1152 = vld [vmem:[%s1136 + $0x3c] sm:$0xf]
      %v1169 = vunpack.c.l.b16 %v1137
      %v1170 = vunpack.c.l.b16 %v1138
      %v1171 = vunpack.c.l.b16 %v1139
      %v1172 = vunpack.c.l.b16 %v1140
      %v1173 = vunpack.c.l.b16 %v1141
      %v1174 = vunpack.c.l.b16 %v1142
      %v1175 = vunpack.c.l.b16 %v1143
      %v1176 = vunpack.c.l.b16 %v1144
      %v1177 = vunpack.c.l.b16 %v1145
      %v1178 = vunpack.c.l.b16 %v1146
      %v1179 = vunpack.c.l.b16 %v1147
      %v1180 = vunpack.c.l.b16 %v1148
      %v1181 = vunpack.c.l.b16 %v1149
      %v1182 = vunpack.c.l.b16 %v1150
      %v1183 = vunpack.c.l.b16 %v1151
      %v1184 = vunpack.c.l.b16 %v1152
      %v1185 = vpack.c.b16 %v1170, %v1169
      %v1186 = vpack.c.b16 %v1172, %v1171
      %v1187 = vpack.c.b16 %v1174, %v1173
      %v1188 = vpack.c.b16 %v1176, %v1175
      %v1189 = vpack.c.b16 %v1178, %v1177
      %v1190 = vpack.c.b16 %v1180, %v1179
      %v1191 = vpack.c.b16 %v1182, %v1181
      %v1192 = vpack.c.b16 %v1184, %v1183
      %1201 = vmatpush.bf16.msra.mxu0 %v1192
      %1202 = vmatpush.bf16.msra.mxu0 %v1191
      %1203 = vmatpush.bf16.msra.mxu0 %v1190
      %1204 = vmatpush.bf16.msra.mxu0 %v1189
      %1205 = vmatpush.bf16.msra.mxu0 %v1188
      %1206 = vmatpush.bf16.msra.mxu0 %v1187
      %1207 = vmatpush.bf16.msra.mxu0 %v1186
      %1208 = vmatpush.bf16.msra.mxu0 %v1185
      %1209 = vmatmul.bf16.gmra.mxu0 %v1132
      %v1210 = vpop.f32.mrf.mxu0
      %v1211 = vadd.f32 0.0, %v1210
      %v1212 = vpop.f32.mrf.mxu0
      %v1213 = vadd.f32 0.0, %v1212
      %1214 = vmatmul.bf16.gmra.mxu0 %v1133
      %v1215 = vpop.f32.mrf.mxu0
      %v1216 = vadd.f32 0.0, %v1215
      %v1217 = vpop.f32.mrf.mxu0
      %v1218 = vadd.f32 0.0, %v1217
      %1219 = vmatmul.bf16.gmra.mxu0 %v1134
      %v1220 = vpop.f32.mrf.mxu0
      %v1221 = vadd.f32 0.0, %v1220
      %v1222 = vpop.f32.mrf.mxu0
      %v1223 = vadd.f32 0.0, %v1222
      %1224 = vmatmul.bf16.gmra.mxu0 %v1135
      %v1225 = vpop.f32.mrf.mxu0
      %v1226 = vadd.f32 0.0, %v1225
      %v1227 = vpop.f32.mrf.mxu0
      %v1228 = vadd.f32 0.0, %v1227
      %1229 = vdwg.mxu0
      %v1230 = vadd.f32 %v1115, %v1211
      %v1231 = vadd.f32 %v1116, %v1213
      %v1232 = vadd.f32 %v1117, %v1216
      %v1233 = vadd.f32 %v1118, %v1218
      %v1234 = vadd.f32 %v1119, %v1221
      %v1235 = vadd.f32 %v1120, %v1223
      %v1236 = vadd.f32 %v1121, %v1226
      %v1237 = vadd.f32 %v1122, %v1228
      %v1238 = vld [vmem:[%s1123 + $0x1] sm:$0xff]
      %v1239 = vld [vmem:[%s1123 + $0x11] sm:$0xff]
      %v1240 = vld [vmem:[%s1123 + $0x21] sm:$0xff]
      %v1241 = vld [vmem:[%s1123 + $0x31] sm:$0xff]
      %v1242 = vld [vmem:[%s1123 + $0x41] sm:$0xff]
      %v1243 = vld [vmem:[%s1123 + $0x51] sm:$0xff]
      %v1244 = vld [vmem:[%s1123 + $0x61] sm:$0xff]
      %v1245 = vld [vmem:[%s1123 + $0x71] sm:$0xff]
      %v1246 = vpack.c.bf16 %v1239, %v1238
      %v1247 = vpack.c.bf16 %v1241, %v1240
      %v1248 = vpack.c.bf16 %v1243, %v1242
      %v1249 = vpack.c.bf16 %v1245, %v1244
      %s1250 = scalar_lea.vmem %s3, 448
      %v1251 = vld [vmem:[%s1250] sm:$0xf]
      %v1252 = vld [vmem:[%s1250 + $0x4] sm:$0xf]
      %v1253 = vld [vmem:[%s1250 + $0x8] sm:$0xf]
      %v1254 = vld [vmem:[%s1250 + $0xc] sm:$0xf]
      %v1255 = vld [vmem:[%s1250 + $0x10] sm:$0xf]
      %v1256 = vld [vmem:[%s1250 + $0x14] sm:$0xf]
      %v1257 = vld [vmem:[%s1250 + $0x18] sm:$0xf]
      %v1258 = vld [vmem:[%s1250 + $0x1c] sm:$0xf]
      %v1259 = vld [vmem:[%s1250 + $0x20] sm:$0xf]
      %v1260 = vld [vmem:[%s1250 + $0x24] sm:$0xf]
      %v1261 = vld [vmem:[%s1250 + $0x28] sm:$0xf]
      %v1262 = vld [vmem:[%s1250 + $0x2c] sm:$0xf]
      %v1263 = vld [vmem:[%s1250 + $0x30] sm:$0xf]
      %v1264 = vld [vmem:[%s1250 + $0x34] sm:$0xf]
      %v1265 = vld [vmem:[%s1250 + $0x38] sm:$0xf]
      %v1266 = vld [vmem:[%s1250 + $0x3c] sm:$0xf]
      %v1283 = vunpack.c.l.b16 %v1251
      %v1284 = vunpack.c.l.b16 %v1252
      %v1285 = vunpack.c.l.b16 %v1253
      %v1286 = vunpack.c.l.b16 %v1254
      %v1287 = vunpack.c.l.b16 %v1255
      %v1288 = vunpack.c.l.b16 %v1256
      %v1289 = vunpack.c.l.b16 %v1257
      %v1290 = vunpack.c.l.b16 %v1258
      %v1291 = vunpack.c.l.b16 %v1259
      %v1292 = vunpack.c.l.b16 %v1260
      %v1293 = vunpack.c.l.b16 %v1261
      %v1294 = vunpack.c.l.b16 %v1262
      %v1295 = vunpack.c.l.b16 %v1263
      %v1296 = vunpack.c.l.b16 %v1264
      %v1297 = vunpack.c.l.b16 %v1265
      %v1298 = vunpack.c.l.b16 %v1266
      %v1299 = vpack.c.b16 %v1284, %v1283
      %v1300 = vpack.c.b16 %v1286, %v1285
      %v1301 = vpack.c.b16 %v1288, %v1287
      %v1302 = vpack.c.b16 %v1290, %v1289
      %v1303 = vpack.c.b16 %v1292, %v1291
      %v1304 = vpack.c.b16 %v1294, %v1293
      %v1305 = vpack.c.b16 %v1296, %v1295
      %v1306 = vpack.c.b16 %v1298, %v1297
      %1315 = vmatpush.bf16.msra.mxu0 %v1306
      %1316 = vmatpush.bf16.msra.mxu0 %v1305
      %1317 = vmatpush.bf16.msra.mxu0 %v1304
      %1318 = vmatpush.bf16.msra.mxu0 %v1303
      %1319 = vmatpush.bf16.msra.mxu0 %v1302
      %1320 = vmatpush.bf16.msra.mxu0 %v1301
      %1321 = vmatpush.bf16.msra.mxu0 %v1300
      %1322 = vmatpush.bf16.msra.mxu0 %v1299
      %1323 = vmatmul.bf16.gmra.mxu0 %v1246
      %v1324 = vpop.f32.mrf.mxu0
      %v1325 = vadd.f32 0.0, %v1324
      %v1326 = vpop.f32.mrf.mxu0
      %v1327 = vadd.f32 0.0, %v1326
      %1328 = vmatmul.bf16.gmra.mxu0 %v1247
      %v1329 = vpop.f32.mrf.mxu0
      %v1330 = vadd.f32 0.0, %v1329
      %v1331 = vpop.f32.mrf.mxu0
      %v1332 = vadd.f32 0.0, %v1331
      %1333 = vmatmul.bf16.gmra.mxu0 %v1248
      %v1334 = vpop.f32.mrf.mxu0
      %v1335 = vadd.f32 0.0, %v1334
      %v1336 = vpop.f32.mrf.mxu0
      %v1337 = vadd.f32 0.0, %v1336
      %1338 = vmatmul.bf16.gmra.mxu0 %v1249
      %v1339 = vpop.f32.mrf.mxu0
      %v1340 = vadd.f32 0.0, %v1339
      %v1341 = vpop.f32.mrf.mxu0
      %v1342 = vadd.f32 0.0, %v1341
      %1343 = vdwg.mxu0
      %v1344 = vadd.f32 %v1230, %v1325
      %v1345 = vadd.f32 %v1231, %v1327
      %v1346 = vadd.f32 %v1232, %v1330
      %v1347 = vadd.f32 %v1233, %v1332
      %v1348 = vadd.f32 %v1234, %v1335
      %v1349 = vadd.f32 %v1235, %v1337
      %v1350 = vadd.f32 %v1236, %v1340
      %v1351 = vadd.f32 %v1237, %v1342
      %v1352 = vld [vmem:[%s1123 + $0x2] sm:$0xff]
      %v1353 = vld [vmem:[%s1123 + $0x12] sm:$0xff]
      %v1354 = vld [vmem:[%s1123 + $0x22] sm:$0xff]
      %v1355 = vld [vmem:[%s1123 + $0x32] sm:$0xff]
      %v1356 = vld [vmem:[%s1123 + $0x42] sm:$0xff]
      %v1357 = vld [vmem:[%s1123 + $0x52] sm:$0xff]
      %v1358 = vld [vmem:[%s1123 + $0x62] sm:$0xff]
      %v1359 = vld [vmem:[%s1123 + $0x72] sm:$0xff]
      %v1360 = vpack.c.bf16 %v1353, %v1352
      %v1361 = vpack.c.bf16 %v1355, %v1354
      %v1362 = vpack.c.bf16 %v1357, %v1356
      %v1363 = vpack.c.bf16 %v1359, %v1358
      %s1364 = scalar_lea.vmem %s3, 512
      %v1365 = vld [vmem:[%s1364] sm:$0xf]
      %v1366 = vld [vmem:[%s1364 + $0x4] sm:$0xf]
      %v1367 = vld [vmem:[%s1364 + $0x8] sm:$0xf]
      %v1368 = vld [vmem:[%s1364 + $0xc] sm:$0xf]
      %v1369 = vld [vmem:[%s1364 + $0x10] sm:$0xf]
      %v1370 = vld [vmem:[%s1364 + $0x14] sm:$0xf]
      %v1371 = vld [vmem:[%s1364 + $0x18] sm:$0xf]
      %v1372 = vld [vmem:[%s1364 + $0x1c] sm:$0xf]
      %v1373 = vld [vmem:[%s1364 + $0x20] sm:$0xf]
      %v1374 = vld [vmem:[%s1364 + $0x24] sm:$0xf]
      %v1375 = vld [vmem:[%s1364 + $0x28] sm:$0xf]
      %v1376 = vld [vmem:[%s1364 + $0x2c] sm:$0xf]
      %v1377 = vld [vmem:[%s1364 + $0x30] sm:$0xf]
      %v1378 = vld [vmem:[%s1364 + $0x34] sm:$0xf]
      %v1379 = vld [vmem:[%s1364 + $0x38] sm:$0xf]
      %v1380 = vld [vmem:[%s1364 + $0x3c] sm:$0xf]
      %v1397 = vunpack.c.l.b16 %v1365
      %v1398 = vunpack.c.l.b16 %v1366
      %v1399 = vunpack.c.l.b16 %v1367
      %v1400 = vunpack.c.l.b16 %v1368
      %v1401 = vunpack.c.l.b16 %v1369
      %v1402 = vunpack.c.l.b16 %v1370
      %v1403 = vunpack.c.l.b16 %v1371
      %v1404 = vunpack.c.l.b16 %v1372
      %v1405 = vunpack.c.l.b16 %v1373
      %v1406 = vunpack.c.l.b16 %v1374
      %v1407 = vunpack.c.l.b16 %v1375
      %v1408 = vunpack.c.l.b16 %v1376
      %v1409 = vunpack.c.l.b16 %v1377
      %v1410 = vunpack.c.l.b16 %v1378
      %v1411 = vunpack.c.l.b16 %v1379
      %v1412 = vunpack.c.l.b16 %v1380
      %v1413 = vpack.c.b16 %v1398, %v1397
      %v1414 = vpack.c.b16 %v1400, %v1399
      %v1415 = vpack.c.b16 %v1402, %v1401
      %v1416 = vpack.c.b16 %v1404, %v1403
      %v1417 = vpack.c.b16 %v1406, %v1405
      %v1418 = vpack.c.b16 %v1408, %v1407
      %v1419 = vpack.c.b16 %v1410, %v1409
      %v1420 = vpack.c.b16 %v1412, %v1411
      %1429 = vmatpush.bf16.msra.mxu0 %v1420
      %1430 = vmatpush.bf16.msra.mxu0 %v1419
      %1431 = vmatpush.bf16.msra.mxu0 %v1418
      %1432 = vmatpush.bf16.msra.mxu0 %v1417
      %1433 = vmatpush.bf16.msra.mxu0 %v1416
      %1434 = vmatpush.bf16.msra.mxu0 %v1415
      %1435 = vmatpush.bf16.msra.mxu0 %v1414
      %1436 = vmatpush.bf16.msra.mxu0 %v1413
      %1437 = vmatmul.bf16.gmra.mxu0 %v1360
      %v1438 = vpop.f32.mrf.mxu0
      %v1439 = vadd.f32 0.0, %v1438
      %v1440 = vpop.f32.mrf.mxu0
      %v1441 = vadd.f32 0.0, %v1440
      %1442 = vmatmul.bf16.gmra.mxu0 %v1361
      %v1443 = vpop.f32.mrf.mxu0
      %v1444 = vadd.f32 0.0, %v1443
      %v1445 = vpop.f32.mrf.mxu0
      %v1446 = vadd.f32 0.0, %v1445
      %1447 = vmatmul.bf16.gmra.mxu0 %v1362
      %v1448 = vpop.f32.mrf.mxu0
      %v1449 = vadd.f32 0.0, %v1448
      %v1450 = vpop.f32.mrf.mxu0
      %v1451 = vadd.f32 0.0, %v1450
      %1452 = vmatmul.bf16.gmra.mxu0 %v1363
      %v1453 = vpop.f32.mrf.mxu0
      %v1454 = vadd.f32 0.0, %v1453
      %v1455 = vpop.f32.mrf.mxu0
      %v1456 = vadd.f32 0.0, %v1455
      %1457 = vdwg.mxu0
      %v1458 = vadd.f32 %v1344, %v1439
      %v1459 = vadd.f32 %v1345, %v1441
      %v1460 = vadd.f32 %v1346, %v1444
      %v1461 = vadd.f32 %v1347, %v1446
      %v1462 = vadd.f32 %v1348, %v1449
      %v1463 = vadd.f32 %v1349, %v1451
      %v1464 = vadd.f32 %v1350, %v1454
      %v1465 = vadd.f32 %v1351, %v1456
      %1466 = vst [vmem:[%s372] sm:$0xff] %v1458
      %1467 = vst [vmem:[%s372 + $0x8] sm:$0xff] %v1459
      %1468 = vst [vmem:[%s372 + $0x10] sm:$0xff] %v1460
      %1469 = vst [vmem:[%s372 + $0x18] sm:$0xff] %v1461
      %1470 = vst [vmem:[%s372 + $0x20] sm:$0xff] %v1462
      %1471 = vst [vmem:[%s372 + $0x28] sm:$0xff] %v1463
      %1472 = vst [vmem:[%s372 + $0x30] sm:$0xff] %v1464
      %1473 = vst [vmem:[%s372 + $0x38] sm:$0xff] %v1465
      %v1474 = vadd.f32 %v1458, %v1459
      %v1475 = vadd.f32 %v1474, %v1460
      %v1476 = vadd.f32 %v1475, %v1461
      %v1477 = vadd.f32 %v1476, %v1462
      %v1478 = vadd.f32 %v1477, %v1463
      %v1479 = vadd.f32 %v1478, %v1464
      %v1480 = vadd.f32 %v1479, %v1465
      %v1481 = vrot.slane %v1480, 4
      %v1482 = vadd.f32 %v1480, %v1481
      %v1483 = vrot.slane %v1482, 2
      %v1484 = vadd.f32 %v1482, %v1483
      %v1485 = vrot.slane %v1484, 1
      %v1486 = vadd.f32 %v1484, %v1485
      %v1487 = vmul.f32 %v1458, %v1458
      %v1488 = vmul.f32 %v1459, %v1459
      %v1489 = vmul.f32 %v1460, %v1460
      %v1490 = vmul.f32 %v1461, %v1461
      %v1491 = vmul.f32 %v1462, %v1462
      %v1492 = vmul.f32 %v1463, %v1463
      %v1493 = vmul.f32 %v1464, %v1464
      %v1494 = vmul.f32 %v1465, %v1465
      %v1495 = vadd.f32 %v1487, %v1488
      %v1496 = vadd.f32 %v1495, %v1489
      %v1497 = vadd.f32 %v1496, %v1490
      %v1498 = vadd.f32 %v1497, %v1491
      %v1499 = vadd.f32 %v1498, %v1492
      %v1500 = vadd.f32 %v1499, %v1493
      %v1501 = vadd.f32 %v1500, %v1494
      %v1502 = vrot.slane %v1501, 4
      %v1503 = vadd.f32 %v1501, %v1502
      %v1504 = vrot.slane %v1503, 2
      %v1505 = vadd.f32 %v1503, %v1504
      %v1506 = vrot.slane %v1505, 1
      %v1507 = vadd.f32 %v1505, %v1506
      %vm1508 = vcmask 1040384
      %v1509 = vsel %vm1508, %v1486, %v1507
      %1510 = vst [vmem:[%s376] sm:$0x3] %v1509
      %v1511 = vld [vmem:[%s367] sm:$0xf]
      %v1512 = vld [vmem:[%s367 + $0x4] sm:$0xf]
      %v1513 = vld [vmem:[%s367 + $0x8] sm:$0xf]
      %v1514 = vld [vmem:[%s367 + $0xc] sm:$0xf]
      %v1515 = vld [vmem:[%s367 + $0x10] sm:$0xf]
      %v1516 = vld [vmem:[%s367 + $0x14] sm:$0xf]
      %v1517 = vld [vmem:[%s367 + $0x18] sm:$0xf]
      %v1518 = vld [vmem:[%s367 + $0x1c] sm:$0xf]
      %v1519 = vld [vmem:[%s5] sm:$0x3]
      %v1528 = vunpack.c.l.b16 %v1511
      %v1529 = vunpack.c.l.b16 %v1512
      %v1530 = vunpack.c.l.b16 %v1513
      %v1531 = vunpack.c.l.b16 %v1514
      %v1532 = vunpack.c.l.b16 %v1515
      %v1533 = vunpack.c.l.b16 %v1516
      %v1534 = vunpack.c.l.b16 %v1517
      %v1535 = vunpack.c.l.b16 %v1518
      %v1536 = vpack.c.b16 %v1529, %v1528
      %v1537 = vpack.c.b16 %v1531, %v1530
      %v1538 = vpack.c.b16 %v1533, %v1532
      %v1539 = vpack.c.b16 %v1535, %v1534
      %vm1540 = vcmask 31744
      %v1542 = vsel %vm1540, %v1536, 0
      %v1545 = vsel %vm1540, %v1537, 0
      %v1548 = vsel %vm1540, %v1538, 0
      %v1551 = vsel %vm1540, %v1539, 0
      %vm1553 = vcmask 1041408
      %v1555 = vsel %vm1553, %v1519, 0
      %1557 = vmatpush.bf16.msra.mxu0 0
      %1558 = vmatpush.bf16.msra.mxu0 0
      %1559 = vmatpush.bf16.msra.mxu0 0
      %1560 = vmatpush.bf16.msra.mxu0 0
      %1561 = vmatpush.bf16.msra.mxu0 0
      %1562 = vmatpush.bf16.msra.mxu0 0
      %1563 = vmatpush.bf16.msra.mxu0 0
      %1564 = vmatpush.bf16.msra.mxu0 %v1555
      %1565 = vmatmul.bf16.gmra.mxu0 %v1542
      %v1566 = vpop.f32.mrf.mxu0
      %v1567 = vadd.f32 0.0, %v1566
      %v1568 = vpop.f32.mrf.mxu0
      %v1569 = vadd.f32 0.0, %v1568
      %1570 = vmatmul.bf16.gmra.mxu0 %v1545
      %v1571 = vpop.f32.mrf.mxu0
      %v1572 = vadd.f32 0.0, %v1571
      %v1573 = vpop.f32.mrf.mxu0
      %v1574 = vadd.f32 0.0, %v1573
      %1575 = vmatmul.bf16.gmra.mxu0 %v1548
      %v1576 = vpop.f32.mrf.mxu0
      %v1577 = vadd.f32 0.0, %v1576
      %v1578 = vpop.f32.mrf.mxu0
      %v1579 = vadd.f32 0.0, %v1578
      %1580 = vmatmul.bf16.gmra.mxu0 %v1551
      %v1581 = vpop.f32.mrf.mxu0
      %v1582 = vadd.f32 0.0, %v1581
      %v1583 = vpop.f32.mrf.mxu0
      %v1584 = vadd.f32 0.0, %v1583
      %1585 = vdwg.mxu0
      %1586 = vst [vmem:[%s381] sm:$0xff] %v1567
      %1587 = vst [vmem:[%s381 + $0x8] sm:$0xff] %v1569
      %1588 = vst [vmem:[%s381 + $0x10] sm:$0xff] %v1572
      %1589 = vst [vmem:[%s381 + $0x18] sm:$0xff] %v1574
      %1590 = vst [vmem:[%s381 + $0x20] sm:$0xff] %v1577
      %1591 = vst [vmem:[%s381 + $0x28] sm:$0xff] %v1579
      %1592 = vst [vmem:[%s381 + $0x30] sm:$0xff] %v1582
      %1593 = vst [vmem:[%s381 + $0x38] sm:$0xff] %v1584
      %v1594 = vadd.f32 %v1567, %v1569
      %v1595 = vadd.f32 %v1594, %v1572
      %v1596 = vadd.f32 %v1595, %v1574
      %v1597 = vadd.f32 %v1596, %v1577
      %v1598 = vadd.f32 %v1597, %v1579
      %v1599 = vadd.f32 %v1598, %v1582
      %v1600 = vadd.f32 %v1599, %v1584
      %v1601 = vrot.slane %v1600, 4
      %v1602 = vadd.f32 %v1600, %v1601
      %v1603 = vrot.slane %v1602, 2
      %v1604 = vadd.f32 %v1602, %v1603
      %v1605 = vrot.slane %v1604, 1
      %v1606 = vadd.f32 %v1604, %v1605
      %v1607 = vmul.f32 %v1567, %v1567
      %v1608 = vmul.f32 %v1569, %v1569
      %v1609 = vmul.f32 %v1572, %v1572
      %v1610 = vmul.f32 %v1574, %v1574
      %v1611 = vmul.f32 %v1577, %v1577
      %v1612 = vmul.f32 %v1579, %v1579
      %v1613 = vmul.f32 %v1582, %v1582
      %v1614 = vmul.f32 %v1584, %v1584
      %v1615 = vadd.f32 %v1607, %v1608
      %v1616 = vadd.f32 %v1615, %v1609
      %v1617 = vadd.f32 %v1616, %v1610
      %v1618 = vadd.f32 %v1617, %v1611
      %v1619 = vadd.f32 %v1618, %v1612
      %v1620 = vadd.f32 %v1619, %v1613
      %v1621 = vadd.f32 %v1620, %v1614
      %v1622 = vrot.slane %v1621, 4
      %v1623 = vadd.f32 %v1621, %v1622
      %v1624 = vrot.slane %v1623, 2
      %v1625 = vadd.f32 %v1623, %v1624
      %v1626 = vrot.slane %v1625, 1
      %v1627 = vadd.f32 %v1625, %v1626
      %v1628 = vsel %vm1508, %v1606, %v1627
      %1629 = vst [vmem:[%s385] sm:$0x3] %v1628
      %p1630 = scmp.lt.s32.totalorder %s21, 1
      %s1631 = scalar_select %p1630, %s21, 1
      %s1632 = smul.addr %s1631, 8
      %s1633 = smul.addr %s1632, 8
      %s1634 = scalar_lea.vmem %s6, %s1633
      %p1635 = scmp.lt.s32.totalorder %s21, 1
      %s1636 = scalar_select %p1635, %s21, 1
      %s1637 = smul.addr %s1636, 2
      %s1638 = scalar_lea.vmem %s7, %s1637
      %p1639 = scmp.lt.s32.totalorder %s21, 1
      %s1640 = scalar_select %p1639, %s21, 1
      %s1641 = smul.addr %s1640, 8
      %s1642 = smul.addr %s1641, 8
      %s1643 = scalar_lea.vmem %s8, %s1642
      %p1644 = scmp.lt.s32.totalorder %s21, 1
      %s1645 = scalar_select %p1644, %s21, 1
      %s1646 = smul.addr %s1645, 2
      %s1647 = scalar_lea.vmem %s9, %s1646
      // Predicated region
      $region45: #{basic_block_forward.4} parent=43 // pred_check
        %p1648 = pneg %p175
      $region46: #{basic_block_forward.4} parent=43 // pred_check_branch
        %1650 = sbr.rel (%p1648) target = $region48
      $region47: #{basic_block_forward.4} parent=43 // pred_region
        _
      $region48: #{basic_block_forward.4} parent=43 // pred_fallthru
        _
      // Predicated region
      $region49: #{basic_block_forward.4} parent=43 // pred_check
        %p1651 = pneg %p201
      $region50: #{basic_block_forward.4} parent=43 // pred_check_branch
        %1653 = sbr.rel (%p1651) target = $region52
      $region51: #{basic_block_forward.4} parent=43 // pred_region
        _
      $region52: #{basic_block_forward.4} parent=43 // pred_fallthru
        _
      // Predicated region
      $region53: #{basic_block_forward.4} parent=43 // pred_check
        %p1654 = pneg %p227
      $region54: #{basic_block_forward.4} parent=43 // pred_check_branch
        %1656 = sbr.rel (%p1654) target = $region56
      $region55: #{basic_block_forward.4} parent=43 // pred_region
        _
      $region56: #{basic_block_forward.4} parent=43 // pred_fallthru
        _
      // Predicated region
      $region57: #{basic_block_forward.4} parent=43 // pred_check
        %p1657 = pneg %p253
      $region58: #{basic_block_forward.4} parent=43 // pred_check_branch
        %1659 = sbr.rel (%p1657) target = $region60
      $region59: #{basic_block_forward.4} parent=43 // pred_region
        _
      $region60: #{basic_block_forward.4} parent=43 // pred_fallthru
        _
    $region44: #{basic_block_forward.4} parent=5 // pred_fallthru
      _
    %p1660 = scmp.le.s32.totalorder 2, %s16
    // Predicated region
    $region61: #{basic_block_forward.4} parent=5 // pred_check
      %p1661 = pneg %p1660
    $region62: #{basic_block_forward.4} parent=5 // pred_check_branch
      %1663 = sbr.rel (%p1661) target = $region64
    $region63: #{basic_block_forward.4} parent=5 // pred_region
      %s1664 = ssub.s32 %s16, 2
      // Predicated region
      $region65: #{basic_block_forward.4} parent=63 // pred_check
        %p1665 = pneg %p181
      $region66: #{basic_block_forward.4} parent=63 // pred_check_branch
        %1667 = sbr.rel (%p1665) target = $region68
      $region67: #{basic_block_forward.4} parent=63 // pred_region
        %p1668 = scmp.lt.s32.totalorder %s22, 1
        %s1669 = scalar_select %p1668, %s22, 1
        %s1670 = smul.addr %s1669, 8
        %s1671 = smul.addr %s1670, 8
        %s1672 = scalar_lea.vmem %s6, %s1671
      $region68: #{basic_block_forward.4} parent=63 // pred_fallthru
        _
      // Predicated region
      $region69: #{basic_block_forward.4} parent=63 // pred_check
        %p1673 = pneg %p207
      $region70: #{basic_block_forward.4} parent=63 // pred_check_branch
        %1675 = sbr.rel (%p1673) target = $region72
      $region71: #{basic_block_forward.4} parent=63 // pred_region
        %p1676 = scmp.lt.s32.totalorder %s22, 1
        %s1677 = scalar_select %p1676, %s22, 1
        %s1678 = smul.addr %s1677, 2
        %s1679 = scalar_lea.vmem %s7, %s1678
      $region72: #{basic_block_forward.4} parent=63 // pred_fallthru
        _
      // Predicated region
      $region73: #{basic_block_forward.4} parent=63 // pred_check
        %p1680 = pneg %p233
      $region74: #{basic_block_forward.4} parent=63 // pred_check_branch
        %1682 = sbr.rel (%p1680) target = $region76
      $region75: #{basic_block_forward.4} parent=63 // pred_region
        %p1683 = scmp.lt.s32.totalorder %s22, 1
        %s1684 = scalar_select %p1683, %s22, 1
        %s1685 = smul.addr %s1684, 8
        %s1686 = smul.addr %s1685, 8
        %s1687 = scalar_lea.vmem %s8, %s1686
      $region76: #{basic_block_forward.4} parent=63 // pred_fallthru
        _
      // Predicated region
      $region77: #{basic_block_forward.4} parent=63 // pred_check
        %p1688 = pneg %p259
      $region78: #{basic_block_forward.4} parent=63 // pred_check_branch
        %1690 = sbr.rel (%p1688) target = $region80
      $region79: #{basic_block_forward.4} parent=63 // pred_region
        %p1691 = scmp.lt.s32.totalorder %s22, 1
        %s1692 = scalar_select %p1691, %s22, 1
        %s1693 = smul.addr %s1692, 2
        %s1694 = scalar_lea.vmem %s9, %s1693
      $region80: #{basic_block_forward.4} parent=63 // pred_fallthru
        _
    $region64: #{basic_block_forward.4} parent=5 // pred_fallthru
      _
  $region6: #{basic_block_forward.4} parent=0 // loop_footer
    %s20 = sadd.s32 1, %s16
  $region7: #{basic_block_forward.4} parent=0 // loop_footer_branch
    %15 = sbr.rel target = $region3
  $region8: #{basic_block_forward.4} parent=0 // loop_exit
    _

</llo_original>
